<compile_context>
chip_gen: v7x
topology: tpu7x:2x2x1
jax: 0.10.0
libtpu: 0.0.40
codegen_flags: <defaults>
</compile_context>

<pallas_src>
import functools

import jax
import jax.numpy as jnp
from jax.experimental import pallas as pl
from jax.experimental.pallas import tpu as pltpu


# ----------------------------------------------------------------------------
# Fused Pallas kernel: conv1..4 + LSTM cell + fc1 + dueling heads
# ----------------------------------------------------------------------------
def fused_forward_kernel(B, layer_dims, hid, n_act,
                         # inputs (VMEM)
                         x0_ref, hx_ref, cx_ref,
                         bw0_ref, rall0_ref, brow0_ref,
                         bw1_ref, rall1_ref, brow1_ref,
                         rall2_ref, brow2_ref, rall3_ref, brow3_ref,
                         bxh_ref, b1_ref, bav_ref,
                         # inputs (HBM / pl.ANY, manually DMA'd)
                         bw2_hbm, bw3_hbm, wxh_hbm, w1_hbm, wav_hbm,
                         # outputs
                         q_ref, hy_ref, cy_ref,
                         # scratch
                         zstack_ref, pad1_ref, pad2_ref, pad3_ref, xh_ref,
                         bw2_v, bw3_v, wxh_v, w1_v, wav_v, dma_sem):
    f32, bf16 = jnp.float32, jnp.bfloat16

    # --- kick off DMA of the late-stage weights; overlaps conv1/conv2 compute (P4) ---
    copies = []
    for i, (src, dst) in enumerate([(bw2_hbm, bw2_v), (bw3_hbm, bw3_v),
                                    (wxh_hbm, wxh_v), (w1_hbm, w1_v),
                                    (wav_hbm, wav_v)]):
        cp = pltpu.make_async_copy(src, dst, dma_sem.at[i])
        cp.start()
        copies.append(cp)

    # --- one conv layer: wide taps matmul -> ky restack -> selection matmul -> bias/ReLU ---
    def conv_block(x2, bw_ref, rall_ref, brow_ref, dims):
        Hp, Ho, Wo, K = dims
        BHp, WoK = B * Hp, Wo * K
        zc = jnp.dot(x2, bw_ref[...], preferred_element_type=f32)       # [BHp, 3*WoK]
        for ky in range(3):                                             # restack by ky
            zstack_ref[ky * BHp:(ky + 1) * BHp, 0:WoK] = \
                zc[:, ky * WoK:(ky + 1) * WoK].astype(bf16)
        y = jnp.dot(rall_ref[...], zstack_ref[0:3 * BHp, 0:WoK],
                    preferred_element_type=f32) + brow_ref[...]
        return jnp.maximum(y, 0.0)                                      # [B*Ho, WoK] f32

    # --- write layer output into the next layer's "halo at end" padded buffer ---
    def write_padded(y, pad_ref, dims):
        _, Ho, Wo, K = dims
        WoK = Wo * K
        pad_ref[:, WoK:WoK + K] = jnp.zeros((pad_ref.shape[0], K), bf16)   # zero col halo
        for b in range(B):
            r0 = b * (Ho + 1)
            pad_ref[r0 + Ho:r0 + Ho + 1, 0:WoK] = jnp.zeros((1, WoK), bf16)  # zero row halo
            pad_ref[r0:r0 + Ho, 0:WoK] = y[b * Ho:(b + 1) * Ho, :].astype(bf16)

    # ---- conv stack ----------------------------------------------------------
    y = conv_block(x0_ref[...], bw0_ref, rall0_ref, brow0_ref, layer_dims[0])
    write_padded(y, pad1_ref, layer_dims[0])

    y = conv_block(pad1_ref[...], bw1_ref, rall1_ref, brow1_ref, layer_dims[1])
    copies[0].wait()                     # bw_2 resident before conv3
    copies[1].wait()                     # bw_3 resident before conv4
    write_padded(y, pad2_ref, layer_dims[1])

    y = conv_block(pad2_ref[...], bw2_v, rall2_ref, brow2_ref, layer_dims[2])
    write_padded(y, pad3_ref, layer_dims[2])

    y = conv_block(pad3_ref[...], bw3_v, rall3_ref, brow3_ref, layer_dims[3])

    # ---- flatten conv4 output (kernel (i,j,k) order is folded into wxh) + hx ----
    _, Ho4, Wo4, K4 = layer_dims[3]
    S = Ho4 * Wo4 * K4
    xh_ref[:, S:S + hid] = hx_ref[...].astype(bf16)
    for b in range(B):
        for i in range(Ho4):
            r = b * Ho4 + i
            xh_ref[b:b + 1, i * Wo4 * K4:(i + 1) * Wo4 * K4] = y[r:r + 1, :].astype(bf16)

    copies[2].wait()                     # wxh
    copies[3].wait()                     # w1
    copies[4].wait()                     # wav

    # ---- LSTM cell (x2h/h2h fused into one matmul, pre-summed biases) ----------
    gates = jnp.dot(xh_ref[...], wxh_v[...], preferred_element_type=f32) + bxh_ref[...]
    ingate = jax.nn.sigmoid(gates[:, 0:hid])
    forgetgate = jax.nn.sigmoid(gates[:, hid:2 * hid])
    cellgate = jnp.tanh(gates[:, 2 * hid:3 * hid])
    outgate = jax.nn.sigmoid(gates[:, 3 * hid:4 * hid])
    cy = cx_ref[...] * forgetgate + ingate * cellgate
    hy = outgate * jnp.tanh(cy)

    # ---- fc1 + dueling heads (fc_actions / fc_value fused into one matmul) -----
    h1 = jnp.maximum(
        jnp.dot(hy.astype(bf16), w1_v[...], preferred_element_type=f32) + b1_ref[...], 0.0)
    av = jnp.dot(h1.astype(bf16), wav_v[...], preferred_element_type=f32) + bav_ref[...]
    actions = av[:, 0:n_act]
    value = av[:, n_act:n_act + 1]

    # torch's actions.mean() is a global mean over batch AND action dims
    q_ref[...] = value + actions - jnp.mean(actions)
    hy_ref[...] = hy
    cy_ref[...] = cy


# ----------------------------------------------------------------------------
# Forward wrapper: one pallas_call, everything resident in VMEM, no grid
# ----------------------------------------------------------------------------
@jax.jit
def forward(kp, state_nchw, hx, cx):
    B, C, H, W = state_nchw.shape
    hid = hx.shape[-1]
    n_act = kp["bav"].shape[-1] - 1

    # static per-layer dims (Hp, Ho, Wo, K) under the "halo at end" layout
    layer_dims = []
    h, w = H, W
    for li in range(4):
        ho, wo = h // 2, w // 2
        k = kp[f"brow_{li}"].shape[-1] // wo
        layer_dims.append((h + 1, ho, wo, k))
        h, w = ho, wo
    layer_dims = tuple(layer_dims)
    S = layer_dims[-1][1] * layer_dims[-1][2] * layer_dims[-1][3]

    # input prep: NCHW -> NHWC, zero halo at bottom/right, flatten, bf16
    x = jnp.transpose(state_nchw, (0, 2, 3, 1)).astype(jnp.float32)
    xpad = jnp.pad(x, ((0, 0), (0, 1), (0, 1), (0, 0)))
    x0 = xpad.reshape(B * (H + 1), (W + 1) * C).astype(jnp.bfloat16)

    hx2 = hx.reshape(B, hid).astype(jnp.float32)
    cx2 = cx.reshape(B, hid).astype(jnp.float32)

    operands = [x0, hx2, cx2,
                kp["bw_0"], kp["rall_0"], kp["brow_0"],
                kp["bw_1"], kp["rall_1"], kp["brow_1"],
                kp["rall_2"], kp["brow_2"], kp["rall_3"], kp["brow_3"],
                kp["bxh"], kp["b1"], kp["bav"],
                kp["bw_2"], kp["bw_3"], kp["wxh"], kp["w1"], kp["wav"]]

    vmem = pl.BlockSpec(memory_space=pltpu.MemorySpace.VMEM)
    anyspace = pl.BlockSpec(memory_space=pl.ANY)
    in_specs = [vmem] * 16 + [anyspace] * 5

    (Hp1, Ho1, Wo1, K1) = layer_dims[0]
    (_, Ho2, Wo2, K2) = layer_dims[1]
    (_, Ho3, Wo3, K3) = layer_dims[2]

    scratch = [
        pltpu.VMEM((3 * B * Hp1, Wo1 * K1), jnp.bfloat16),             # shared ky-stack
        pltpu.VMEM((B * (Ho1 + 1), (Wo1 + 1) * K1), jnp.bfloat16),     # padded act 1->2
        pltpu.VMEM((B * (Ho2 + 1), (Wo2 + 1) * K2), jnp.bfloat16),     # padded act 2->3
        pltpu.VMEM((B * (Ho3 + 1), (Wo3 + 1) * K3), jnp.bfloat16),     # padded act 3->4
        pltpu.VMEM((B, S + hid), jnp.bfloat16),                        # [x_flat | hx]
        pltpu.VMEM(kp["bw_2"].shape, jnp.bfloat16),                    # DMA landing buffers
        pltpu.VMEM(kp["bw_3"].shape, jnp.bfloat16),
        pltpu.VMEM(kp["wxh"].shape, jnp.bfloat16),
        pltpu.VMEM(kp["w1"].shape, jnp.bfloat16),
        pltpu.VMEM(kp["wav"].shape, jnp.bfloat16),
        pltpu.SemaphoreType.DMA((5,)),
    ]

    kernel = functools.partial(fused_forward_kernel, B, layer_dims, hid, n_act)
    q, hy, cy = pl.pallas_call(
        kernel,
        out_shape=(jax.ShapeDtypeStruct((B, n_act), jnp.float32),
                   jax.ShapeDtypeStruct((B, hid), jnp.float32),
                   jax.ShapeDtypeStruct((B, hid), jnp.float32)),
        in_specs=in_specs,
        out_specs=(vmem, vmem, vmem),
        scratch_shapes=scratch,
        input_output_aliases={1: 1, 2: 2},      # hx -> hy, cx -> cy
        cost_estimate=pl.CostEstimate(flops=62_000_000, transcendentals=4096,
                                      bytes_accessed=2_200_000),
    )(*operands)
    return (q.reshape(B, 1, n_act),
            hy.reshape(B, 1, hid),
            cy.reshape(B, 1, hid))


# ----------------------------------------------------------------------------
# Param prep: banded conv matrices + 0/1 selection matrices (bf16) and fused
# LSTM / head weights.  Done once at init; pure JAX outside the kernel.
# ----------------------------------------------------------------------------
def prepare_kernel_params(p, B, channels, img_h, img_w, n_layers=4):
    kp = {}
    H, W, Cin = img_h, img_w, channels
    for li in range(n_layers):
        wt = p[f"conv{li + 1}_w"]                        # HWIO [3, 3, Cin, K]
        K = wt.shape[-1]
        Hp, Wp = H + 1, W + 1                            # real rows/cols + one zero halo
        Ho, Wo = H // 2, W // 2

        # column map: conv-padded col u -> buffer block (u-1 if u>=1 else the zero block W)
        j_i = jnp.arange(Wo)[None, None, :]
        kx_i = jnp.arange(3)[None, :, None]
        u = 2 * j_i + kx_i                               # [1, 3, Wo]
        m_of_u = jnp.where(u >= 1, u - 1, W)
        m_i = jnp.arange(Wp)[:, None, None]
        ind = (m_i == m_of_u).astype(jnp.float32)        # [Wp, 3, Wo]
        bws = []
        for ky in range(3):
            bw = jnp.einsum("mxj,xck->mcjk", ind, wt[ky])        # [Wp, Cin, Wo, K]
            bws.append(bw.reshape(Wp * Cin, Wo * K))
        kp[f"bw_{li}"] = jnp.concatenate(bws, axis=1).astype(jnp.bfloat16)

        # row selection (0/1, exact in bf16): picks z row for conv-padded row 2i+ky
        r = jnp.arange(B * Ho)
        b_idx, i_idx = r // Ho, r % Ho
        cols = jnp.arange(3 * B * Hp)[None, :]
        rall = jnp.zeros((B * Ho, 3 * B * Hp), jnp.float32)
        for ky in range(3):
            v = 2 * i_idx + ky
            rowmap = jnp.where(v >= 1, v - 1, H)                 # H == the zero row
            tgt = ky * B * Hp + b_idx * Hp + rowmap
            rall = rall + (cols == tgt[:, None]).astype(jnp.float32)
        kp[f"rall_{li}"] = rall.astype(jnp.bfloat16)

        # bias tiled over spatial positions of one output row (f32)
        kp[f"brow_{li}"] = jnp.tile(p[f"conv{li + 1}_b"], (Wo,)).reshape(1, Wo * K)
        H, W, Cin = Ho, Wo, K

    # fold torch's NCHW flatten order into a row permutation of lstm_x2h weights
    Ho4, Wo4, K = H, W, Cin
    ii = jnp.arange(Ho4)[:, None, None]
    jj = jnp.arange(Wo4)[None, :, None]
    kk = jnp.arange(K)[None, None, :]
    perm = (kk * (Ho4 * Wo4) + ii * Wo4 + jj).reshape(-1)   # kernel (i, j, k) order
    wx_k = p["wx"][perm, :]

    kp["wxh"] = jnp.concatenate([wx_k, p["wh"]], axis=0).astype(jnp.bfloat16)
    kp["bxh"] = (p["bx"] + p["bh"]).reshape(1, -1)
    kp["w1"] = p["w1"].astype(jnp.bfloat16)
    kp["b1"] = p["b1"].reshape(1, -1)
    kp["wav"] = jnp.concatenate([p["wa"], p["wv"]], axis=1).astype(jnp.bfloat16)
    kp["bav"] = jnp.concatenate([p["ba"], p["bv"]]).reshape(1, -1)
    return kp


# ----------------------------------------------------------------------------
# Pure-JAX f32 reference (for correctness check of the fused kernel)
# ----------------------------------------------------------------------------
def reference_forward(p, state_nchw, hx, cx):
    B = state_nchw.shape[0]
    x = jnp.transpose(state_nchw, (0, 2, 3, 1)).astype(jnp.float32)
    for i in range(1, 5):
        x = jax.lax.conv_general_dilated(
            x, p[f"conv{i}_w"], window_strides=(2, 2),
            padding=((1, 1), (1, 1)),
            dimension_numbers=("NHWC", "HWIO", "NHWC"))
        x = jnp.maximum(x + p[f"conv{i}_b"], 0.0)
    xf = jnp.transpose(x, (0, 3, 1, 2)).reshape(B, -1)       # torch (C, H, W) flatten
    h = hx.reshape(B, -1)
    c = cx.reshape(B, -1)
    H = h.shape[-1]
    gates = xf @ p["wx"] + p["bx"] + h @ p["wh"] + p["bh"]
    i_g = jax.nn.sigmoid(gates[:, :H])
    f_g = jax.nn.sigmoid(gates[:, H:2 * H])
    g_g = jnp.tanh(gates[:, 2 * H:3 * H])
    o_g = jax.nn.sigmoid(gates[:, 3 * H:])
    cy = c * f_g + i_g * g_g
    hy = o_g * jnp.tanh(cy)
    h1 = jnp.maximum(hy @ p["w1"] + p["b1"], 0.0)
    a = h1 @ p["wa"] + p["ba"]
    v = h1 @ p["wv"] + p["bv"]
    q = v + a - jnp.mean(a)
    return q.reshape(B, 1, -1), hy.reshape(B, 1, -1), cy.reshape(B, 1, -1)


# ----------------------------------------------------------------------------
# Deterministic synthetic parameters (torch-like layout)
# ----------------------------------------------------------------------------
def init_params(key, channels, hid, fc1, action_size, state_size):
    ks = jax.random.split(key, 20)

    def w(k, shape, scale=0.1):
        return scale * jax.random.normal(k, shape, jnp.float32)

    p = {}
    cin = channels
    for i in range(1, 5):
        p[f"conv{i}_w"] = w(ks[i - 1], (3, 3, cin, 32))          # HWIO
        p[f"conv{i}_b"] = w(ks[i + 3], (32,), 0.05)
        cin = 32
    p["wx"] = w(ks[8], (state_size, 4 * hid), 0.05)
    p["bx"] = w(ks[9], (4 * hid,), 0.05)
    p["wh"] = w(ks[10], (hid, 4 * hid), 0.05)
    p["bh"] = w(ks[11], (4 * hid,), 0.05)
    p["w1"] = w(ks[12], (hid, fc1), 0.1)
    p["b1"] = w(ks[13], (fc1,), 0.05)
    p["wa"] = w(ks[14], (fc1, action_size), 0.1)
    p["ba"] = w(ks[15], (action_size,), 0.05)
    p["wv"] = w(ks[16], (fc1, 1), 0.1)
    p["bv"] = w(ks[17], (1,), 0.05)
    return p


if __name__ == "__main__":
    B, C, IMG_H, IMG_W = 2, 3, 32, 32
    HID, FC1, A = 128, 128, 7
    STATE_SIZE = 32 * (IMG_H // 16) * (IMG_W // 16)   # analogous to 32*16*15 in the module

    root = jax.random.PRNGKey(0)
    kp_key, k1, k2, k3 = jax.random.split(root, 4)
    params = init_params(kp_key, C, HID, FC1, A, STATE_SIZE)
    kparams = prepare_kernel_params(params, B, C, IMG_H, IMG_W)

    state = jax.random.normal(k1, (B, C, IMG_H, IMG_W), jnp.float32)
    hx = jax.random.normal(k2, (B, 1, HID), jnp.float32)
    cx = jax.random.normal(k3, (B, 1, HID), jnp.float32)

    q, hy, cy = forward(kparams, state, hx, cx)
    jax.block_until_ready((q, hy, cy))

    q_r, hy_r, cy_r = reference_forward(params, state, hx, cx)
    assert q.shape == (B, 1, A) and hy.shape == (B, 1, HID) and cy.shape == (B, 1, HID)
    # bf16 MXU operands -> looser tolerance than a pure-f32 comparison
    assert jnp.allclose(q, q_r, atol=3e-2, rtol=3e-2)
    assert jnp.allclose(hy, hy_r, atol=3e-2, rtol=3e-2)
    assert jnp.allclose(cy, cy_r, atol=3e-2, rtol=3e-2)

    print("KERNEL_OK")
</pallas_src>

<mosaic_0001>
module attributes {stable_mosaic.version = 11 : i64} {
  func.func @fused_forward_kernel(%arg0: memref<66x99xbf16, #tpu.memory_space<vmem>>, %arg1: memref<2x128xf32, #tpu.memory_space<vmem>>, %arg2: memref<2x128xf32, #tpu.memory_space<vmem>>, %arg3: memref<99x1536xbf16, #tpu.memory_space<vmem>>, %arg4: memref<32x198xbf16, #tpu.memory_space<vmem>>, %arg5: memref<1x512xf32, #tpu.memory_space<vmem>>, %arg6: memref<544x768xbf16, #tpu.memory_space<vmem>>, %arg7: memref<16x102xbf16, #tpu.memory_space<vmem>>, %arg8: memref<1x256xf32, #tpu.memory_space<vmem>>, %arg9: memref<8x54xbf16, #tpu.memory_space<vmem>>, %arg10: memref<1x128xf32, #tpu.memory_space<vmem>>, %arg11: memref<4x30xbf16, #tpu.memory_space<vmem>>, %arg12: memref<1x64xf32, #tpu.memory_space<vmem>>, %arg13: memref<1x512xf32, #tpu.memory_space<vmem>>, %arg14: memref<1x128xf32, #tpu.memory_space<vmem>>, %arg15: memref<1x8xf32, #tpu.memory_space<vmem>>, %arg16: memref<288x384xbf16, #tpu.memory_space<any>>, %arg17: memref<160x192xbf16, #tpu.memory_space<any>>, %arg18: memref<256x512xbf16, #tpu.memory_space<any>>, %arg19: memref<128x128xbf16, #tpu.memory_space<any>>, %arg20: memref<128x8xbf16, #tpu.memory_space<any>>, %arg21: memref<2x7xf32, #tpu.memory_space<vmem>>, %arg22: memref<2x128xf32, #tpu.memory_space<vmem>>, %arg23: memref<2x128xf32, #tpu.memory_space<vmem>>, %arg24: memref<198x512xbf16, #tpu.memory_space<vmem>>, %arg25: memref<34x544xbf16, #tpu.memory_space<vmem>>, %arg26: memref<18x288xbf16, #tpu.memory_space<vmem>>, %arg27: memref<10x160xbf16, #tpu.memory_space<vmem>>, %arg28: memref<2x256xbf16, #tpu.memory_space<vmem>>, %arg29: memref<288x384xbf16, #tpu.memory_space<vmem>>, %arg30: memref<160x192xbf16, #tpu.memory_space<vmem>>, %arg31: memref<256x512xbf16, #tpu.memory_space<vmem>>, %arg32: memref<128x128xbf16, #tpu.memory_space<vmem>>, %arg33: memref<128x8xbf16, #tpu.memory_space<vmem>>, %arg34: memref<5x!tpu.dma_semaphore, #tpu.memory_space<semaphore_mem>>) attributes {dimension_semantics = [], scalar_prefetch = 0 : i64, scratch_operands = 11 : i64, tpu.core_type = #tpu.core_type<tc>} {
    %c0_i32 = arith.constant 0 : i32
    %0 = tpu.memref_slice %arg34[%c0_i32] : memref<5x!tpu.dma_semaphore, #tpu.memory_space<semaphore_mem>> -> memref<1x!tpu.dma_semaphore, #tpu.memory_space<semaphore_mem>>
    %1 = tpu.memref_squeeze %0 : memref<1x!tpu.dma_semaphore, #tpu.memory_space<semaphore_mem>> -> memref<!tpu.dma_semaphore, #tpu.memory_space<semaphore_mem>>
    tpu.enqueue_dma source(%arg16 : memref<288x384xbf16, #tpu.memory_space<any>>) target(%arg29 : memref<288x384xbf16, #tpu.memory_space<vmem>>) target_semaphore(%1 : memref<!tpu.dma_semaphore, #tpu.memory_space<semaphore_mem>>)
    %c1_i32 = arith.constant 1 : i32
    %2 = tpu.memref_slice %arg34[%c1_i32] : memref<5x!tpu.dma_semaphore, #tpu.memory_space<semaphore_mem>> -> memref<1x!tpu.dma_semaphore, #tpu.memory_space<semaphore_mem>>
    %3 = tpu.memref_squeeze %2 : memref<1x!tpu.dma_semaphore, #tpu.memory_space<semaphore_mem>> -> memref<!tpu.dma_semaphore, #tpu.memory_space<semaphore_mem>>
    tpu.enqueue_dma source(%arg17 : memref<160x192xbf16, #tpu.memory_space<any>>) target(%arg30 : memref<160x192xbf16, #tpu.memory_space<vmem>>) target_semaphore(%3 : memref<!tpu.dma_semaphore, #tpu.memory_space<semaphore_mem>>)
    %c2_i32 = arith.constant 2 : i32
    %4 = tpu.memref_slice %arg34[%c2_i32] : memref<5x!tpu.dma_semaphore, #tpu.memory_space<semaphore_mem>> -> memref<1x!tpu.dma_semaphore, #tpu.memory_space<semaphore_mem>>
    %5 = tpu.memref_squeeze %4 : memref<1x!tpu.dma_semaphore, #tpu.memory_space<semaphore_mem>> -> memref<!tpu.dma_semaphore, #tpu.memory_space<semaphore_mem>>
    tpu.enqueue_dma source(%arg18 : memref<256x512xbf16, #tpu.memory_space<any>>) target(%arg31 : memref<256x512xbf16, #tpu.memory_space<vmem>>) target_semaphore(%5 : memref<!tpu.dma_semaphore, #tpu.memory_space<semaphore_mem>>)
    %c3_i32 = arith.constant 3 : i32
    %6 = tpu.memref_slice %arg34[%c3_i32] : memref<5x!tpu.dma_semaphore, #tpu.memory_space<semaphore_mem>> -> memref<1x!tpu.dma_semaphore, #tpu.memory_space<semaphore_mem>>
    %7 = tpu.memref_squeeze %6 : memref<1x!tpu.dma_semaphore, #tpu.memory_space<semaphore_mem>> -> memref<!tpu.dma_semaphore, #tpu.memory_space<semaphore_mem>>
    tpu.enqueue_dma source(%arg19 : memref<128x128xbf16, #tpu.memory_space<any>>) target(%arg32 : memref<128x128xbf16, #tpu.memory_space<vmem>>) target_semaphore(%7 : memref<!tpu.dma_semaphore, #tpu.memory_space<semaphore_mem>>)
    %c4_i32 = arith.constant 4 : i32
    %8 = tpu.memref_slice %arg34[%c4_i32] : memref<5x!tpu.dma_semaphore, #tpu.memory_space<semaphore_mem>> -> memref<1x!tpu.dma_semaphore, #tpu.memory_space<semaphore_mem>>
    %9 = tpu.memref_squeeze %8 : memref<1x!tpu.dma_semaphore, #tpu.memory_space<semaphore_mem>> -> memref<!tpu.dma_semaphore, #tpu.memory_space<semaphore_mem>>
    tpu.enqueue_dma source(%arg20 : memref<128x8xbf16, #tpu.memory_space<any>>) target(%arg33 : memref<128x8xbf16, #tpu.memory_space<vmem>>) target_semaphore(%9 : memref<!tpu.dma_semaphore, #tpu.memory_space<semaphore_mem>>)
    %c0 = arith.constant 0 : index
    %c0_0 = arith.constant 0 : index
    %10 = vector.load %arg0[%c0, %c0_0] : memref<66x99xbf16, #tpu.memory_space<vmem>>, vector<66x99xbf16>
    %c0_1 = arith.constant 0 : index
    %c0_2 = arith.constant 0 : index
    %11 = vector.load %arg3[%c0_1, %c0_2] : memref<99x1536xbf16, #tpu.memory_space<vmem>>, vector<99x1536xbf16>
    %cst = arith.constant dense<0.000000e+00> : vector<66x1536xf32>
    %12 = tpu.matmul %10, %11, %cst {dimension_numbers = #tpu.dot_dimension_numbers<[1], [0], [0], [1], [0, 0, 1, 1], [], []>} : vector<66x99xbf16>, vector<99x1536xbf16>, vector<66x1536xf32> -> vector<66x1536xf32>
    %13 = vector.extract_strided_slice %12 {offsets = [0, 0], sizes = [66, 512], strides = [1, 1]} : vector<66x1536xf32> to vector<66x512xf32>
    %14 = arith.truncf %13 : vector<66x512xf32> to vector<66x512xbf16>
    %c0_3 = arith.constant 0 : index
    %c0_4 = arith.constant 0 : index
    %15 = vector.load %arg24[%c0_3, %c0_4] : memref<198x512xbf16, #tpu.memory_space<vmem>>, vector<66x512xbf16>
    tpu.vector_store %arg24[%c0_3, %c0_4], %14 {strides = array<i32>} : memref<198x512xbf16, #tpu.memory_space<vmem>>, vector<66x512xbf16>,
    %16 = vector.extract_strided_slice %12 {offsets = [0, 512], sizes = [66, 512], strides = [1, 1]} : vector<66x1536xf32> to vector<66x512xf32>
    %17 = arith.truncf %16 : vector<66x512xf32> to vector<66x512xbf16>
    %c66 = arith.constant 66 : index
    %c0_5 = arith.constant 0 : index
    %18 = vector.load %arg24[%c66, %c0_5] : memref<198x512xbf16, #tpu.memory_space<vmem>>, vector<66x512xbf16>
    tpu.vector_store %arg24[%c66, %c0_5], %17 {strides = array<i32>} : memref<198x512xbf16, #tpu.memory_space<vmem>>, vector<66x512xbf16>,
    %19 = vector.extract_strided_slice %12 {offsets = [0, 1024], sizes = [66, 512], strides = [1, 1]} : vector<66x1536xf32> to vector<66x512xf32>
    %20 = arith.truncf %19 : vector<66x512xf32> to vector<66x512xbf16>
    %c132 = arith.constant 132 : index
    %c0_6 = arith.constant 0 : index
    %21 = vector.load %arg24[%c132, %c0_6] : memref<198x512xbf16, #tpu.memory_space<vmem>>, vector<66x512xbf16>
    tpu.vector_store %arg24[%c132, %c0_6], %20 {strides = array<i32>} : memref<198x512xbf16, #tpu.memory_space<vmem>>, vector<66x512xbf16>,
    %c0_7 = arith.constant 0 : index
    %c0_8 = arith.constant 0 : index
    %22 = vector.load %arg4[%c0_7, %c0_8] : memref<32x198xbf16, #tpu.memory_space<vmem>>, vector<32x198xbf16>
    %c0_9 = arith.constant 0 : index
    %c0_10 = arith.constant 0 : index
    %23 = vector.load %arg24[%c0_9, %c0_10] : memref<198x512xbf16, #tpu.memory_space<vmem>>, vector<198x512xbf16>
    %cst_11 = arith.constant dense<0.000000e+00> : vector<32x512xf32>
    %24 = tpu.matmul %22, %23, %cst_11 {dimension_numbers = #tpu.dot_dimension_numbers<[1], [0], [0], [1], [0, 0, 1, 1], [], []>} : vector<32x198xbf16>, vector<198x512xbf16>, vector<32x512xf32> -> vector<32x512xf32>
    %c0_12 = arith.constant 0 : index
    %c0_13 = arith.constant 0 : index
    %25 = vector.load %arg5[%c0_12, %c0_13] : memref<1x512xf32, #tpu.memory_space<vmem>>, vector<1x512xf32>
    %26 = vector.broadcast %25 : vector<1x512xf32> to vector<32x512xf32>
    %27 = arith.addf %24, %26 : vector<32x512xf32>
    %cst_14 = arith.constant 0.000000e+00 : f32
    %28 = vector.broadcast %cst_14 : f32 to vector<32x512xf32>
    %29 = arith.maximumf %27, %28 : vector<32x512xf32>
    %cst_15 = arith.constant 0.000000e+00 : bf16
    %30 = vector.broadcast %cst_15 : bf16 to vector<34x32xbf16>
    %c0_16 = arith.constant 0 : index
    %c512 = arith.constant 512 : index
    %31 = vector.load %arg25[%c0_16, %c512] : memref<34x544xbf16, #tpu.memory_space<vmem>>, vector<34x32xbf16>
    tpu.vector_store %arg25[%c0_16, %c512], %30 {strides = array<i32>} : memref<34x544xbf16, #tpu.memory_space<vmem>>, vector<34x32xbf16>,
    %cst_17 = arith.constant 0.000000e+00 : bf16
    %32 = vector.broadcast %cst_17 : bf16 to vector<1x512xbf16>
    %c16 = arith.constant 16 : index
    %c0_18 = arith.constant 0 : index
    %33 = vector.load %arg25[%c16, %c0_18] : memref<34x544xbf16, #tpu.memory_space<vmem>>, vector<1x512xbf16>
    tpu.vector_store %arg25[%c16, %c0_18], %32 {strides = array<i32>} : memref<34x544xbf16, #tpu.memory_space<vmem>>, vector<1x512xbf16>,
    %34 = vector.extract_strided_slice %29 {offsets = [0, 0], sizes = [16, 512], strides = [1, 1]} : vector<32x512xf32> to vector<16x512xf32>
    %35 = arith.truncf %34 : vector<16x512xf32> to vector<16x512xbf16>
    %c0_19 = arith.constant 0 : index
    %c0_20 = arith.constant 0 : index
    %36 = vector.load %arg25[%c0_19, %c0_20] : memref<34x544xbf16, #tpu.memory_space<vmem>>, vector<16x512xbf16>
    tpu.vector_store %arg25[%c0_19, %c0_20], %35 {strides = array<i32>} : memref<34x544xbf16, #tpu.memory_space<vmem>>, vector<16x512xbf16>,
    %cst_21 = arith.constant 0.000000e+00 : bf16
    %37 = vector.broadcast %cst_21 : bf16 to vector<1x512xbf16>
    %c33 = arith.constant 33 : index
    %c0_22 = arith.constant 0 : index
    %38 = vector.load %arg25[%c33, %c0_22] : memref<34x544xbf16, #tpu.memory_space<vmem>>, vector<1x512xbf16>
    tpu.vector_store %arg25[%c33, %c0_22], %37 {strides = array<i32>} : memref<34x544xbf16, #tpu.memory_space<vmem>>, vector<1x512xbf16>,
    %39 = vector.extract_strided_slice %29 {offsets = [16, 0], sizes = [16, 512], strides = [1, 1]} : vector<32x512xf32> to vector<16x512xf32>
    %40 = arith.truncf %39 : vector<16x512xf32> to vector<16x512xbf16>
    %c17 = arith.constant 17 : index
    %c0_23 = arith.constant 0 : index
    %41 = vector.load %arg25[%c17, %c0_23] : memref<34x544xbf16, #tpu.memory_space<vmem>>, vector<16x512xbf16>
    tpu.vector_store %arg25[%c17, %c0_23], %40 {strides = array<i32>} : memref<34x544xbf16, #tpu.memory_space<vmem>>, vector<16x512xbf16>,
    %c0_24 = arith.constant 0 : index
    %c0_25 = arith.constant 0 : index
    %42 = vector.load %arg25[%c0_24, %c0_25] : memref<34x544xbf16, #tpu.memory_space<vmem>>, vector<34x544xbf16>
    %c0_26 = arith.constant 0 : index
    %c0_27 = arith.constant 0 : index
    %43 = vector.load %arg6[%c0_26, %c0_27] : memref<544x768xbf16, #tpu.memory_space<vmem>>, vector<544x768xbf16>
    %cst_28 = arith.constant dense<0.000000e+00> : vector<34x768xf32>
    %44 = tpu.matmul %42, %43, %cst_28 {dimension_numbers = #tpu.dot_dimension_numbers<[1], [0], [0], [1], [0, 0, 1, 1], [], []>} : vector<34x544xbf16>, vector<544x768xbf16>, vector<34x768xf32> -> vector<34x768xf32>
    %45 = vector.extract_strided_slice %44 {offsets = [0, 0], sizes = [34, 256], strides = [1, 1]} : vector<34x768xf32> to vector<34x256xf32>
    %46 = arith.truncf %45 : vector<34x256xf32> to vector<34x256xbf16>
    %c0_29 = arith.constant 0 : index
    %c0_30 = arith.constant 0 : index
    %47 = vector.load %arg24[%c0_29, %c0_30] : memref<198x512xbf16, #tpu.memory_space<vmem>>, vector<34x256xbf16>
    tpu.vector_store %arg24[%c0_29, %c0_30], %46 {strides = array<i32>} : memref<198x512xbf16, #tpu.memory_space<vmem>>, vector<34x256xbf16>,
    %48 = vector.extract_strided_slice %44 {offsets = [0, 256], sizes = [34, 256], strides = [1, 1]} : vector<34x768xf32> to vector<34x256xf32>
    %49 = arith.truncf %48 : vector<34x256xf32> to vector<34x256xbf16>
    %c34 = arith.constant 34 : index
    %c0_31 = arith.constant 0 : index
    %50 = vector.load %arg24[%c34, %c0_31] : memref<198x512xbf16, #tpu.memory_space<vmem>>, vector<34x256xbf16>
    tpu.vector_store %arg24[%c34, %c0_31], %49 {strides = array<i32>} : memref<198x512xbf16, #tpu.memory_space<vmem>>, vector<34x256xbf16>,
    %51 = vector.extract_strided_slice %44 {offsets = [0, 512], sizes = [34, 256], strides = [1, 1]} : vector<34x768xf32> to vector<34x256xf32>
    %52 = arith.truncf %51 : vector<34x256xf32> to vector<34x256xbf16>
    %c68 = arith.constant 68 : index
    %c0_32 = arith.constant 0 : index
    %53 = vector.load %arg24[%c68, %c0_32] : memref<198x512xbf16, #tpu.memory_space<vmem>>, vector<34x256xbf16>
    tpu.vector_store %arg24[%c68, %c0_32], %52 {strides = array<i32>} : memref<198x512xbf16, #tpu.memory_space<vmem>>, vector<34x256xbf16>,
    %c0_33 = arith.constant 0 : index
    %c0_34 = arith.constant 0 : index
    %54 = vector.load %arg7[%c0_33, %c0_34] : memref<16x102xbf16, #tpu.memory_space<vmem>>, vector<16x102xbf16>
    %c0_35 = arith.constant 0 : index
    %c0_36 = arith.constant 0 : index
    %55 = vector.load %arg24[%c0_35, %c0_36] : memref<198x512xbf16, #tpu.memory_space<vmem>>, vector<102x256xbf16>
    %cst_37 = arith.constant dense<0.000000e+00> : vector<16x256xf32>
    %56 = tpu.matmul %54, %55, %cst_37 {dimension_numbers = #tpu.dot_dimension_numbers<[1], [0], [0], [1], [0, 0, 1, 1], [], []>} : vector<16x102xbf16>, vector<102x256xbf16>, vector<16x256xf32> -> vector<16x256xf32>
    %c0_38 = arith.constant 0 : index
    %c0_39 = arith.constant 0 : index
    %57 = vector.load %arg8[%c0_38, %c0_39] : memref<1x256xf32, #tpu.memory_space<vmem>>, vector<1x256xf32>
    %58 = vector.broadcast %57 : vector<1x256xf32> to vector<16x256xf32>
    %59 = arith.addf %56, %58 : vector<16x256xf32>
    %cst_40 = arith.constant 0.000000e+00 : f32
    %60 = vector.broadcast %cst_40 : f32 to vector<16x256xf32>
    %61 = arith.maximumf %59, %60 : vector<16x256xf32>
    %c0_i32_41 = arith.constant 0 : i32
    %62 = tpu.memref_slice %arg34[%c0_i32_41] : memref<5x!tpu.dma_semaphore, #tpu.memory_space<semaphore_mem>> -> memref<1x!tpu.dma_semaphore, #tpu.memory_space<semaphore_mem>>
    %63 = tpu.memref_squeeze %62 : memref<1x!tpu.dma_semaphore, #tpu.memory_space<semaphore_mem>> -> memref<!tpu.dma_semaphore, #tpu.memory_space<semaphore_mem>>
    tpu.wait_dma2 semaphore(%63 : memref<!tpu.dma_semaphore, #tpu.memory_space<semaphore_mem>>) src(%arg16 : memref<288x384xbf16, #tpu.memory_space<any>>) dst(%arg29 : memref<288x384xbf16, #tpu.memory_space<vmem>>)
    %c1_i32_42 = arith.constant 1 : i32
    %64 = tpu.memref_slice %arg34[%c1_i32_42] : memref<5x!tpu.dma_semaphore, #tpu.memory_space<semaphore_mem>> -> memref<1x!tpu.dma_semaphore, #tpu.memory_space<semaphore_mem>>
    %65 = tpu.memref_squeeze %64 : memref<1x!tpu.dma_semaphore, #tpu.memory_space<semaphore_mem>> -> memref<!tpu.dma_semaphore, #tpu.memory_space<semaphore_mem>>
    tpu.wait_dma2 semaphore(%65 : memref<!tpu.dma_semaphore, #tpu.memory_space<semaphore_mem>>) src(%arg17 : memref<160x192xbf16, #tpu.memory_space<any>>) dst(%arg30 : memref<160x192xbf16, #tpu.memory_space<vmem>>)
    %cst_43 = arith.constant 0.000000e+00 : bf16
    %66 = vector.broadcast %cst_43 : bf16 to vector<18x32xbf16>
    %c0_44 = arith.constant 0 : index
    %c256 = arith.constant 256 : index
    %67 = vector.load %arg26[%c0_44, %c256] : memref<18x288xbf16, #tpu.memory_space<vmem>>, vector<18x32xbf16>
    tpu.vector_store %arg26[%c0_44, %c256], %66 {strides = array<i32>} : memref<18x288xbf16, #tpu.memory_space<vmem>>, vector<18x32xbf16>,
    %cst_45 = arith.constant 0.000000e+00 : bf16
    %68 = vector.broadcast %cst_45 : bf16 to vector<1x256xbf16>
    %c8 = arith.constant 8 : index
    %c0_46 = arith.constant 0 : index
    %69 = vector.load %arg26[%c8, %c0_46] : memref<18x288xbf16, #tpu.memory_space<vmem>>, vector<1x256xbf16>
    tpu.vector_store %arg26[%c8, %c0_46], %68 {strides = array<i32>} : memref<18x288xbf16, #tpu.memory_space<vmem>>, vector<1x256xbf16>,
    %70 = vector.extract_strided_slice %61 {offsets = [0, 0], sizes = [8, 256], strides = [1, 1]} : vector<16x256xf32> to vector<8x256xf32>
    %71 = arith.truncf %70 : vector<8x256xf32> to vector<8x256xbf16>
    %c0_47 = arith.constant 0 : index
    %c0_48 = arith.constant 0 : index
    %72 = vector.load %arg26[%c0_47, %c0_48] : memref<18x288xbf16, #tpu.memory_space<vmem>>, vector<8x256xbf16>
    tpu.vector_store %arg26[%c0_47, %c0_48], %71 {strides = array<i32>} : memref<18x288xbf16, #tpu.memory_space<vmem>>, vector<8x256xbf16>,
    %cst_49 = arith.constant 0.000000e+00 : bf16
    %73 = vector.broadcast %cst_49 : bf16 to vector<1x256xbf16>
    %c17_50 = arith.constant 17 : index
    %c0_51 = arith.constant 0 : index
    %74 = vector.load %arg26[%c17_50, %c0_51] : memref<18x288xbf16, #tpu.memory_space<vmem>>, vector<1x256xbf16>
    tpu.vector_store %arg26[%c17_50, %c0_51], %73 {strides = array<i32>} : memref<18x288xbf16, #tpu.memory_space<vmem>>, vector<1x256xbf16>,
    %75 = vector.extract_strided_slice %61 {offsets = [8, 0], sizes = [8, 256], strides = [1, 1]} : vector<16x256xf32> to vector<8x256xf32>
    %76 = arith.truncf %75 : vector<8x256xf32> to vector<8x256xbf16>
    %c9 = arith.constant 9 : index
    %c0_52 = arith.constant 0 : index
    %77 = vector.load %arg26[%c9, %c0_52] : memref<18x288xbf16, #tpu.memory_space<vmem>>, vector<8x256xbf16>
    tpu.vector_store %arg26[%c9, %c0_52], %76 {strides = array<i32>} : memref<18x288xbf16, #tpu.memory_space<vmem>>, vector<8x256xbf16>,
    %c0_53 = arith.constant 0 : index
    %c0_54 = arith.constant 0 : index
    %78 = vector.load %arg26[%c0_53, %c0_54] : memref<18x288xbf16, #tpu.memory_space<vmem>>, vector<18x288xbf16>
    %c0_55 = arith.constant 0 : index
    %c0_56 = arith.constant 0 : index
    %79 = vector.load %arg29[%c0_55, %c0_56] : memref<288x384xbf16, #tpu.memory_space<vmem>>, vector<288x384xbf16>
    %cst_57 = arith.constant dense<0.000000e+00> : vector<18x384xf32>
    %80 = tpu.matmul %78, %79, %cst_57 {dimension_numbers = #tpu.dot_dimension_numbers<[1], [0], [0], [1], [0, 0, 1, 1], [], []>} : vector<18x288xbf16>, vector<288x384xbf16>, vector<18x384xf32> -> vector<18x384xf32>
    %81 = vector.extract_strided_slice %80 {offsets = [0, 0], sizes = [18, 128], strides = [1, 1]} : vector<18x384xf32> to vector<18x128xf32>
    %82 = arith.truncf %81 : vector<18x128xf32> to vector<18x128xbf16>
    %c0_58 = arith.constant 0 : index
    %c0_59 = arith.constant 0 : index
    %83 = vector.load %arg24[%c0_58, %c0_59] : memref<198x512xbf16, #tpu.memory_space<vmem>>, vector<18x128xbf16>
    tpu.vector_store %arg24[%c0_58, %c0_59], %82 {strides = array<i32>} : memref<198x512xbf16, #tpu.memory_space<vmem>>, vector<18x128xbf16>,
    %84 = vector.extract_strided_slice %80 {offsets = [0, 128], sizes = [18, 128], strides = [1, 1]} : vector<18x384xf32> to vector<18x128xf32>
    %85 = arith.truncf %84 : vector<18x128xf32> to vector<18x128xbf16>
    %c18 = arith.constant 18 : index
    %c0_60 = arith.constant 0 : index
    %86 = vector.load %arg24[%c18, %c0_60] : memref<198x512xbf16, #tpu.memory_space<vmem>>, vector<18x128xbf16>
    tpu.vector_store %arg24[%c18, %c0_60], %85 {strides = array<i32>} : memref<198x512xbf16, #tpu.memory_space<vmem>>, vector<18x128xbf16>,
    %87 = vector.extract_strided_slice %80 {offsets = [0, 256], sizes = [18, 128], strides = [1, 1]} : vector<18x384xf32> to vector<18x128xf32>
    %88 = arith.truncf %87 : vector<18x128xf32> to vector<18x128xbf16>
    %c36 = arith.constant 36 : index
    %c0_61 = arith.constant 0 : index
    %89 = vector.load %arg24[%c36, %c0_61] : memref<198x512xbf16, #tpu.memory_space<vmem>>, vector<18x128xbf16>
    tpu.vector_store %arg24[%c36, %c0_61], %88 {strides = array<i32>} : memref<198x512xbf16, #tpu.memory_space<vmem>>, vector<18x128xbf16>,
    %c0_62 = arith.constant 0 : index
    %c0_63 = arith.constant 0 : index
    %90 = vector.load %arg9[%c0_62, %c0_63] : memref<8x54xbf16, #tpu.memory_space<vmem>>, vector<8x54xbf16>
    %c0_64 = arith.constant 0 : index
    %c0_65 = arith.constant 0 : index
    %91 = vector.load %arg24[%c0_64, %c0_65] : memref<198x512xbf16, #tpu.memory_space<vmem>>, vector<54x128xbf16>
    %cst_66 = arith.constant dense<0.000000e+00> : vector<8x128xf32>
    %92 = tpu.matmul %90, %91, %cst_66 {dimension_numbers = #tpu.dot_dimension_numbers<[1], [0], [0], [1], [0, 0, 1, 1], [], []>} : vector<8x54xbf16>, vector<54x128xbf16>, vector<8x128xf32> -> vector<8x128xf32>
    %c0_67 = arith.constant 0 : index
    %c0_68 = arith.constant 0 : index
    %93 = vector.load %arg10[%c0_67, %c0_68] : memref<1x128xf32, #tpu.memory_space<vmem>>, vector<1x128xf32>
    %94 = vector.broadcast %93 : vector<1x128xf32> to vector<8x128xf32>
    %95 = arith.addf %92, %94 : vector<8x128xf32>
    %cst_69 = arith.constant 0.000000e+00 : f32
    %96 = vector.broadcast %cst_69 : f32 to vector<8x128xf32>
    %97 = arith.maximumf %95, %96 : vector<8x128xf32>
    %cst_70 = arith.constant 0.000000e+00 : bf16
    %98 = vector.broadcast %cst_70 : bf16 to vector<10x32xbf16>
    %c0_71 = arith.constant 0 : index
    %c128 = arith.constant 128 : index
    %99 = vector.load %arg27[%c0_71, %c128] : memref<10x160xbf16, #tpu.memory_space<vmem>>, vector<10x32xbf16>
    tpu.vector_store %arg27[%c0_71, %c128], %98 {strides = array<i32>} : memref<10x160xbf16, #tpu.memory_space<vmem>>, vector<10x32xbf16>,
    %cst_72 = arith.constant 0.000000e+00 : bf16
    %100 = vector.broadcast %cst_72 : bf16 to vector<1x128xbf16>
    %c4 = arith.constant 4 : index
    %c0_73 = arith.constant 0 : index
    %101 = vector.load %arg27[%c4, %c0_73] : memref<10x160xbf16, #tpu.memory_space<vmem>>, vector<1x128xbf16>
    tpu.vector_store %arg27[%c4, %c0_73], %100 {strides = array<i32>} : memref<10x160xbf16, #tpu.memory_space<vmem>>, vector<1x128xbf16>,
    %102 = vector.extract_strided_slice %97 {offsets = [0, 0], sizes = [4, 128], strides = [1, 1]} : vector<8x128xf32> to vector<4x128xf32>
    %103 = arith.truncf %102 : vector<4x128xf32> to vector<4x128xbf16>
    %c0_74 = arith.constant 0 : index
    %c0_75 = arith.constant 0 : index
    %104 = vector.load %arg27[%c0_74, %c0_75] : memref<10x160xbf16, #tpu.memory_space<vmem>>, vector<4x128xbf16>
    tpu.vector_store %arg27[%c0_74, %c0_75], %103 {strides = array<i32>} : memref<10x160xbf16, #tpu.memory_space<vmem>>, vector<4x128xbf16>,
    %cst_76 = arith.constant 0.000000e+00 : bf16
    %105 = vector.broadcast %cst_76 : bf16 to vector<1x128xbf16>
    %c9_77 = arith.constant 9 : index
    %c0_78 = arith.constant 0 : index
    %106 = vector.load %arg27[%c9_77, %c0_78] : memref<10x160xbf16, #tpu.memory_space<vmem>>, vector<1x128xbf16>
    tpu.vector_store %arg27[%c9_77, %c0_78], %105 {strides = array<i32>} : memref<10x160xbf16, #tpu.memory_space<vmem>>, vector<1x128xbf16>,
    %107 = vector.extract_strided_slice %97 {offsets = [4, 0], sizes = [4, 128], strides = [1, 1]} : vector<8x128xf32> to vector<4x128xf32>
    %108 = arith.truncf %107 : vector<4x128xf32> to vector<4x128xbf16>
    %c5 = arith.constant 5 : index
    %c0_79 = arith.constant 0 : index
    %109 = vector.load %arg27[%c5, %c0_79] : memref<10x160xbf16, #tpu.memory_space<vmem>>, vector<4x128xbf16>
    tpu.vector_store %arg27[%c5, %c0_79], %108 {strides = array<i32>} : memref<10x160xbf16, #tpu.memory_space<vmem>>, vector<4x128xbf16>,
    %c0_80 = arith.constant 0 : index
    %c0_81 = arith.constant 0 : index
    %110 = vector.load %arg27[%c0_80, %c0_81] : memref<10x160xbf16, #tpu.memory_space<vmem>>, vector<10x160xbf16>
    %c0_82 = arith.constant 0 : index
    %c0_83 = arith.constant 0 : index
    %111 = vector.load %arg30[%c0_82, %c0_83] : memref<160x192xbf16, #tpu.memory_space<vmem>>, vector<160x192xbf16>
    %cst_84 = arith.constant dense<0.000000e+00> : vector<10x192xf32>
    %112 = tpu.matmul %110, %111, %cst_84 {dimension_numbers = #tpu.dot_dimension_numbers<[1], [0], [0], [1], [0, 0, 1, 1], [], []>} : vector<10x160xbf16>, vector<160x192xbf16>, vector<10x192xf32> -> vector<10x192xf32>
    %113 = vector.extract_strided_slice %112 {offsets = [0, 0], sizes = [10, 64], strides = [1, 1]} : vector<10x192xf32> to vector<10x64xf32>
    %114 = arith.truncf %113 : vector<10x64xf32> to vector<10x64xbf16>
    %c0_85 = arith.constant 0 : index
    %c0_86 = arith.constant 0 : index
    %115 = vector.load %arg24[%c0_85, %c0_86] : memref<198x512xbf16, #tpu.memory_space<vmem>>, vector<10x64xbf16>
    tpu.vector_store %arg24[%c0_85, %c0_86], %114 {strides = array<i32>} : memref<198x512xbf16, #tpu.memory_space<vmem>>, vector<10x64xbf16>,
    %116 = vector.extract_strided_slice %112 {offsets = [0, 64], sizes = [10, 64], strides = [1, 1]} : vector<10x192xf32> to vector<10x64xf32>
    %117 = arith.truncf %116 : vector<10x64xf32> to vector<10x64xbf16>
    %c10 = arith.constant 10 : index
    %c0_87 = arith.constant 0 : index
    %118 = vector.load %arg24[%c10, %c0_87] : memref<198x512xbf16, #tpu.memory_space<vmem>>, vector<10x64xbf16>
    tpu.vector_store %arg24[%c10, %c0_87], %117 {strides = array<i32>} : memref<198x512xbf16, #tpu.memory_space<vmem>>, vector<10x64xbf16>,
    %119 = vector.extract_strided_slice %112 {offsets = [0, 128], sizes = [10, 64], strides = [1, 1]} : vector<10x192xf32> to vector<10x64xf32>
    %120 = arith.truncf %119 : vector<10x64xf32> to vector<10x64xbf16>
    %c20 = arith.constant 20 : index
    %c0_88 = arith.constant 0 : index
    %121 = vector.load %arg24[%c20, %c0_88] : memref<198x512xbf16, #tpu.memory_space<vmem>>, vector<10x64xbf16>
    tpu.vector_store %arg24[%c20, %c0_88], %120 {strides = array<i32>} : memref<198x512xbf16, #tpu.memory_space<vmem>>, vector<10x64xbf16>,
    %c0_89 = arith.constant 0 : index
    %c0_90 = arith.constant 0 : index
    %122 = vector.load %arg11[%c0_89, %c0_90] : memref<4x30xbf16, #tpu.memory_space<vmem>>, vector<4x30xbf16>
    %c0_91 = arith.constant 0 : index
    %c0_92 = arith.constant 0 : index
    %123 = vector.load %arg24[%c0_91, %c0_92] : memref<198x512xbf16, #tpu.memory_space<vmem>>, vector<30x64xbf16>
    %cst_93 = arith.constant dense<0.000000e+00> : vector<4x64xf32>
    %124 = tpu.matmul %122, %123, %cst_93 {dimension_numbers = #tpu.dot_dimension_numbers<[1], [0], [0], [1], [0, 0, 1, 1], [], []>} : vector<4x30xbf16>, vector<30x64xbf16>, vector<4x64xf32> -> vector<4x64xf32>
    %c0_94 = arith.constant 0 : index
    %c0_95 = arith.constant 0 : index
    %125 = vector.load %arg12[%c0_94, %c0_95] : memref<1x64xf32, #tpu.memory_space<vmem>>, vector<1x64xf32>
    %126 = vector.broadcast %125 : vector<1x64xf32> to vector<4x64xf32>
    %127 = arith.addf %124, %126 : vector<4x64xf32>
    %cst_96 = arith.constant 0.000000e+00 : f32
    %128 = vector.broadcast %cst_96 : f32 to vector<4x64xf32>
    %129 = arith.maximumf %127, %128 : vector<4x64xf32>
    %c0_97 = arith.constant 0 : index
    %c0_98 = arith.constant 0 : index
    %130 = vector.load %arg1[%c0_97, %c0_98] : memref<2x128xf32, #tpu.memory_space<vmem>>, vector<2x128xf32>
    %131 = arith.truncf %130 : vector<2x128xf32> to vector<2x128xbf16>
    %c0_99 = arith.constant 0 : index
    %c128_100 = arith.constant 128 : index
    %132 = vector.load %arg28[%c0_99, %c128_100] : memref<2x256xbf16, #tpu.memory_space<vmem>>, vector<2x128xbf16>
    tpu.vector_store %arg28[%c0_99, %c128_100], %131 {strides = array<i32>} : memref<2x256xbf16, #tpu.memory_space<vmem>>, vector<2x128xbf16>,
    %133 = vector.extract_strided_slice %129 {offsets = [0, 0], sizes = [1, 64], strides = [1, 1]} : vector<4x64xf32> to vector<1x64xf32>
    %134 = arith.truncf %133 : vector<1x64xf32> to vector<1x64xbf16>
    %c0_101 = arith.constant 0 : index
    %c0_102 = arith.constant 0 : index
    %135 = vector.load %arg28[%c0_101, %c0_102] : memref<2x256xbf16, #tpu.memory_space<vmem>>, vector<1x64xbf16>
    tpu.vector_store %arg28[%c0_101, %c0_102], %134 {strides = array<i32>} : memref<2x256xbf16, #tpu.memory_space<vmem>>, vector<1x64xbf16>,
    %136 = vector.extract_strided_slice %129 {offsets = [1, 0], sizes = [1, 64], strides = [1, 1]} : vector<4x64xf32> to vector<1x64xf32>
    %137 = arith.truncf %136 : vector<1x64xf32> to vector<1x64xbf16>
    %c0_103 = arith.constant 0 : index
    %c64 = arith.constant 64 : index
    %138 = vector.load %arg28[%c0_103, %c64] : memref<2x256xbf16, #tpu.memory_space<vmem>>, vector<1x64xbf16>
    tpu.vector_store %arg28[%c0_103, %c64], %137 {strides = array<i32>} : memref<2x256xbf16, #tpu.memory_space<vmem>>, vector<1x64xbf16>,
    %139 = vector.extract_strided_slice %129 {offsets = [2, 0], sizes = [1, 64], strides = [1, 1]} : vector<4x64xf32> to vector<1x64xf32>
    %140 = arith.truncf %139 : vector<1x64xf32> to vector<1x64xbf16>
    %c1 = arith.constant 1 : index
    %c0_104 = arith.constant 0 : index
    %141 = vector.load %arg28[%c1, %c0_104] : memref<2x256xbf16, #tpu.memory_space<vmem>>, vector<1x64xbf16>
    tpu.vector_store %arg28[%c1, %c0_104], %140 {strides = array<i32>} : memref<2x256xbf16, #tpu.memory_space<vmem>>, vector<1x64xbf16>,
    %142 = vector.extract_strided_slice %129 {offsets = [3, 0], sizes = [1, 64], strides = [1, 1]} : vector<4x64xf32> to vector<1x64xf32>
    %143 = arith.truncf %142 : vector<1x64xf32> to vector<1x64xbf16>
    %c1_105 = arith.constant 1 : index
    %c64_106 = arith.constant 64 : index
    %144 = vector.load %arg28[%c1_105, %c64_106] : memref<2x256xbf16, #tpu.memory_space<vmem>>, vector<1x64xbf16>
    tpu.vector_store %arg28[%c1_105, %c64_106], %143 {strides = array<i32>} : memref<2x256xbf16, #tpu.memory_space<vmem>>, vector<1x64xbf16>,
    %c2_i32_107 = arith.constant 2 : i32
    %145 = tpu.memref_slice %arg34[%c2_i32_107] : memref<5x!tpu.dma_semaphore, #tpu.memory_space<semaphore_mem>> -> memref<1x!tpu.dma_semaphore, #tpu.memory_space<semaphore_mem>>
    %146 = tpu.memref_squeeze %145 : memref<1x!tpu.dma_semaphore, #tpu.memory_space<semaphore_mem>> -> memref<!tpu.dma_semaphore, #tpu.memory_space<semaphore_mem>>
    tpu.wait_dma2 semaphore(%146 : memref<!tpu.dma_semaphore, #tpu.memory_space<semaphore_mem>>) src(%arg18 : memref<256x512xbf16, #tpu.memory_space<any>>) dst(%arg31 : memref<256x512xbf16, #tpu.memory_space<vmem>>)
    %c3_i32_108 = arith.constant 3 : i32
    %147 = tpu.memref_slice %arg34[%c3_i32_108] : memref<5x!tpu.dma_semaphore, #tpu.memory_space<semaphore_mem>> -> memref<1x!tpu.dma_semaphore, #tpu.memory_space<semaphore_mem>>
    %148 = tpu.memref_squeeze %147 : memref<1x!tpu.dma_semaphore, #tpu.memory_space<semaphore_mem>> -> memref<!tpu.dma_semaphore, #tpu.memory_space<semaphore_mem>>
    tpu.wait_dma2 semaphore(%148 : memref<!tpu.dma_semaphore, #tpu.memory_space<semaphore_mem>>) src(%arg19 : memref<128x128xbf16, #tpu.memory_space<any>>) dst(%arg32 : memref<128x128xbf16, #tpu.memory_space<vmem>>)
    %c4_i32_109 = arith.constant 4 : i32
    %149 = tpu.memref_slice %arg34[%c4_i32_109] : memref<5x!tpu.dma_semaphore, #tpu.memory_space<semaphore_mem>> -> memref<1x!tpu.dma_semaphore, #tpu.memory_space<semaphore_mem>>
    %150 = tpu.memref_squeeze %149 : memref<1x!tpu.dma_semaphore, #tpu.memory_space<semaphore_mem>> -> memref<!tpu.dma_semaphore, #tpu.memory_space<semaphore_mem>>
    tpu.wait_dma2 semaphore(%150 : memref<!tpu.dma_semaphore, #tpu.memory_space<semaphore_mem>>) src(%arg20 : memref<128x8xbf16, #tpu.memory_space<any>>) dst(%arg33 : memref<128x8xbf16, #tpu.memory_space<vmem>>)
    %c0_110 = arith.constant 0 : index
    %c0_111 = arith.constant 0 : index
    %151 = vector.load %arg28[%c0_110, %c0_111] : memref<2x256xbf16, #tpu.memory_space<vmem>>, vector<2x256xbf16>
    %c0_112 = arith.constant 0 : index
    %c0_113 = arith.constant 0 : index
    %152 = vector.load %arg31[%c0_112, %c0_113] : memref<256x512xbf16, #tpu.memory_space<vmem>>, vector<256x512xbf16>
    %cst_114 = arith.constant dense<0.000000e+00> : vector<2x512xf32>
    %153 = tpu.matmul %151, %152, %cst_114 {dimension_numbers = #tpu.dot_dimension_numbers<[1], [0], [0], [1], [0, 0, 1, 1], [], []>} : vector<2x256xbf16>, vector<256x512xbf16>, vector<2x512xf32> -> vector<2x512xf32>
    %c0_115 = arith.constant 0 : index
    %c0_116 = arith.constant 0 : index
    %154 = vector.load %arg13[%c0_115, %c0_116] : memref<1x512xf32, #tpu.memory_space<vmem>>, vector<1x512xf32>
    %155 = vector.broadcast %154 : vector<1x512xf32> to vector<2x512xf32>
    %156 = arith.addf %153, %155 : vector<2x512xf32>
    %157 = vector.extract_strided_slice %156 {offsets = [0, 0], sizes = [2, 128], strides = [1, 1]} : vector<2x512xf32> to vector<2x128xf32>
    %158 = arith.negf %157 : vector<2x128xf32>
    %159 = math.exp %158 : vector<2x128xf32>
    %cst_117 = arith.constant 1.000000e+00 : f32
    %160 = vector.broadcast %cst_117 : f32 to vector<2x128xf32>
    %161 = arith.addf %160, %159 : vector<2x128xf32>
    %162 = arith.divf %160, %161 : vector<2x128xf32>
    %163 = vector.extract_strided_slice %156 {offsets = [0, 128], sizes = [2, 128], strides = [1, 1]} : vector<2x512xf32> to vector<2x128xf32>
    %164 = arith.negf %163 : vector<2x128xf32>
    %165 = math.exp %164 : vector<2x128xf32>
    %cst_118 = arith.constant 1.000000e+00 : f32
    %166 = vector.broadcast %cst_118 : f32 to vector<2x128xf32>
    %167 = arith.addf %166, %165 : vector<2x128xf32>
    %168 = arith.divf %166, %167 : vector<2x128xf32>
    %169 = vector.extract_strided_slice %156 {offsets = [0, 256], sizes = [2, 128], strides = [1, 1]} : vector<2x512xf32> to vector<2x128xf32>
    %170 = math.tanh %169 : vector<2x128xf32>
    %171 = vector.extract_strided_slice %156 {offsets = [0, 384], sizes = [2, 128], strides = [1, 1]} : vector<2x512xf32> to vector<2x128xf32>
    %172 = arith.negf %171 : vector<2x128xf32>
    %173 = math.exp %172 : vector<2x128xf32>
    %cst_119 = arith.constant 1.000000e+00 : f32
    %174 = vector.broadcast %cst_119 : f32 to vector<2x128xf32>
    %175 = arith.addf %174, %173 : vector<2x128xf32>
    %176 = arith.divf %174, %175 : vector<2x128xf32>
    %c0_120 = arith.constant 0 : index
    %c0_121 = arith.constant 0 : index
    %177 = vector.load %arg2[%c0_120, %c0_121] : memref<2x128xf32, #tpu.memory_space<vmem>>, vector<2x128xf32>
    %178 = arith.mulf %177, %168 : vector<2x128xf32>
    %179 = arith.mulf %162, %170 : vector<2x128xf32>
    %180 = arith.addf %178, %179 : vector<2x128xf32>
    %181 = math.tanh %180 : vector<2x128xf32>
    %182 = arith.mulf %176, %181 : vector<2x128xf32>
    %183 = arith.truncf %182 : vector<2x128xf32> to vector<2x128xbf16>
    %c0_122 = arith.constant 0 : index
    %c0_123 = arith.constant 0 : index
    %184 = vector.load %arg32[%c0_122, %c0_123] : memref<128x128xbf16, #tpu.memory_space<vmem>>, vector<128x128xbf16>
    %cst_124 = arith.constant dense<0.000000e+00> : vector<2x128xf32>
    %185 = tpu.matmul %183, %184, %cst_124 {dimension_numbers = #tpu.dot_dimension_numbers<[1], [0], [0], [1], [0, 0, 1, 1], [], []>} : vector<2x128xbf16>, vector<128x128xbf16>, vector<2x128xf32> -> vector<2x128xf32>
    %c0_125 = arith.constant 0 : index
    %c0_126 = arith.constant 0 : index
    %186 = vector.load %arg14[%c0_125, %c0_126] : memref<1x128xf32, #tpu.memory_space<vmem>>, vector<1x128xf32>
    %187 = vector.broadcast %186 : vector<1x128xf32> to vector<2x128xf32>
    %188 = arith.addf %185, %187 : vector<2x128xf32>
    %cst_127 = arith.constant 0.000000e+00 : f32
    %189 = vector.broadcast %cst_127 : f32 to vector<2x128xf32>
    %190 = arith.maximumf %188, %189 : vector<2x128xf32>
    %191 = arith.truncf %190 : vector<2x128xf32> to vector<2x128xbf16>
    %c0_128 = arith.constant 0 : index
    %c0_129 = arith.constant 0 : index
    %192 = vector.load %arg33[%c0_128, %c0_129] : memref<128x8xbf16, #tpu.memory_space<vmem>>, vector<128x8xbf16>
    %cst_130 = arith.constant dense<0.000000e+00> : vector<2x8xf32>
    %193 = tpu.matmul %191, %192, %cst_130 {dimension_numbers = #tpu.dot_dimension_numbers<[1], [0], [0], [1], [0, 0, 1, 1], [], []>} : vector<2x128xbf16>, vector<128x8xbf16>, vector<2x8xf32> -> vector<2x8xf32>
    %c0_131 = arith.constant 0 : index
    %c0_132 = arith.constant 0 : index
    %194 = vector.load %arg15[%c0_131, %c0_132] : memref<1x8xf32, #tpu.memory_space<vmem>>, vector<1x8xf32>
    %195 = vector.broadcast %194 : vector<1x8xf32> to vector<2x8xf32>
    %196 = arith.addf %193, %195 : vector<2x8xf32>
    %197 = vector.extract_strided_slice %196 {offsets = [0, 0], sizes = [2, 7], strides = [1, 1]} : vector<2x8xf32> to vector<2x7xf32>
    %198 = vector.extract_strided_slice %196 {offsets = [0, 7], sizes = [2, 1], strides = [1, 1]} : vector<2x8xf32> to vector<2x1xf32>
    %199 = vector.broadcast %198 : vector<2x1xf32> to vector<2x7xf32>
    %200 = arith.addf %199, %197 : vector<2x7xf32>
    %201 = vector.shape_cast %197 : vector<2x7xf32> to vector<1x2x7xf32>
    %cst_133 = arith.constant dense<0.000000e+00> : vector<1xf32>
    %202 = vector.multi_reduction <add>, %201, %cst_133 [1, 2] : vector<1x2x7xf32> to vector<1xf32>
    %203 = vector.shape_cast %202 : vector<1xf32> to vector<1x1x1xf32>
    %204 = vector.extract %203[0, 0, 0] : f32 from vector<1x1x1xf32>
    %cst_134 = arith.constant 1.400000e+01 : f32
    %205 = arith.divf %204, %cst_134 : f32
    %206 = vector.broadcast %205 : f32 to vector<2x7xf32>
    %207 = arith.subf %200, %206 : vector<2x7xf32>
    %c0_135 = arith.constant 0 : index
    %c0_136 = arith.constant 0 : index
    %208 = vector.load %arg21[%c0_135, %c0_136] : memref<2x7xf32, #tpu.memory_space<vmem>>, vector<2x7xf32>
    tpu.vector_store %arg21[%c0_135, %c0_136], %207 {strides = array<i32>} : memref<2x7xf32, #tpu.memory_space<vmem>>, vector<2x7xf32>,
    %c0_137 = arith.constant 0 : index
    %c0_138 = arith.constant 0 : index
    %209 = vector.load %arg22[%c0_137, %c0_138] : memref<2x128xf32, #tpu.memory_space<vmem>>, vector<2x128xf32>
    tpu.vector_store %arg22[%c0_137, %c0_138], %182 {strides = array<i32>} : memref<2x128xf32, #tpu.memory_space<vmem>>, vector<2x128xf32>,
    %c0_139 = arith.constant 0 : index
    %c0_140 = arith.constant 0 : index
    %210 = vector.load %arg23[%c0_139, %c0_140] : memref<2x128xf32, #tpu.memory_space<vmem>>, vector<2x128xf32>
    tpu.vector_store %arg23[%c0_139, %c0_140], %180 {strides = array<i32>} : memref<2x128xf32, #tpu.memory_space<vmem>>, vector<2x128xf32>,
    return
  }
}

</mosaic_0001>

<llo_original>
// kernel: forward.1
$region0: #{forward.1}
  #allocation0 [shape = 'u32[]', space=smem, size = 0x4, offset = 0x4, fixed_abs, tag = 'smem constant byte address 0x4 - core index']
  #allocation1 [shape = 'u32[144,128]{1,0:T(1,128)}', space=vmem, size = 0x12000, scoped, tag = 'internal scratch']
  #allocation2 [shape = 'bf16[198,512]{1,0:T(8,128)(2,1)}', space=vmem, size = 0x32000, scoped, tag = 'scratch operand']
  #allocation3 [shape = 'bf16[34,544]{1,0:T(8,128)(2,1)}', space=vmem, size = 0xc800, scoped, tag = 'scratch operand']
  #allocation4 [shape = 'bf16[18,288]{1,0:T(8,128)(2,1)}', space=vmem, size = 0x4800, scoped, tag = 'scratch operand']
  #allocation5 [shape = 'bf16[10,160]{1,0:T(8,128)(2,1)}', space=vmem, size = 0x2000, scoped, tag = 'scratch operand']
  #allocation6 [shape = 'bf16[2,256]{1,0:T(2,128)(2,1)}', space=vmem, size = 0x400, scoped, tag = 'scratch operand']
  #allocation7 [shape = 'bf16[288,384]{1,0:T(16,128)(2,1)}', space=vmem, size = 0x36000, scoped, tag = 'scratch operand']
  #allocation8 [shape = 'bf16[160,192]{1,0:T(16,128)(2,1)}', space=vmem, size = 0x14000, scoped, tag = 'scratch operand']
  #allocation9 [shape = 'bf16[256,512]{1,0:T(16,128)(2,1)}', space=vmem, size = 0x40000, scoped, tag = 'scratch operand']
  #allocation10 [shape = 'bf16[128,128]{1,0:T(16,128)(2,1)}', space=vmem, size = 0x8000, scoped, tag = 'scratch operand']
  #allocation11 [shape = 'bf16[128,8]{1,0:T(16,128)(2,1)}', space=vmem, size = 0x8000, scoped, tag = 'scratch operand']
  #allocation12 [shape = 's32[5]{0}', space=sflag, size = 0x14, scoped, tag = 'scratch operand']
  #allocation17 [shape = 's32[]', space=sflag, size = 0x4, offset = 0, fixed_abs, tag = 'sflag constant byte address 0x0 - dummy sync flag']
  #allocation19 [shape = 's32[]', space=sflag, size = 0x4, offset = 0, fixed_abs, tag = 'sflag constant byte address 0x0 - dummy sync flag']
  #allocation20 [shape = 's32[]', space=sflag, size = 0x4, offset = 0, fixed_abs, tag = 'sflag constant byte address 0x0 - dummy sync flag']
  #allocation22 [shape = 's32[]', space=sflag, size = 0x4, offset = 0, fixed_abs, tag = 'sflag constant byte address 0x0 - dummy sync flag']
  #allocation23 [shape = 's32[]', space=sflag, size = 0x4, offset = 0, fixed_abs, tag = 'sflag constant byte address 0x0 - dummy sync flag']
  %s0 = inlined_call_operand.vmem [shape: bf16[66,99], index: 0, kind: input, shape index: {}]
  %s1 = inlined_call_operand.vmem [shape: f32[2,128], index: 1, kind: input, shape index: {}, may-alias: {1,22}]
  %s2 = inlined_call_operand.vmem [shape: f32[2,128], index: 2, kind: input, shape index: {}, may-alias: {2,23}]
  %s3 = inlined_call_operand.vmem [shape: bf16[99,1536], index: 3, kind: input, shape index: {}]
  %s4 = inlined_call_operand.vmem [shape: bf16[32,198], index: 4, kind: input, shape index: {}]
  %s5 = inlined_call_operand.vmem [shape: f32[1,512], index: 5, kind: input, shape index: {}]
  %s6 = inlined_call_operand.hbm [shape: bf16[544,768], index: 6, kind: input, shape index: {}]
  %s7 = inlined_call_operand.vmem [shape: bf16[16,102], index: 7, kind: input, shape index: {}]
  %s8 = inlined_call_operand.vmem [shape: f32[1,256], index: 8, kind: input, shape index: {}]
  %s9 = inlined_call_operand.vmem [shape: bf16[8,54], index: 9, kind: input, shape index: {}]
  %s10 = inlined_call_operand.vmem [shape: f32[1,128], index: 10, kind: input, shape index: {}]
  %s11 = inlined_call_operand.vmem [shape: bf16[4,30], index: 11, kind: input, shape index: {}]
  %s12 = inlined_call_operand.vmem [shape: f32[1,64], index: 12, kind: input, shape index: {}]
  %s13 = inlined_call_operand.vmem [shape: f32[1,512], index: 13, kind: input, shape index: {}]
  %s14 = inlined_call_operand.vmem [shape: f32[1,128], index: 14, kind: input, shape index: {}]
  %s15 = inlined_call_operand.vmem [shape: f32[1,8], index: 15, kind: input, shape index: {}]
  %s16 = inlined_call_operand.hbm [shape: bf16[288,384], index: 16, kind: input, shape index: {}]
  %s17 = inlined_call_operand.vmem [shape: bf16[160,192], index: 17, kind: input, shape index: {}]
  %s18 = inlined_call_operand.hbm [shape: bf16[256,512], index: 18, kind: input, shape index: {}]
  %s19 = inlined_call_operand.vmem [shape: bf16[128,128], index: 19, kind: input, shape index: {}]
  %s20 = inlined_call_operand.vmem [shape: bf16[128,8], index: 20, kind: input, shape index: {}]
  %s21 = inlined_call_operand.hbm [shape: f32[2,7], index: 21, kind: output, shape index: {0}]
  %s22 = inlined_call_operand.vmem [shape: f32[2,128], index: 22, kind: output, shape index: {1}, may-alias: {1,22}]
  %s23 = inlined_call_operand.vmem [shape: f32[2,128], index: 23, kind: output, shape index: {2}, may-alias: {2,23}]
  %24 = xla_tuple %s21, %s22, %s23
  %s25 = sld [smem:[#allocation0]]
  $region199: #{forward.1} parent=0
    _
  %s27 = ssub.s32 1, %s25
  %s28 = scalar_select 0, %s27, %s25
  $region1: #{forward.1} parent=0
    #allocation13 [shape = 'u8[835584]{0}', space=vmem, size = 0xcc000, scoped, tag = 'input window, operand 6, single buffered']
    #allocation14 [shape = 's32[1]{0}', space=sflag, size = 0x4, scoped, tag = 'scoped memory for forward.1']
    #allocation15 [shape = 's32[1]{0}', space=sflag, size = 0x4, scoped, tag = 'scoped memory for forward.1']
    #allocation16 [shape = 'u8[1024]{0}', space=vmem, size = 0x400, scoped, tag = 'output window, operand 0, single buffered']
    #allocation18 [shape = 'u32[9]{0}', space=smem, size = 0x24, scoped, tag = 'DMA stride descriptor']
    #allocation21 [shape = 'u32[9]{0}', space=smem, size = 0x24, scoped, tag = 'DMA stride descriptor']
    %29 = vsyncpa [#allocation14], 0
    %30 = vsyncpa [#allocation15], 0
    // Predicated region
    $region2: #{forward.1} parent=1 // pred_check
      _
    $region3: #{forward.1} parent=1 // pred_check_branch
      %32 = sbr.rel (0) target = $region5
    $region4: #{forward.1} parent=1 // pred_region
      _
    $region5: #{forward.1} parent=1 // pred_fallthru
      _
    // Predicated region
    $region6: #{forward.1} parent=1 // pred_check
      _
    $region7: #{forward.1} parent=1 // pred_check_branch
      %34 = sbr.rel (0) target = $region9
    $region8: #{forward.1} parent=1 // pred_region
      _
    $region9: #{forward.1} parent=1 // pred_fallthru
      _
    // Predicated region
    $region10: #{forward.1} parent=1 // pred_check
      _
    $region11: #{forward.1} parent=1 // pred_check_branch
      %36 = sbr.rel (0) target = $region13
    $region12: #{forward.1} parent=1 // pred_region
      _
    $region13: #{forward.1} parent=1 // pred_fallthru
      _
    // Predicated region
    $region14: #{forward.1} parent=1 // pred_check
      _
    $region15: #{forward.1} parent=1 // pred_check_branch
      %38 = sbr.rel (0) target = $region17
    $region16: #{forward.1} parent=1 // pred_region
      _
    $region17: #{forward.1} parent=1 // pred_fallthru
      _
    // Predicated region
    $region18: #{forward.1} parent=1 // pred_check
      _
    $region19: #{forward.1} parent=1 // pred_check_branch
      %40 = sbr.rel (0) target = $region21
    $region20: #{forward.1} parent=1 // pred_region
      _
    $region21: #{forward.1} parent=1 // pred_fallthru
      _
    // Predicated region
    $region22: #{forward.1} parent=1 // pred_check
      _
    $region23: #{forward.1} parent=1 // pred_check_branch
      %42 = sbr.rel (0) target = $region25
    $region24: #{forward.1} parent=1 // pred_region
      _
    $region25: #{forward.1} parent=1 // pred_fallthru
      _
    // Predicated region
    $region26: #{forward.1} parent=1 // pred_check
      _
    $region27: #{forward.1} parent=1 // pred_check_branch
      %44 = sbr.rel (0) target = $region29
    $region28: #{forward.1} parent=1 // pred_region
      %s46 = ssub.s32 26112, 26112
      %47 = vsyncadd [#allocation14], %s46
      %s48 = sshll.u32 [#allocation13], 4
      %s49 = int_to_ptr.vmem [resolvable:$true] %s48
      %54 = dma.hbm_to_vmem [thread:$0]  %s6, 26112, %s49, [#allocation14], 384, 384, 24
    $region29: #{forward.1} parent=1 // pred_fallthru
      _
    // Predicated region
    $region30: #{forward.1} parent=1 // pred_check
      _
    $region31: #{forward.1} parent=1 // pred_check_branch
      %56 = sbr.rel (0) target = $region33
    $region32: #{forward.1} parent=1 // pred_region
      _
    $region33: #{forward.1} parent=1 // pred_fallthru
      _
    // Predicated region
    $region34: #{forward.1} parent=1 // pred_check
      _
    $region35: #{forward.1} parent=1 // pred_check_branch
      %58 = sbr.rel (0) target = $region37
    $region36: #{forward.1} parent=1 // pred_region
      _
    $region37: #{forward.1} parent=1 // pred_fallthru
      _
    // Predicated region
    $region38: #{forward.1} parent=1 // pred_check
      _
    $region39: #{forward.1} parent=1 // pred_check_branch
      %60 = sbr.rel (0) target = $region41
    $region40: #{forward.1} parent=1 // pred_region
      _
    $region41: #{forward.1} parent=1 // pred_fallthru
      _
    // Predicated region
    $region42: #{forward.1} parent=1 // pred_check
      _
    $region43: #{forward.1} parent=1 // pred_check_branch
      %62 = sbr.rel (0) target = $region45
    $region44: #{forward.1} parent=1 // pred_region
      _
    $region45: #{forward.1} parent=1 // pred_fallthru
      _
    // Predicated region
    $region46: #{forward.1} parent=1 // pred_check
      _
    $region47: #{forward.1} parent=1 // pred_check_branch
      %64 = sbr.rel (0) target = $region49
    $region48: #{forward.1} parent=1 // pred_region
      _
    $region49: #{forward.1} parent=1 // pred_fallthru
      _
    // Predicated region
    $region50: #{forward.1} parent=1 // pred_check
      _
    $region51: #{forward.1} parent=1 // pred_check_branch
      %66 = sbr.rel (0) target = $region53
    $region52: #{forward.1} parent=1 // pred_region
      _
    $region53: #{forward.1} parent=1 // pred_fallthru
      _
    // Predicated region
    $region54: #{forward.1} parent=1 // pred_check
      _
    $region55: #{forward.1} parent=1 // pred_check_branch
      %68 = sbr.rel (0) target = $region57
    $region56: #{forward.1} parent=1 // pred_region
      _
    $region57: #{forward.1} parent=1 // pred_fallthru
      _
    // Predicated region
    $region58: #{forward.1} parent=1 // pred_check
      _
    $region59: #{forward.1} parent=1 // pred_check_branch
      %70 = sbr.rel (0) target = $region61
    $region60: #{forward.1} parent=1 // pred_region
      _
    $region61: #{forward.1} parent=1 // pred_fallthru
      _
    // Predicated region
    $region62: #{forward.1} parent=1 // pred_check
      _
    $region63: #{forward.1} parent=1 // pred_check_branch
      %72 = sbr.rel (0) target = $region65
    $region64: #{forward.1} parent=1 // pred_region
      _
    $region65: #{forward.1} parent=1 // pred_fallthru
      _
    // Predicated region
    $region66: #{forward.1} parent=1 // pred_check
      _
    $region67: #{forward.1} parent=1 // pred_check_branch
      %74 = sbr.rel (0) target = $region69
    $region68: #{forward.1} parent=1 // pred_region
      %75 = dma.done [#allocation14], 26112
    $region69: #{forward.1} parent=1 // pred_fallthru
      _
    %s78 = sshll.u32 1, 14
    %s79 = sxor.u32 4294967295, %s78
    %s81 = sld [smem:[#allocation0]]
    %s82 = sadd.s32 2, %s81
    %s84 = sshll.u32 7, 26
    %s85 = sxor.u32 4294967295, %s84
    %s86 = sand.u32 0, %s85
    %s87 = sshll.u32 %s82, 26
    %s88 = sor.u32 %s86, %s87
    %s89 = sshll.u32 [#allocation7], 4
    %s90 = int_to_ptr.vmem [resolvable:$true] %s89
    %93 = sst [smem:[#allocation18]] 384
    %s94 = scalar_lea.smem [#allocation18], 1
    %95 = sst [smem:[%s94]] 384
    %s96 = scalar_lea.smem [#allocation18], 2
    %97 = sst [smem:[%s96]] 3
    %s98 = scalar_lea.smem [#allocation18], 3
    %99 = sst [smem:[%s98]] 64
    %s100 = scalar_lea.smem [#allocation18], 4
    %101 = sst [smem:[%s100]] 128
    %s102 = scalar_lea.smem [#allocation18], 5
    %103 = sst [smem:[%s102]] 2
    %s104 = scalar_lea.smem [#allocation18], 6
    %105 = sst [smem:[%s104]] 192
    %s106 = scalar_lea.smem [#allocation18], 7
    %107 = sst [smem:[%s106]] 64
    %s108 = scalar_lea.smem [#allocation18], 8
    %109 = sst [smem:[%s108]] 4
    %111 = dma.general %s16, 6912, %s90, [#allocation12], [#allocation17], [#allocation18], %s88, 0
    %s112 = scalar_lea.sflag [#allocation12], 1
    %p114 = scmp.lt.u32.totalorder 4, 8
    %p115 = pneg %p114
    // Predicated region
    $region70: #{forward.1} parent=1 // pred_check
      _
    $region71: #{forward.1} parent=1 // pred_check_branch
      %117 = sbr.rel (%p114) target = $region73
    $region72: #{forward.1} parent=1 // pred_region
      %s210 = sand.u32 4, 7
      %p211 = scmp.eq.s32.totalorder %s210, 0
      %p212 = pneg %p211
      // Predicated region
      $region85: #{forward.1} parent=72 // pred_check
        _
      $region86: #{forward.1} parent=72 // pred_check_branch
        %214 = sbr.rel (%p211) target = $region88
      $region87: #{forward.1} parent=72 // pred_region
        %s215 = sand.u32 4, 7
        %s216 = ssub.s32 4, %s215
        %s217 = scalar_lea.vmem %s17, %s216
        %s218 = ssub.s32 4, %s215
        %s219 = scalar_lea.vmem [#allocation8], %s218
        loop: start=0, step=1, limit=1
        $region89: #{forward.1} parent=87 // loop_pre_header
          _
        $region90: #{forward.1} parent=87 // loop_header
          %s221 = sphi 0, %s225
          %p222 = scmp.ge.s32.totalorder %s221, 1
          %s226 = sphi %s17, %s17
          %s227 = sphi [#allocation8], [#allocation8]
        $region91: #{forward.1} parent=87 // loop_header_branch
          %224 = sbr.rel (%p222) target = $region95
        $region92: #{forward.1} parent=87 // loop_body
          _
        $region93: #{forward.1} parent=87 // loop_footer
          %s225 = sadd.s32 1, %s221
        $region94: #{forward.1} parent=87 // loop_footer_branch
          %220 = sbr.rel target = $region90
        $region95: #{forward.1} parent=87 // loop_exit
          _
        %s228 = sshllo.u32 0, %s215
        loop: start=0, step=1, limit=1
        $region96: #{forward.1} parent=87 // loop_pre_header
          _
        $region97: #{forward.1} parent=87 // loop_header
          %s230 = sphi 0, %s234
          %p231 = scmp.ge.s32.totalorder %s230, 1
          %s235 = sphi %s217, %s217
          %s236 = sphi %s219, %s219
        $region98: #{forward.1} parent=87 // loop_header_branch
          %233 = sbr.rel (%p231) target = $region102
        $region99: #{forward.1} parent=87 // loop_body
          %v237 = vld [vmem:[%s235] sm:%s228]
          %238 = vst [vmem:[%s236] sm:%s228] %v237
          %v239 = vld [vmem:[%s235 + $0x8] sm:%s228]
          %240 = vst [vmem:[%s236 + $0x4] sm:%s228] %v239
          %v241 = vld [vmem:[%s235 + $0x4] sm:%s228]
          %242 = vst [vmem:[%s236 + $0x8] sm:%s228] %v241
          %v243 = vld [vmem:[%s235 + $0xc] sm:%s228]
          %244 = vst [vmem:[%s236 + $0xc] sm:%s228] %v243
          %v245 = vld [vmem:[%s235 + $0x10] sm:%s228]
          %246 = vst [vmem:[%s236 + $0x10] sm:%s228] %v245
          %v247 = vld [vmem:[%s235 + $0x18] sm:%s228]
          %248 = vst [vmem:[%s236 + $0x14] sm:%s228] %v247
          %v249 = vld [vmem:[%s235 + $0x14] sm:%s228]
          %250 = vst [vmem:[%s236 + $0x18] sm:%s228] %v249
          %v251 = vld [vmem:[%s235 + $0x1c] sm:%s228]
          %252 = vst [vmem:[%s236 + $0x1c] sm:%s228] %v251
          %v253 = vld [vmem:[%s235 + $0x20] sm:%s228]
          %254 = vst [vmem:[%s236 + $0x20] sm:%s228] %v253
          %v255 = vld [vmem:[%s235 + $0x28] sm:%s228]
          %256 = vst [vmem:[%s236 + $0x24] sm:%s228] %v255
          %v257 = vld [vmem:[%s235 + $0x24] sm:%s228]
          %258 = vst [vmem:[%s236 + $0x28] sm:%s228] %v257
          %v259 = vld [vmem:[%s235 + $0x2c] sm:%s228]
          %260 = vst [vmem:[%s236 + $0x2c] sm:%s228] %v259
          %v261 = vld [vmem:[%s235 + $0x30] sm:%s228]
          %262 = vst [vmem:[%s236 + $0x30] sm:%s228] %v261
          %v263 = vld [vmem:[%s235 + $0x38] sm:%s228]
          %264 = vst [vmem:[%s236 + $0x34] sm:%s228] %v263
          %v265 = vld [vmem:[%s235 + $0x34] sm:%s228]
          %266 = vst [vmem:[%s236 + $0x38] sm:%s228] %v265
          %v267 = vld [vmem:[%s235 + $0x3c] sm:%s228]
          %268 = vst [vmem:[%s236 + $0x3c] sm:%s228] %v267
          %v269 = vld [vmem:[%s235 + $0x40] sm:%s228]
          %270 = vst [vmem:[%s236 + $0x40] sm:%s228] %v269
          %v271 = vld [vmem:[%s235 + $0x48] sm:%s228]
          %272 = vst [vmem:[%s236 + $0x44] sm:%s228] %v271
          %v273 = vld [vmem:[%s235 + $0x44] sm:%s228]
          %274 = vst [vmem:[%s236 + $0x48] sm:%s228] %v273
          %v275 = vld [vmem:[%s235 + $0x4c] sm:%s228]
          %276 = vst [vmem:[%s236 + $0x4c] sm:%s228] %v275
          %v277 = vld [vmem:[%s235 + $0x50] sm:%s228]
          %278 = vst [vmem:[%s236 + $0x50] sm:%s228] %v277
          %v279 = vld [vmem:[%s235 + $0x58] sm:%s228]
          %280 = vst [vmem:[%s236 + $0x54] sm:%s228] %v279
          %v281 = vld [vmem:[%s235 + $0x54] sm:%s228]
          %282 = vst [vmem:[%s236 + $0x58] sm:%s228] %v281
          %v283 = vld [vmem:[%s235 + $0x5c] sm:%s228]
          %284 = vst [vmem:[%s236 + $0x5c] sm:%s228] %v283
          %v285 = vld [vmem:[%s235 + $0x60] sm:%s228]
          %286 = vst [vmem:[%s236 + $0x60] sm:%s228] %v285
          %v287 = vld [vmem:[%s235 + $0x68] sm:%s228]
          %288 = vst [vmem:[%s236 + $0x64] sm:%s228] %v287
          %v289 = vld [vmem:[%s235 + $0x64] sm:%s228]
          %290 = vst [vmem:[%s236 + $0x68] sm:%s228] %v289
          %v291 = vld [vmem:[%s235 + $0x6c] sm:%s228]
          %292 = vst [vmem:[%s236 + $0x6c] sm:%s228] %v291
          %v293 = vld [vmem:[%s235 + $0x70] sm:%s228]
          %294 = vst [vmem:[%s236 + $0x70] sm:%s228] %v293
          %v295 = vld [vmem:[%s235 + $0x78] sm:%s228]
          %296 = vst [vmem:[%s236 + $0x74] sm:%s228] %v295
          %v297 = vld [vmem:[%s235 + $0x74] sm:%s228]
          %298 = vst [vmem:[%s236 + $0x78] sm:%s228] %v297
          %v299 = vld [vmem:[%s235 + $0x7c] sm:%s228]
          %300 = vst [vmem:[%s236 + $0x7c] sm:%s228] %v299
          %v301 = vld [vmem:[%s235 + $0x80] sm:%s228]
          %302 = vst [vmem:[%s236 + $0x80] sm:%s228] %v301
          %v303 = vld [vmem:[%s235 + $0x88] sm:%s228]
          %304 = vst [vmem:[%s236 + $0x84] sm:%s228] %v303
          %v305 = vld [vmem:[%s235 + $0x84] sm:%s228]
          %306 = vst [vmem:[%s236 + $0x88] sm:%s228] %v305
          %v307 = vld [vmem:[%s235 + $0x8c] sm:%s228]
          %308 = vst [vmem:[%s236 + $0x8c] sm:%s228] %v307
          %v309 = vld [vmem:[%s235 + $0x90] sm:%s228]
          %310 = vst [vmem:[%s236 + $0x90] sm:%s228] %v309
          %v311 = vld [vmem:[%s235 + $0x98] sm:%s228]
          %312 = vst [vmem:[%s236 + $0x94] sm:%s228] %v311
          %v313 = vld [vmem:[%s235 + $0x94] sm:%s228]
          %314 = vst [vmem:[%s236 + $0x98] sm:%s228] %v313
          %v315 = vld [vmem:[%s235 + $0x9c] sm:%s228]
          %316 = vst [vmem:[%s236 + $0x9c] sm:%s228] %v315
        $region100: #{forward.1} parent=87 // loop_footer
          %s234 = sadd.s32 1, %s230
        $region101: #{forward.1} parent=87 // loop_footer_branch
          %229 = sbr.rel target = $region97
        $region102: #{forward.1} parent=87 // loop_exit
          _
      $region88: #{forward.1} parent=72 // pred_fallthru
        _
    $region73: #{forward.1} parent=1 // pred_fallthru
      _
    // Predicated region
    $region74: #{forward.1} parent=1 // pred_check
      %p118 = pneg %p114
    $region75: #{forward.1} parent=1 // pred_check_branch
      %120 = sbr.rel (%p118) target = $region77
    $region76: #{forward.1} parent=1 // pred_region
      %s121 = sshllo.u32 0, 4
      loop: start=0, step=1, limit=1
      $region78: #{forward.1} parent=76 // loop_pre_header
        _
      $region79: #{forward.1} parent=76 // loop_header
        %s123 = sphi 0, %s127
        %p124 = scmp.ge.s32.totalorder %s123, 1
        %s128 = sphi %s17, %s17
        %s129 = sphi [#allocation8], [#allocation8]
      $region80: #{forward.1} parent=76 // loop_header_branch
        %126 = sbr.rel (%p124) target = $region84
      $region81: #{forward.1} parent=76 // loop_body
        %v130 = vld [vmem:[%s128] sm:%s121]
        %131 = vst [vmem:[%s129] sm:%s121] %v130
        %v132 = vld [vmem:[%s128 + $0x8] sm:%s121]
        %133 = vst [vmem:[%s129 + $0x4] sm:%s121] %v132
        %v134 = vld [vmem:[%s128 + $0x4] sm:%s121]
        %135 = vst [vmem:[%s129 + $0x8] sm:%s121] %v134
        %v136 = vld [vmem:[%s128 + $0xc] sm:%s121]
        %137 = vst [vmem:[%s129 + $0xc] sm:%s121] %v136
        %v138 = vld [vmem:[%s128 + $0x10] sm:%s121]
        %139 = vst [vmem:[%s129 + $0x10] sm:%s121] %v138
        %v140 = vld [vmem:[%s128 + $0x18] sm:%s121]
        %141 = vst [vmem:[%s129 + $0x14] sm:%s121] %v140
        %v142 = vld [vmem:[%s128 + $0x14] sm:%s121]
        %143 = vst [vmem:[%s129 + $0x18] sm:%s121] %v142
        %v144 = vld [vmem:[%s128 + $0x1c] sm:%s121]
        %145 = vst [vmem:[%s129 + $0x1c] sm:%s121] %v144
        %v146 = vld [vmem:[%s128 + $0x20] sm:%s121]
        %147 = vst [vmem:[%s129 + $0x20] sm:%s121] %v146
        %v148 = vld [vmem:[%s128 + $0x28] sm:%s121]
        %149 = vst [vmem:[%s129 + $0x24] sm:%s121] %v148
        %v150 = vld [vmem:[%s128 + $0x24] sm:%s121]
        %151 = vst [vmem:[%s129 + $0x28] sm:%s121] %v150
        %v152 = vld [vmem:[%s128 + $0x2c] sm:%s121]
        %153 = vst [vmem:[%s129 + $0x2c] sm:%s121] %v152
        %v154 = vld [vmem:[%s128 + $0x30] sm:%s121]
        %155 = vst [vmem:[%s129 + $0x30] sm:%s121] %v154
        %v156 = vld [vmem:[%s128 + $0x38] sm:%s121]
        %157 = vst [vmem:[%s129 + $0x34] sm:%s121] %v156
        %v158 = vld [vmem:[%s128 + $0x34] sm:%s121]
        %159 = vst [vmem:[%s129 + $0x38] sm:%s121] %v158
        %v160 = vld [vmem:[%s128 + $0x3c] sm:%s121]
        %161 = vst [vmem:[%s129 + $0x3c] sm:%s121] %v160
        %v162 = vld [vmem:[%s128 + $0x40] sm:%s121]
        %163 = vst [vmem:[%s129 + $0x40] sm:%s121] %v162
        %v164 = vld [vmem:[%s128 + $0x48] sm:%s121]
        %165 = vst [vmem:[%s129 + $0x44] sm:%s121] %v164
        %v166 = vld [vmem:[%s128 + $0x44] sm:%s121]
        %167 = vst [vmem:[%s129 + $0x48] sm:%s121] %v166
        %v168 = vld [vmem:[%s128 + $0x4c] sm:%s121]
        %169 = vst [vmem:[%s129 + $0x4c] sm:%s121] %v168
        %v170 = vld [vmem:[%s128 + $0x50] sm:%s121]
        %171 = vst [vmem:[%s129 + $0x50] sm:%s121] %v170
        %v172 = vld [vmem:[%s128 + $0x58] sm:%s121]
        %173 = vst [vmem:[%s129 + $0x54] sm:%s121] %v172
        %v174 = vld [vmem:[%s128 + $0x54] sm:%s121]
        %175 = vst [vmem:[%s129 + $0x58] sm:%s121] %v174
        %v176 = vld [vmem:[%s128 + $0x5c] sm:%s121]
        %177 = vst [vmem:[%s129 + $0x5c] sm:%s121] %v176
        %v178 = vld [vmem:[%s128 + $0x60] sm:%s121]
        %179 = vst [vmem:[%s129 + $0x60] sm:%s121] %v178
        %v180 = vld [vmem:[%s128 + $0x68] sm:%s121]
        %181 = vst [vmem:[%s129 + $0x64] sm:%s121] %v180
        %v182 = vld [vmem:[%s128 + $0x64] sm:%s121]
        %183 = vst [vmem:[%s129 + $0x68] sm:%s121] %v182
        %v184 = vld [vmem:[%s128 + $0x6c] sm:%s121]
        %185 = vst [vmem:[%s129 + $0x6c] sm:%s121] %v184
        %v186 = vld [vmem:[%s128 + $0x70] sm:%s121]
        %187 = vst [vmem:[%s129 + $0x70] sm:%s121] %v186
        %v188 = vld [vmem:[%s128 + $0x78] sm:%s121]
        %189 = vst [vmem:[%s129 + $0x74] sm:%s121] %v188
        %v190 = vld [vmem:[%s128 + $0x74] sm:%s121]
        %191 = vst [vmem:[%s129 + $0x78] sm:%s121] %v190
        %v192 = vld [vmem:[%s128 + $0x7c] sm:%s121]
        %193 = vst [vmem:[%s129 + $0x7c] sm:%s121] %v192
        %v194 = vld [vmem:[%s128 + $0x80] sm:%s121]
        %195 = vst [vmem:[%s129 + $0x80] sm:%s121] %v194
        %v196 = vld [vmem:[%s128 + $0x88] sm:%s121]
        %197 = vst [vmem:[%s129 + $0x84] sm:%s121] %v196
        %v198 = vld [vmem:[%s128 + $0x84] sm:%s121]
        %199 = vst [vmem:[%s129 + $0x88] sm:%s121] %v198
        %v200 = vld [vmem:[%s128 + $0x8c] sm:%s121]
        %201 = vst [vmem:[%s129 + $0x8c] sm:%s121] %v200
        %v202 = vld [vmem:[%s128 + $0x90] sm:%s121]
        %203 = vst [vmem:[%s129 + $0x90] sm:%s121] %v202
        %v204 = vld [vmem:[%s128 + $0x98] sm:%s121]
        %205 = vst [vmem:[%s129 + $0x94] sm:%s121] %v204
        %v206 = vld [vmem:[%s128 + $0x94] sm:%s121]
        %207 = vst [vmem:[%s129 + $0x98] sm:%s121] %v206
        %v208 = vld [vmem:[%s128 + $0x9c] sm:%s121]
        %209 = vst [vmem:[%s129 + $0x9c] sm:%s121] %v208
      $region82: #{forward.1} parent=76 // loop_footer
        %s127 = sadd.s32 1, %s123
      $region83: #{forward.1} parent=76 // loop_footer_branch
        %122 = sbr.rel target = $region79
      $region84: #{forward.1} parent=76 // loop_exit
        _
    $region77: #{forward.1} parent=1 // pred_fallthru
      _
    // Predicated region
    $region103: #{forward.1} parent=1 // pred_check
      _
    $region104: #{forward.1} parent=1 // pred_check_branch
      %319 = sbr.rel (0) target = $region106
    $region105: #{forward.1} parent=1 // pred_region
      %320 = vsyncadd %s112, 2560
    $region106: #{forward.1} parent=1 // pred_fallthru
      _
    %s321 = scalar_lea.sflag [#allocation12], 2
    %s323 = sshll.u32 1, 14
    %s324 = sxor.u32 4294967295, %s323
    %s326 = sadd.s32 2, %s81
    %s328 = sshll.u32 7, 26
    %s329 = sxor.u32 4294967295, %s328
    %s330 = sand.u32 0, %s329
    %s331 = sshll.u32 %s326, 26
    %s332 = sor.u32 %s330, %s331
    %s333 = sshll.u32 [#allocation9], 4
    %s334 = int_to_ptr.vmem [resolvable:$true] %s333
    %337 = sst [smem:[#allocation21]] 512
    %s338 = scalar_lea.smem [#allocation21], 1
    %339 = sst [smem:[%s338]] 512
    %s340 = scalar_lea.smem [#allocation21], 2
    %341 = sst [smem:[%s340]] 4
    %s342 = scalar_lea.smem [#allocation21], 3
    %343 = sst [smem:[%s342]] 64
    %s344 = scalar_lea.smem [#allocation21], 4
    %345 = sst [smem:[%s344]] 128
    %s346 = scalar_lea.smem [#allocation21], 5
    %347 = sst [smem:[%s346]] 2
    %s348 = scalar_lea.smem [#allocation21], 6
    %349 = sst [smem:[%s348]] 256
    %s350 = scalar_lea.smem [#allocation21], 7
    %351 = sst [smem:[%s350]] 64
    %s352 = scalar_lea.smem [#allocation21], 8
    %353 = sst [smem:[%s352]] 4
    %355 = dma.general %s18, 8192, %s334, %s321, [#allocation20], [#allocation21], %s332, 0
    %s356 = scalar_lea.sflag [#allocation12], 3
    %p358 = scmp.lt.u32.totalorder 64, 8
    %p359 = pneg %p358
    // Predicated region
    $region107: #{forward.1} parent=1 // pred_check
      _
    $region108: #{forward.1} parent=1 // pred_check_branch
      %361 = sbr.rel (%p358) target = $region110
    $region109: #{forward.1} parent=1 // pred_region
      %s376 = sand.u32 64, 7
      %p377 = scmp.eq.s32.totalorder %s376, 0
      // Predicated region
      $region122: #{forward.1} parent=109 // pred_check
        %p378 = pneg %p377
      $region123: #{forward.1} parent=109 // pred_check_branch
        %380 = sbr.rel (%p378) target = $region125
      $region124: #{forward.1} parent=109 // pred_region
        loop: start=0, step=1, limit=1
        $region126: #{forward.1} parent=124 // loop_pre_header
          _
        $region127: #{forward.1} parent=124 // loop_header
          %s382 = sphi 0, %s386
          %p383 = scmp.ge.s32.totalorder %s382, 1
          %s387 = sphi %s19, %s19
          %s388 = sphi [#allocation10], [#allocation10]
        $region128: #{forward.1} parent=124 // loop_header_branch
          %385 = sbr.rel (%p383) target = $region132
        $region129: #{forward.1} parent=124 // loop_body
          %v389 = vld [vmem:[%s387] sm:$0xff]
          %390 = vst [vmem:[%s388] sm:$0xff] %v389
          %v391 = vld [vmem:[%s387 + $0x8] sm:$0xff]
          %392 = vst [vmem:[%s388 + $0x8] sm:$0xff] %v391
          %v393 = vld [vmem:[%s387 + $0x10] sm:$0xff]
          %394 = vst [vmem:[%s388 + $0x10] sm:$0xff] %v393
          %v395 = vld [vmem:[%s387 + $0x18] sm:$0xff]
          %396 = vst [vmem:[%s388 + $0x18] sm:$0xff] %v395
          %v397 = vld [vmem:[%s387 + $0x20] sm:$0xff]
          %398 = vst [vmem:[%s388 + $0x20] sm:$0xff] %v397
          %v399 = vld [vmem:[%s387 + $0x28] sm:$0xff]
          %400 = vst [vmem:[%s388 + $0x28] sm:$0xff] %v399
          %v401 = vld [vmem:[%s387 + $0x30] sm:$0xff]
          %402 = vst [vmem:[%s388 + $0x30] sm:$0xff] %v401
          %v403 = vld [vmem:[%s387 + $0x38] sm:$0xff]
          %404 = vst [vmem:[%s388 + $0x38] sm:$0xff] %v403
        $region130: #{forward.1} parent=124 // loop_footer
          %s386 = sadd.s32 1, %s382
        $region131: #{forward.1} parent=124 // loop_footer_branch
          %381 = sbr.rel target = $region127
        $region132: #{forward.1} parent=124 // loop_exit
          _
      $region125: #{forward.1} parent=109 // pred_fallthru
        _
      %p405 = pneg %p377
      // Predicated region
      $region133: #{forward.1} parent=109 // pred_check
        _
      $region134: #{forward.1} parent=109 // pred_check_branch
        %407 = sbr.rel (%p377) target = $region136
      $region135: #{forward.1} parent=109 // pred_region
        %s408 = sand.u32 64, 7
      $region136: #{forward.1} parent=109 // pred_fallthru
        _
    $region110: #{forward.1} parent=1 // pred_fallthru
      _
    // Predicated region
    $region111: #{forward.1} parent=1 // pred_check
      %p362 = pneg %p358
    $region112: #{forward.1} parent=1 // pred_check_branch
      %364 = sbr.rel (%p362) target = $region114
    $region113: #{forward.1} parent=1 // pred_region
      %s365 = sshllo.u32 0, 64
      loop: start=0, step=1, limit=1
      $region115: #{forward.1} parent=113 // loop_pre_header
        _
      $region116: #{forward.1} parent=113 // loop_header
        %s367 = sphi 0, %s371
        %p368 = scmp.ge.s32.totalorder %s367, 1
        %s372 = sphi %s19, %s19
        %s373 = sphi [#allocation10], [#allocation10]
      $region117: #{forward.1} parent=113 // loop_header_branch
        %370 = sbr.rel (%p368) target = $region121
      $region118: #{forward.1} parent=113 // loop_body
        %v374 = vld [vmem:[%s372] sm:%s365]
        %375 = vst [vmem:[%s373] sm:%s365] %v374
      $region119: #{forward.1} parent=113 // loop_footer
        %s371 = sadd.s32 1, %s367
      $region120: #{forward.1} parent=113 // loop_footer_branch
        %366 = sbr.rel target = $region116
      $region121: #{forward.1} parent=113 // loop_exit
        _
    $region114: #{forward.1} parent=1 // pred_fallthru
      _
    // Predicated region
    $region137: #{forward.1} parent=1 // pred_check
      _
    $region138: #{forward.1} parent=1 // pred_check_branch
      %411 = sbr.rel (0) target = $region140
    $region139: #{forward.1} parent=1 // pred_region
      %412 = vsyncadd %s356, 1024
    $region140: #{forward.1} parent=1 // pred_fallthru
      _
    %s413 = scalar_lea.sflag [#allocation12], 4
    %p415 = scmp.lt.u32.totalorder 64, 8
    %p416 = pneg %p415
    // Predicated region
    $region141: #{forward.1} parent=1 // pred_check
      _
    $region142: #{forward.1} parent=1 // pred_check_branch
      %418 = sbr.rel (%p415) target = $region144
    $region143: #{forward.1} parent=1 // pred_region
      %s433 = sand.u32 64, 7
      %p434 = scmp.eq.s32.totalorder %s433, 0
      // Predicated region
      $region156: #{forward.1} parent=143 // pred_check
        %p435 = pneg %p434
      $region157: #{forward.1} parent=143 // pred_check_branch
        %437 = sbr.rel (%p435) target = $region159
      $region158: #{forward.1} parent=143 // pred_region
        loop: start=0, step=1, limit=1
        $region160: #{forward.1} parent=158 // loop_pre_header
          _
        $region161: #{forward.1} parent=158 // loop_header
          %s439 = sphi 0, %s443
          %p440 = scmp.ge.s32.totalorder %s439, 1
          %s444 = sphi %s20, %s20
          %s445 = sphi [#allocation11], [#allocation11]
        $region162: #{forward.1} parent=158 // loop_header_branch
          %442 = sbr.rel (%p440) target = $region166
        $region163: #{forward.1} parent=158 // loop_body
          %v446 = vld [vmem:[%s444] sm:$0xff]
          %447 = vst [vmem:[%s445] sm:$0xff] %v446
          %v448 = vld [vmem:[%s444 + $0x8] sm:$0xff]
          %449 = vst [vmem:[%s445 + $0x8] sm:$0xff] %v448
          %v450 = vld [vmem:[%s444 + $0x10] sm:$0xff]
          %451 = vst [vmem:[%s445 + $0x10] sm:$0xff] %v450
          %v452 = vld [vmem:[%s444 + $0x18] sm:$0xff]
          %453 = vst [vmem:[%s445 + $0x18] sm:$0xff] %v452
          %v454 = vld [vmem:[%s444 + $0x20] sm:$0xff]
          %455 = vst [vmem:[%s445 + $0x20] sm:$0xff] %v454
          %v456 = vld [vmem:[%s444 + $0x28] sm:$0xff]
          %457 = vst [vmem:[%s445 + $0x28] sm:$0xff] %v456
          %v458 = vld [vmem:[%s444 + $0x30] sm:$0xff]
          %459 = vst [vmem:[%s445 + $0x30] sm:$0xff] %v458
          %v460 = vld [vmem:[%s444 + $0x38] sm:$0xff]
          %461 = vst [vmem:[%s445 + $0x38] sm:$0xff] %v460
        $region164: #{forward.1} parent=158 // loop_footer
          %s443 = sadd.s32 1, %s439
        $region165: #{forward.1} parent=158 // loop_footer_branch
          %438 = sbr.rel target = $region161
        $region166: #{forward.1} parent=158 // loop_exit
          _
      $region159: #{forward.1} parent=143 // pred_fallthru
        _
      %p462 = pneg %p434
      // Predicated region
      $region167: #{forward.1} parent=143 // pred_check
        _
      $region168: #{forward.1} parent=143 // pred_check_branch
        %464 = sbr.rel (%p434) target = $region170
      $region169: #{forward.1} parent=143 // pred_region
        %s465 = sand.u32 64, 7
      $region170: #{forward.1} parent=143 // pred_fallthru
        _
    $region144: #{forward.1} parent=1 // pred_fallthru
      _
    // Predicated region
    $region145: #{forward.1} parent=1 // pred_check
      %p419 = pneg %p415
    $region146: #{forward.1} parent=1 // pred_check_branch
      %421 = sbr.rel (%p419) target = $region148
    $region147: #{forward.1} parent=1 // pred_region
      %s422 = sshllo.u32 0, 64
      loop: start=0, step=1, limit=1
      $region149: #{forward.1} parent=147 // loop_pre_header
        _
      $region150: #{forward.1} parent=147 // loop_header
        %s424 = sphi 0, %s428
        %p425 = scmp.ge.s32.totalorder %s424, 1
        %s429 = sphi %s20, %s20
        %s430 = sphi [#allocation11], [#allocation11]
      $region151: #{forward.1} parent=147 // loop_header_branch
        %427 = sbr.rel (%p425) target = $region155
      $region152: #{forward.1} parent=147 // loop_body
        %v431 = vld [vmem:[%s429] sm:%s422]
        %432 = vst [vmem:[%s430] sm:%s422] %v431
      $region153: #{forward.1} parent=147 // loop_footer
        %s428 = sadd.s32 1, %s424
      $region154: #{forward.1} parent=147 // loop_footer_branch
        %423 = sbr.rel target = $region150
      $region155: #{forward.1} parent=147 // loop_exit
        _
    $region148: #{forward.1} parent=1 // pred_fallthru
      _
    // Predicated region
    $region171: #{forward.1} parent=1 // pred_check
      _
    $region172: #{forward.1} parent=1 // pred_check_branch
      %468 = sbr.rel (0) target = $region174
    $region173: #{forward.1} parent=1 // pred_region
      %469 = vsyncadd %s413, 1024
    $region174: #{forward.1} parent=1 // pred_fallthru
      _
    %v470 = vld [vmem:[%s0] sm:$0xf]
    %v471 = vld [vmem:[%s0 + $0x4] sm:$0xf]
    %v472 = vld [vmem:[%s0 + $0x8] sm:$0xf]
    %v473 = vld [vmem:[%s0 + $0xc] sm:$0xf]
    %v474 = vld [vmem:[%s0 + $0x10] sm:$0xf]
    %v475 = vld [vmem:[%s0 + $0x14] sm:$0xf]
    %v476 = vld [vmem:[%s0 + $0x18] sm:$0xf]
    %v477 = vld [vmem:[%s0 + $0x1c] sm:$0xf]
    %v478 = vld [vmem:[%s0 + $0x20] sm:$0x1]
    %v479 = vld [vmem:[%s3] sm:$0xff]
    %v480 = vld [vmem:[%s3 + $0x8] sm:$0xff]
    %v481 = vld [vmem:[%s3 + $0x10] sm:$0xff]
    %v482 = vld [vmem:[%s3 + $0x18] sm:$0xff]
    %v483 = vld [vmem:[%s3 + $0x20] sm:$0xff]
    %v484 = vld [vmem:[%s3 + $0x28] sm:$0xff]
    %v485 = vld [vmem:[%s3 + $0x30] sm:$0xff]
    %v486 = vld [vmem:[%s3 + $0x38] sm:$0xff]
    %v487 = vld [vmem:[%s3 + $0x40] sm:$0xff]
    %v488 = vld [vmem:[%s3 + $0x48] sm:$0xff]
    %v489 = vld [vmem:[%s3 + $0x50] sm:$0xff]
    %v490 = vld [vmem:[%s3 + $0x58] sm:$0xff]
    %v491 = vld [vmem:[%s3 + $0x60] sm:$0xff]
    %v492 = vld [vmem:[%s3 + $0x68] sm:$0xff]
    %v493 = vld [vmem:[%s3 + $0x70] sm:$0xff]
    %v494 = vld [vmem:[%s3 + $0x78] sm:$0xff]
    %v495 = vld [vmem:[%s3 + $0x80] sm:$0xff]
    %v496 = vld [vmem:[%s3 + $0x88] sm:$0xff]
    %v497 = vld [vmem:[%s3 + $0x90] sm:$0xff]
    %v498 = vld [vmem:[%s3 + $0x98] sm:$0xff]
    %v499 = vld [vmem:[%s3 + $0xa0] sm:$0xff]
    %v500 = vld [vmem:[%s3 + $0xa8] sm:$0xff]
    %v501 = vld [vmem:[%s3 + $0xb0] sm:$0xff]
    %v502 = vld [vmem:[%s3 + $0xb8] sm:$0xff]
    %v503 = vld [vmem:[%s3 + $0xc0] sm:$0xff]
    %v504 = vld [vmem:[%s3 + $0xc8] sm:$0xff]
    %v505 = vld [vmem:[%s3 + $0xd0] sm:$0xff]
    %v506 = vld [vmem:[%s3 + $0xd8] sm:$0xff]
    %v507 = vld [vmem:[%s3 + $0xe0] sm:$0xff]
    %v508 = vld [vmem:[%s3 + $0xe8] sm:$0xff]
    %v509 = vld [vmem:[%s3 + $0xf0] sm:$0xff]
    %v510 = vld [vmem:[%s3 + $0xf8] sm:$0xff]
    %v511 = vld [vmem:[%s3 + $0x100] sm:$0xff]
    %v512 = vld [vmem:[%s3 + $0x108] sm:$0xff]
    %v513 = vld [vmem:[%s3 + $0x110] sm:$0xff]
    %v514 = vld [vmem:[%s3 + $0x118] sm:$0xff]
    %v515 = vld [vmem:[%s3 + $0x120] sm:$0xff]
    %v516 = vld [vmem:[%s3 + $0x128] sm:$0xff]
    %v517 = vld [vmem:[%s3 + $0x130] sm:$0xff]
    %v518 = vld [vmem:[%s3 + $0x138] sm:$0xff]
    %v519 = vld [vmem:[%s3 + $0x140] sm:$0xff]
    %v520 = vld [vmem:[%s3 + $0x148] sm:$0xff]
    %v521 = vld [vmem:[%s3 + $0x150] sm:$0xff]
    %v522 = vld [vmem:[%s3 + $0x158] sm:$0xff]
    %v523 = vld [vmem:[%s3 + $0x160] sm:$0xff]
    %v524 = vld [vmem:[%s3 + $0x168] sm:$0xff]
    %v525 = vld [vmem:[%s3 + $0x170] sm:$0xff]
    %v526 = vld [vmem:[%s3 + $0x178] sm:$0xff]
    %v527 = vld [vmem:[%s3 + $0x180] sm:$0xff]
    %v528 = vld [vmem:[%s3 + $0x188] sm:$0xff]
    %v529 = vld [vmem:[%s3 + $0x190] sm:$0xff]
    %v530 = vld [vmem:[%s3 + $0x198] sm:$0xff]
    %v531 = vld [vmem:[%s3 + $0x1a0] sm:$0xff]
    %v532 = vld [vmem:[%s3 + $0x1a8] sm:$0xff]
    %v533 = vld [vmem:[%s3 + $0x1b0] sm:$0xff]
    %v534 = vld [vmem:[%s3 + $0x1b8] sm:$0xff]
    %v535 = vld [vmem:[%s3 + $0x1c0] sm:$0xff]
    %v536 = vld [vmem:[%s3 + $0x1c8] sm:$0xff]
    %v537 = vld [vmem:[%s3 + $0x1d0] sm:$0xff]
    %v538 = vld [vmem:[%s3 + $0x1d8] sm:$0xff]
    %v539 = vld [vmem:[%s3 + $0x1e0] sm:$0xff]
    %v540 = vld [vmem:[%s3 + $0x1e8] sm:$0xff]
    %v541 = vld [vmem:[%s3 + $0x1f0] sm:$0xff]
    %v542 = vld [vmem:[%s3 + $0x1f8] sm:$0xff]
    %v543 = vld [vmem:[%s3 + $0x200] sm:$0xff]
    %v544 = vld [vmem:[%s3 + $0x208] sm:$0xff]
    %v545 = vld [vmem:[%s3 + $0x210] sm:$0xff]
    %v546 = vld [vmem:[%s3 + $0x218] sm:$0xff]
    %v547 = vld [vmem:[%s3 + $0x220] sm:$0xff]
    %v548 = vld [vmem:[%s3 + $0x228] sm:$0xff]
    %v549 = vld [vmem:[%s3 + $0x230] sm:$0xff]
    %v550 = vld [vmem:[%s3 + $0x238] sm:$0xff]
    %v551 = vld [vmem:[%s3 + $0x240] sm:$0x33]
    %v552 = vld [vmem:[%s3 + $0x248] sm:$0x33]
    %v553 = vld [vmem:[%s3 + $0x250] sm:$0x33]
    %v554 = vld [vmem:[%s3 + $0x258] sm:$0x33]
    %v555 = vld [vmem:[%s3 + $0x260] sm:$0x33]
    %v556 = vld [vmem:[%s3 + $0x268] sm:$0x33]
    %v566 = vunpack.c.l.b16 %v470
    %v567 = vunpack.c.l.b16 %v471
    %v568 = vunpack.c.l.b16 %v472
    %v569 = vunpack.c.l.b16 %v473
    %v570 = vunpack.c.l.b16 %v474
    %v571 = vunpack.c.l.b16 %v475
    %v572 = vunpack.c.l.b16 %v476
    %v573 = vunpack.c.l.b16 %v477
    %v574 = vunpack.c.l.b16 %v478
    %v575 = vpack.c.b16 %v567, %v566
    %v576 = vpack.c.b16 %v569, %v568
    %v577 = vpack.c.b16 %v571, %v570
    %v578 = vpack.c.b16 %v573, %v572
    %v579 = vpack.c.b16 %v574, %v574
    %v658 = vunpack.c.l.b16 %v479
    %v659 = vunpack.c.h.b16 %v479
    %v660 = vunpack.c.l.b16 %v480
    %v661 = vunpack.c.h.b16 %v480
    %v662 = vunpack.c.l.b16 %v481
    %v663 = vunpack.c.h.b16 %v481
    %v664 = vunpack.c.l.b16 %v482
    %v665 = vunpack.c.h.b16 %v482
    %v666 = vunpack.c.l.b16 %v483
    %v667 = vunpack.c.h.b16 %v483
    %v668 = vunpack.c.l.b16 %v484
    %v669 = vunpack.c.h.b16 %v484
    %v670 = vunpack.c.l.b16 %v485
    %v671 = vunpack.c.h.b16 %v485
    %v672 = vunpack.c.l.b16 %v486
    %v673 = vunpack.c.h.b16 %v486
    %v674 = vunpack.c.l.b16 %v487
    %v675 = vunpack.c.h.b16 %v487
    %v676 = vunpack.c.l.b16 %v488
    %v677 = vunpack.c.h.b16 %v488
    %v678 = vunpack.c.l.b16 %v489
    %v679 = vunpack.c.h.b16 %v489
    %v680 = vunpack.c.l.b16 %v490
    %v681 = vunpack.c.h.b16 %v490
    %v682 = vunpack.c.l.b16 %v491
    %v683 = vunpack.c.h.b16 %v491
    %v684 = vunpack.c.l.b16 %v492
    %v685 = vunpack.c.h.b16 %v492
    %v686 = vunpack.c.l.b16 %v493
    %v687 = vunpack.c.h.b16 %v493
    %v688 = vunpack.c.l.b16 %v494
    %v689 = vunpack.c.h.b16 %v494
    %v690 = vunpack.c.l.b16 %v495
    %v691 = vunpack.c.h.b16 %v495
    %v692 = vunpack.c.l.b16 %v496
    %v693 = vunpack.c.h.b16 %v496
    %v694 = vunpack.c.l.b16 %v497
    %v695 = vunpack.c.h.b16 %v497
    %v696 = vunpack.c.l.b16 %v498
    %v697 = vunpack.c.h.b16 %v498
    %v698 = vunpack.c.l.b16 %v499
    %v699 = vunpack.c.h.b16 %v499
    %v700 = vunpack.c.l.b16 %v500
    %v701 = vunpack.c.h.b16 %v500
    %v702 = vunpack.c.l.b16 %v501
    %v703 = vunpack.c.h.b16 %v501
    %v704 = vunpack.c.l.b16 %v502
    %v705 = vunpack.c.h.b16 %v502
    %v706 = vunpack.c.l.b16 %v503
    %v707 = vunpack.c.h.b16 %v503
    %v708 = vunpack.c.l.b16 %v504
    %v709 = vunpack.c.h.b16 %v504
    %v710 = vunpack.c.l.b16 %v505
    %v711 = vunpack.c.h.b16 %v505
    %v712 = vunpack.c.l.b16 %v506
    %v713 = vunpack.c.h.b16 %v506
    %v714 = vunpack.c.l.b16 %v507
    %v715 = vunpack.c.h.b16 %v507
    %v716 = vunpack.c.l.b16 %v508
    %v717 = vunpack.c.h.b16 %v508
    %v718 = vunpack.c.l.b16 %v509
    %v719 = vunpack.c.h.b16 %v509
    %v720 = vunpack.c.l.b16 %v510
    %v721 = vunpack.c.h.b16 %v510
    %v722 = vunpack.c.l.b16 %v511
    %v723 = vunpack.c.h.b16 %v511
    %v724 = vunpack.c.l.b16 %v512
    %v725 = vunpack.c.h.b16 %v512
    %v726 = vunpack.c.l.b16 %v513
    %v727 = vunpack.c.h.b16 %v513
    %v728 = vunpack.c.l.b16 %v514
    %v729 = vunpack.c.h.b16 %v514
    %v730 = vunpack.c.l.b16 %v515
    %v731 = vunpack.c.h.b16 %v515
    %v732 = vunpack.c.l.b16 %v516
    %v733 = vunpack.c.h.b16 %v516
    %v734 = vunpack.c.l.b16 %v517
    %v735 = vunpack.c.h.b16 %v517
    %v736 = vunpack.c.l.b16 %v518
    %v737 = vunpack.c.h.b16 %v518
    %v738 = vunpack.c.l.b16 %v519
    %v739 = vunpack.c.h.b16 %v519
    %v740 = vunpack.c.l.b16 %v520
    %v741 = vunpack.c.h.b16 %v520
    %v742 = vunpack.c.l.b16 %v521
    %v743 = vunpack.c.h.b16 %v521
    %v744 = vunpack.c.l.b16 %v522
    %v745 = vunpack.c.h.b16 %v522
    %v746 = vunpack.c.l.b16 %v523
    %v747 = vunpack.c.h.b16 %v523
    %v748 = vunpack.c.l.b16 %v524
    %v749 = vunpack.c.h.b16 %v524
    %v750 = vunpack.c.l.b16 %v525
    %v751 = vunpack.c.h.b16 %v525
    %v752 = vunpack.c.l.b16 %v526
    %v753 = vunpack.c.h.b16 %v526
    %v754 = vunpack.c.l.b16 %v527
    %v755 = vunpack.c.h.b16 %v527
    %v756 = vunpack.c.l.b16 %v528
    %v757 = vunpack.c.h.b16 %v528
    %v758 = vunpack.c.l.b16 %v529
    %v759 = vunpack.c.h.b16 %v529
    %v760 = vunpack.c.l.b16 %v530
    %v761 = vunpack.c.h.b16 %v530
    %v762 = vunpack.c.l.b16 %v531
    %v763 = vunpack.c.h.b16 %v531
    %v764 = vunpack.c.l.b16 %v532
    %v765 = vunpack.c.h.b16 %v532
    %v766 = vunpack.c.l.b16 %v533
    %v767 = vunpack.c.h.b16 %v533
    %v768 = vunpack.c.l.b16 %v534
    %v769 = vunpack.c.h.b16 %v534
    %v770 = vunpack.c.l.b16 %v535
    %v771 = vunpack.c.h.b16 %v535
    %v772 = vunpack.c.l.b16 %v536
    %v773 = vunpack.c.h.b16 %v536
    %v774 = vunpack.c.l.b16 %v537
    %v775 = vunpack.c.h.b16 %v537
    %v776 = vunpack.c.l.b16 %v538
    %v777 = vunpack.c.h.b16 %v538
    %v778 = vunpack.c.l.b16 %v539
    %v779 = vunpack.c.h.b16 %v539
    %v780 = vunpack.c.l.b16 %v540
    %v781 = vunpack.c.h.b16 %v540
    %v782 = vunpack.c.l.b16 %v541
    %v783 = vunpack.c.h.b16 %v541
    %v784 = vunpack.c.l.b16 %v542
    %v785 = vunpack.c.h.b16 %v542
    %v786 = vunpack.c.l.b16 %v543
    %v787 = vunpack.c.h.b16 %v543
    %v788 = vunpack.c.l.b16 %v544
    %v789 = vunpack.c.h.b16 %v544
    %v790 = vunpack.c.l.b16 %v545
    %v791 = vunpack.c.h.b16 %v545
    %v792 = vunpack.c.l.b16 %v546
    %v793 = vunpack.c.h.b16 %v546
    %v794 = vunpack.c.l.b16 %v547
    %v795 = vunpack.c.h.b16 %v547
    %v796 = vunpack.c.l.b16 %v548
    %v797 = vunpack.c.h.b16 %v548
    %v798 = vunpack.c.l.b16 %v549
    %v799 = vunpack.c.h.b16 %v549
    %v800 = vunpack.c.l.b16 %v550
    %v801 = vunpack.c.h.b16 %v550
    %v802 = vunpack.c.l.b16 %v551
    %v803 = vunpack.c.h.b16 %v551
    %v804 = vunpack.c.l.b16 %v552
    %v805 = vunpack.c.h.b16 %v552
    %v806 = vunpack.c.l.b16 %v553
    %v807 = vunpack.c.h.b16 %v553
    %v808 = vunpack.c.l.b16 %v554
    %v809 = vunpack.c.h.b16 %v554
    %v810 = vunpack.c.l.b16 %v555
    %v811 = vunpack.c.h.b16 %v555
    %v812 = vunpack.c.l.b16 %v556
    %v813 = vunpack.c.h.b16 %v556
    %v814 = vpack.c.b16 %v670, %v658
    %v815 = vpack.c.b16 %v671, %v659
    %v816 = vpack.c.b16 %v672, %v660
    %v817 = vpack.c.b16 %v673, %v661
    %v818 = vpack.c.b16 %v674, %v662
    %v819 = vpack.c.b16 %v675, %v663
    %v820 = vpack.c.b16 %v676, %v664
    %v821 = vpack.c.b16 %v677, %v665
    %v822 = vpack.c.b16 %v678, %v666
    %v823 = vpack.c.b16 %v679, %v667
    %v824 = vpack.c.b16 %v680, %v668
    %v825 = vpack.c.b16 %v681, %v669
    %v826 = vpack.c.b16 %v694, %v682
    %v827 = vpack.c.b16 %v695, %v683
    %v828 = vpack.c.b16 %v696, %v684
    %v829 = vpack.c.b16 %v697, %v685
    %v830 = vpack.c.b16 %v698, %v686
    %v831 = vpack.c.b16 %v699, %v687
    %v832 = vpack.c.b16 %v700, %v688
    %v833 = vpack.c.b16 %v701, %v689
    %v834 = vpack.c.b16 %v702, %v690
    %v835 = vpack.c.b16 %v703, %v691
    %v836 = vpack.c.b16 %v704, %v692
    %v837 = vpack.c.b16 %v705, %v693
    %v838 = vpack.c.b16 %v718, %v706
    %v839 = vpack.c.b16 %v719, %v707
    %v840 = vpack.c.b16 %v720, %v708
    %v841 = vpack.c.b16 %v721, %v709
    %v842 = vpack.c.b16 %v722, %v710
    %v843 = vpack.c.b16 %v723, %v711
    %v844 = vpack.c.b16 %v724, %v712
    %v845 = vpack.c.b16 %v725, %v713
    %v846 = vpack.c.b16 %v726, %v714
    %v847 = vpack.c.b16 %v727, %v715
    %v848 = vpack.c.b16 %v728, %v716
    %v849 = vpack.c.b16 %v729, %v717
    %v850 = vpack.c.b16 %v742, %v730
    %v851 = vpack.c.b16 %v743, %v731
    %v852 = vpack.c.b16 %v744, %v732
    %v853 = vpack.c.b16 %v745, %v733
    %v854 = vpack.c.b16 %v746, %v734
    %v855 = vpack.c.b16 %v747, %v735
    %v856 = vpack.c.b16 %v748, %v736
    %v857 = vpack.c.b16 %v749, %v737
    %v858 = vpack.c.b16 %v750, %v738
    %v859 = vpack.c.b16 %v751, %v739
    %v860 = vpack.c.b16 %v752, %v740
    %v861 = vpack.c.b16 %v753, %v741
    %v862 = vpack.c.b16 %v766, %v754
    %v863 = vpack.c.b16 %v767, %v755
    %v864 = vpack.c.b16 %v768, %v756
    %v865 = vpack.c.b16 %v769, %v757
    %v866 = vpack.c.b16 %v770, %v758
    %v867 = vpack.c.b16 %v771, %v759
    %v868 = vpack.c.b16 %v772, %v760
    %v869 = vpack.c.b16 %v773, %v761
    %v870 = vpack.c.b16 %v774, %v762
    %v871 = vpack.c.b16 %v775, %v763
    %v872 = vpack.c.b16 %v776, %v764
    %v873 = vpack.c.b16 %v777, %v765
    %v874 = vpack.c.b16 %v790, %v778
    %v875 = vpack.c.b16 %v791, %v779
    %v876 = vpack.c.b16 %v792, %v780
    %v877 = vpack.c.b16 %v793, %v781
    %v878 = vpack.c.b16 %v794, %v782
    %v879 = vpack.c.b16 %v795, %v783
    %v880 = vpack.c.b16 %v796, %v784
    %v881 = vpack.c.b16 %v797, %v785
    %v882 = vpack.c.b16 %v798, %v786
    %v883 = vpack.c.b16 %v799, %v787
    %v884 = vpack.c.b16 %v800, %v788
    %v885 = vpack.c.b16 %v801, %v789
    %v886 = vpack.c.b16 %v802, %v802
    %v887 = vpack.c.b16 %v803, %v803
    %v888 = vpack.c.b16 %v804, %v804
    %v889 = vpack.c.b16 %v805, %v805
    %v890 = vpack.c.b16 %v806, %v806
    %v891 = vpack.c.b16 %v807, %v807
    %v892 = vpack.c.b16 %v808, %v808
    %v893 = vpack.c.b16 %v809, %v809
    %v894 = vpack.c.b16 %v810, %v810
    %v895 = vpack.c.b16 %v811, %v811
    %v896 = vpack.c.b16 %v812, %v812
    %v897 = vpack.c.b16 %v813, %v813
    %vm970 = vcmask 809984
    %v972 = vsel %vm970, %v575, 0
    %v975 = vsel %vm970, %v576, 0
    %v978 = vsel %vm970, %v577, 0
    %v981 = vsel %vm970, %v578, 0
    %v984 = vsel %vm970, %v579, 0
    %vm986 = vcmask 1040384
    %vm987 = vcmask 1041408
    %v988 = vsel %vm986, 4294967295, 65535
    %v989 = vsel %vm987, %v988, 0
    %v991 = vand.u32 %v886, %v989
    %v994 = vand.u32 %v887, %v989
    %v997 = vand.u32 %v888, %v989
    %v1000 = vand.u32 %v889, %v989
    %v1003 = vand.u32 %v890, %v989
    %v1006 = vand.u32 %v891, %v989
    %v1009 = vand.u32 %v892, %v989
    %v1012 = vand.u32 %v893, %v989
    %v1015 = vand.u32 %v894, %v989
    %v1018 = vand.u32 %v895, %v989
    %v1021 = vand.u32 %v896, %v989
    %v1024 = vand.u32 %v897, %v989
    %1026 = vmatprep.subr.bf16.mxu0 %v815
    %1027 = vmatpush1.bf16.msra.mxu0 %v814
    %1028 = vmatprep.subr.bf16.mxu0 %v827
    %1029 = vmatpush1.bf16.msra.mxu0 %v826
    %1030 = vmatprep.subr.bf16.mxu0 %v839
    %1031 = vmatpush1.bf16.msra.mxu0 %v838
    %1032 = vmatprep.subr.bf16.mxu0 %v851
    %1033 = vmatpush1.bf16.msra.mxu0 %v850
    %1034 = vmatprep.subr.bf16.mxu0 %v863
    %1035 = vmatpush1.bf16.msra.mxu0 %v862
    %1036 = vmatprep.subr.bf16.mxu0 %v875
    %1037 = vmatpush1.bf16.msra.mxu0 %v874
    %1038 = vmatprep.subr.bf16.mxu0 %v994
    %1039 = vmatpush1.bf16.msra.mxu0 %v991
    %1040 = vmatprep.subr.bf16.mxu0 0
    %1041 = vmatpush1.bf16.msra.mxu0 0
    %1042 = vmatprep.subr.bf16.mxu0 0
    %1043 = vmatpush1.bf16.msra.mxu0 0
    %1044 = vmatprep.subr.bf16.mxu0 0
    %1045 = vmatpush1.bf16.msra.mxu0 0
    %1046 = vmatprep.subr.bf16.mxu0 0
    %1047 = vmatpush1.bf16.msra.mxu0 0
    %1048 = vmatprep.subr.bf16.mxu0 0
    %1049 = vmatpush1.bf16.msra.mxu0 0
    %1050 = vmatprep.subr.bf16.mxu0 0
    %1051 = vmatpush1.bf16.msra.mxu0 0
    %1052 = vmatprep.subr.bf16.mxu0 0
    %1053 = vmatpush1.bf16.msra.mxu0 0
    %1054 = vmatprep.subr.bf16.mxu0 0
    %1055 = vmatpush1.bf16.msra.mxu0 0
    %1056 = vmatprep.subr.bf16.mxu0 0
    %1057 = vmatpush1.bf16.msra.mxu0 0
    %1058 = vmatprep.mubr.bf16.mxu0 0
    %1059 = vmatmul.mubr.bf16.gmra.mrb[0].mxu0 %v972
    %v1060 = vpop.f32.mrb[0].mxu0
    %v1061 = vadd.f32 0.0, %v1060
    %v1062 = vpop.f32.mrb[0].mxu0
    %v1063 = vadd.f32 0.0, %v1062
    %v1064 = vpop.f32.mrb[0].mxu0
    %v1065 = vadd.f32 0.0, %v1064
    %v1066 = vpop.f32.mrb[0].mxu0
    %v1067 = vadd.f32 0.0, %v1066
    %1068 = vmatprep.mubr.bf16.mxu0 0
    %1069 = vmatmul.mubr.bf16.gmra.mrb[0].mxu0 %v975
    %v1070 = vpop.f32.mrb[0].mxu0
    %v1071 = vadd.f32 0.0, %v1070
    %v1072 = vpop.f32.mrb[0].mxu0
    %v1073 = vadd.f32 0.0, %v1072
    %v1074 = vpop.f32.mrb[0].mxu0
    %v1075 = vadd.f32 0.0, %v1074
    %v1076 = vpop.f32.mrb[0].mxu0
    %v1077 = vadd.f32 0.0, %v1076
    %1078 = vmatprep.mubr.bf16.mxu0 0
    %1079 = vmatmul.mubr.bf16.gmra.mrb[0].mxu0 %v978
    %v1080 = vpop.f32.mrb[0].mxu0
    %v1081 = vadd.f32 0.0, %v1080
    %v1082 = vpop.f32.mrb[0].mxu0
    %v1083 = vadd.f32 0.0, %v1082
    %v1084 = vpop.f32.mrb[0].mxu0
    %v1085 = vadd.f32 0.0, %v1084
    %v1086 = vpop.f32.mrb[0].mxu0
    %v1087 = vadd.f32 0.0, %v1086
    %1088 = vmatprep.mubr.bf16.mxu0 0
    %1089 = vmatmul.mubr.bf16.gmra.mrb[0].mxu0 %v981
    %v1090 = vpop.f32.mrb[0].mxu0
    %v1091 = vadd.f32 0.0, %v1090
    %v1092 = vpop.f32.mrb[0].mxu0
    %v1093 = vadd.f32 0.0, %v1092
    %v1094 = vpop.f32.mrb[0].mxu0
    %v1095 = vadd.f32 0.0, %v1094
    %v1096 = vpop.f32.mrb[0].mxu0
    %v1097 = vadd.f32 0.0, %v1096
    %1098 = vmatprep.mubr.bf16.mxu0 0
    %1099 = vmatmul.mubr.bf16.gmra.mrb[0].mxu0 %v984
    %v1100 = vpop.f32.mrb[0].mxu0
    %v1101 = vadd.f32 0.0, %v1100
    %v1102 = vpop.f32.mrb[0].mxu0
    %v1103 = vadd.f32 0.0, %v1102
    %v1104 = vpop.f32.mrb[0].mxu0
    %v1105 = vpop.f32.mrb[0].mxu0
    %1106 = vdwg.mxu0
    %1107 = vmatprep.subr.bf16.mxu0 %v817
    %1108 = vmatpush1.bf16.msra.mxu0 %v816
    %1109 = vmatprep.subr.bf16.mxu0 %v829
    %1110 = vmatpush1.bf16.msra.mxu0 %v828
    %1111 = vmatprep.subr.bf16.mxu0 %v841
    %1112 = vmatpush1.bf16.msra.mxu0 %v840
    %1113 = vmatprep.subr.bf16.mxu0 %v853
    %1114 = vmatpush1.bf16.msra.mxu0 %v852
    %1115 = vmatprep.subr.bf16.mxu0 %v865
    %1116 = vmatpush1.bf16.msra.mxu0 %v864
    %1117 = vmatprep.subr.bf16.mxu0 %v877
    %1118 = vmatpush1.bf16.msra.mxu0 %v876
    %1119 = vmatprep.subr.bf16.mxu0 %v1000
    %1120 = vmatpush1.bf16.msra.mxu0 %v997
    %1121 = vmatprep.subr.bf16.mxu0 0
    %1122 = vmatpush1.bf16.msra.mxu0 0
    %1123 = vmatprep.subr.bf16.mxu0 0
    %1124 = vmatpush1.bf16.msra.mxu0 0
    %1125 = vmatprep.subr.bf16.mxu0 0
    %1126 = vmatpush1.bf16.msra.mxu0 0
    %1127 = vmatprep.subr.bf16.mxu0 0
    %1128 = vmatpush1.bf16.msra.mxu0 0
    %1129 = vmatprep.subr.bf16.mxu0 0
    %1130 = vmatpush1.bf16.msra.mxu0 0
    %1131 = vmatprep.subr.bf16.mxu0 0
    %1132 = vmatpush1.bf16.msra.mxu0 0
    %1133 = vmatprep.subr.bf16.mxu0 0
    %1134 = vmatpush1.bf16.msra.mxu0 0
    %1135 = vmatprep.subr.bf16.mxu0 0
    %1136 = vmatpush1.bf16.msra.mxu0 0
    %1137 = vmatprep.subr.bf16.mxu0 0
    %1138 = vmatpush1.bf16.msra.mxu0 0
    %1139 = vmatprep.mubr.bf16.mxu0 0
    %1140 = vmatmul.mubr.bf16.gmra.mrb[0].mxu0 %v972
    %v1141 = vpop.f32.mrb[0].mxu0
    %v1142 = vadd.f32 0.0, %v1141
    %v1143 = vpop.f32.mrb[0].mxu0
    %v1144 = vadd.f32 0.0, %v1143
    %v1145 = vpop.f32.mrb[0].mxu0
    %v1146 = vadd.f32 0.0, %v1145
    %v1147 = vpop.f32.mrb[0].mxu0
    %v1148 = vadd.f32 0.0, %v1147
    %1149 = vmatprep.mubr.bf16.mxu0 0
    %1150 = vmatmul.mubr.bf16.gmra.mrb[0].mxu0 %v975
    %v1151 = vpop.f32.mrb[0].mxu0
    %v1152 = vadd.f32 0.0, %v1151
    %v1153 = vpop.f32.mrb[0].mxu0
    %v1154 = vadd.f32 0.0, %v1153
    %v1155 = vpop.f32.mrb[0].mxu0
    %v1156 = vadd.f32 0.0, %v1155
    %v1157 = vpop.f32.mrb[0].mxu0
    %v1158 = vadd.f32 0.0, %v1157
    %1159 = vmatprep.mubr.bf16.mxu0 0
    %1160 = vmatmul.mubr.bf16.gmra.mrb[0].mxu0 %v978
    %v1161 = vpop.f32.mrb[0].mxu0
    %v1162 = vadd.f32 0.0, %v1161
    %v1163 = vpop.f32.mrb[0].mxu0
    %v1164 = vadd.f32 0.0, %v1163
    %v1165 = vpop.f32.mrb[0].mxu0
    %v1166 = vadd.f32 0.0, %v1165
    %v1167 = vpop.f32.mrb[0].mxu0
    %v1168 = vadd.f32 0.0, %v1167
    %1169 = vmatprep.mubr.bf16.mxu0 0
    %1170 = vmatmul.mubr.bf16.gmra.mrb[0].mxu0 %v981
    %v1171 = vpop.f32.mrb[0].mxu0
    %v1172 = vadd.f32 0.0, %v1171
    %v1173 = vpop.f32.mrb[0].mxu0
    %v1174 = vadd.f32 0.0, %v1173
    %v1175 = vpop.f32.mrb[0].mxu0
    %v1176 = vadd.f32 0.0, %v1175
    %v1177 = vpop.f32.mrb[0].mxu0
    %v1178 = vadd.f32 0.0, %v1177
    %1179 = vmatprep.mubr.bf16.mxu0 0
    %1180 = vmatmul.mubr.bf16.gmra.mrb[0].mxu0 %v984
    %v1181 = vpop.f32.mrb[0].mxu0
    %v1182 = vadd.f32 0.0, %v1181
    %v1183 = vpop.f32.mrb[0].mxu0
    %v1184 = vadd.f32 0.0, %v1183
    %v1185 = vpop.f32.mrb[0].mxu0
    %v1186 = vpop.f32.mrb[0].mxu0
    %1187 = vdwg.mxu0
    %1188 = vmatprep.subr.bf16.mxu0 %v819
    %1189 = vmatpush1.bf16.msra.mxu0 %v818
    %1190 = vmatprep.subr.bf16.mxu0 %v831
    %1191 = vmatpush1.bf16.msra.mxu0 %v830
    %1192 = vmatprep.subr.bf16.mxu0 %v843
    %1193 = vmatpush1.bf16.msra.mxu0 %v842
    %1194 = vmatprep.subr.bf16.mxu0 %v855
    %1195 = vmatpush1.bf16.msra.mxu0 %v854
    %1196 = vmatprep.subr.bf16.mxu0 %v867
    %1197 = vmatpush1.bf16.msra.mxu0 %v866
    %1198 = vmatprep.subr.bf16.mxu0 %v879
    %1199 = vmatpush1.bf16.msra.mxu0 %v878
    %1200 = vmatprep.subr.bf16.mxu0 %v1006
    %1201 = vmatpush1.bf16.msra.mxu0 %v1003
    %1202 = vmatprep.subr.bf16.mxu0 0
    %1203 = vmatpush1.bf16.msra.mxu0 0
    %1204 = vmatprep.subr.bf16.mxu0 0
    %1205 = vmatpush1.bf16.msra.mxu0 0
    %1206 = vmatprep.subr.bf16.mxu0 0
    %1207 = vmatpush1.bf16.msra.mxu0 0
    %1208 = vmatprep.subr.bf16.mxu0 0
    %1209 = vmatpush1.bf16.msra.mxu0 0
    %1210 = vmatprep.subr.bf16.mxu0 0
    %1211 = vmatpush1.bf16.msra.mxu0 0
    %1212 = vmatprep.subr.bf16.mxu0 0
    %1213 = vmatpush1.bf16.msra.mxu0 0
    %1214 = vmatprep.subr.bf16.mxu0 0
    %1215 = vmatpush1.bf16.msra.mxu0 0
    %1216 = vmatprep.subr.bf16.mxu0 0
    %1217 = vmatpush1.bf16.msra.mxu0 0
    %1218 = vmatprep.subr.bf16.mxu0 0
    %1219 = vmatpush1.bf16.msra.mxu0 0
    %1220 = vmatprep.mubr.bf16.mxu0 0
    %1221 = vmatmul.mubr.bf16.gmra.mrb[0].mxu0 %v972
    %v1222 = vpop.f32.mrb[0].mxu0
    %v1223 = vadd.f32 0.0, %v1222
    %v1224 = vpop.f32.mrb[0].mxu0
    %v1225 = vadd.f32 0.0, %v1224
    %v1226 = vpop.f32.mrb[0].mxu0
    %v1227 = vadd.f32 0.0, %v1226
    %v1228 = vpop.f32.mrb[0].mxu0
    %v1229 = vadd.f32 0.0, %v1228
    %1230 = vmatprep.mubr.bf16.mxu0 0
    %1231 = vmatmul.mubr.bf16.gmra.mrb[0].mxu0 %v975
    %v1232 = vpop.f32.mrb[0].mxu0
    %v1233 = vadd.f32 0.0, %v1232
    %v1234 = vpop.f32.mrb[0].mxu0
    %v1235 = vadd.f32 0.0, %v1234
    %v1236 = vpop.f32.mrb[0].mxu0
    %v1237 = vadd.f32 0.0, %v1236
    %v1238 = vpop.f32.mrb[0].mxu0
    %v1239 = vadd.f32 0.0, %v1238
    %1240 = vmatprep.mubr.bf16.mxu0 0
    %1241 = vmatmul.mubr.bf16.gmra.mrb[0].mxu0 %v978
    %v1242 = vpop.f32.mrb[0].mxu0
    %v1243 = vadd.f32 0.0, %v1242
    %v1244 = vpop.f32.mrb[0].mxu0
    %v1245 = vadd.f32 0.0, %v1244
    %v1246 = vpop.f32.mrb[0].mxu0
    %v1247 = vadd.f32 0.0, %v1246
    %v1248 = vpop.f32.mrb[0].mxu0
    %v1249 = vadd.f32 0.0, %v1248
    %1250 = vmatprep.mubr.bf16.mxu0 0
    %1251 = vmatmul.mubr.bf16.gmra.mrb[0].mxu0 %v981
    %v1252 = vpop.f32.mrb[0].mxu0
    %v1253 = vadd.f32 0.0, %v1252
    %v1254 = vpop.f32.mrb[0].mxu0
    %v1255 = vadd.f32 0.0, %v1254
    %v1256 = vpop.f32.mrb[0].mxu0
    %v1257 = vadd.f32 0.0, %v1256
    %v1258 = vpop.f32.mrb[0].mxu0
    %v1259 = vadd.f32 0.0, %v1258
    %1260 = vmatprep.mubr.bf16.mxu0 0
    %1261 = vmatmul.mubr.bf16.gmra.mrb[0].mxu0 %v984
    %v1262 = vpop.f32.mrb[0].mxu0
    %v1263 = vadd.f32 0.0, %v1262
    %v1264 = vpop.f32.mrb[0].mxu0
    %v1265 = vadd.f32 0.0, %v1264
    %v1266 = vpop.f32.mrb[0].mxu0
    %v1267 = vpop.f32.mrb[0].mxu0
    %1268 = vdwg.mxu0
    %1269 = vmatprep.subr.bf16.mxu0 %v821
    %1270 = vmatpush1.bf16.msra.mxu0 %v820
    %1271 = vmatprep.subr.bf16.mxu0 %v833
    %1272 = vmatpush1.bf16.msra.mxu0 %v832
    %1273 = vmatprep.subr.bf16.mxu0 %v845
    %1274 = vmatpush1.bf16.msra.mxu0 %v844
    %1275 = vmatprep.subr.bf16.mxu0 %v857
    %1276 = vmatpush1.bf16.msra.mxu0 %v856
    %1277 = vmatprep.subr.bf16.mxu0 %v869
    %1278 = vmatpush1.bf16.msra.mxu0 %v868
    %1279 = vmatprep.subr.bf16.mxu0 %v881
    %1280 = vmatpush1.bf16.msra.mxu0 %v880
    %1281 = vmatprep.subr.bf16.mxu0 %v1012
    %1282 = vmatpush1.bf16.msra.mxu0 %v1009
    %1283 = vmatprep.subr.bf16.mxu0 0
    %1284 = vmatpush1.bf16.msra.mxu0 0
    %1285 = vmatprep.subr.bf16.mxu0 0
    %1286 = vmatpush1.bf16.msra.mxu0 0
    %1287 = vmatprep.subr.bf16.mxu0 0
    %1288 = vmatpush1.bf16.msra.mxu0 0
    %1289 = vmatprep.subr.bf16.mxu0 0
    %1290 = vmatpush1.bf16.msra.mxu0 0
    %1291 = vmatprep.subr.bf16.mxu0 0
    %1292 = vmatpush1.bf16.msra.mxu0 0
    %1293 = vmatprep.subr.bf16.mxu0 0
    %1294 = vmatpush1.bf16.msra.mxu0 0
    %1295 = vmatprep.subr.bf16.mxu0 0
    %1296 = vmatpush1.bf16.msra.mxu0 0
    %1297 = vmatprep.subr.bf16.mxu0 0
    %1298 = vmatpush1.bf16.msra.mxu0 0
    %1299 = vmatprep.subr.bf16.mxu0 0
    %1300 = vmatpush1.bf16.msra.mxu0 0
    %1301 = vmatprep.mubr.bf16.mxu0 0
    %1302 = vmatmul.mubr.bf16.gmra.mrb[0].mxu0 %v972
    %v1303 = vpop.f32.mrb[0].mxu0
    %v1304 = vadd.f32 0.0, %v1303
    %v1305 = vpop.f32.mrb[0].mxu0
    %v1306 = vadd.f32 0.0, %v1305
    %v1307 = vpop.f32.mrb[0].mxu0
    %v1308 = vadd.f32 0.0, %v1307
    %v1309 = vpop.f32.mrb[0].mxu0
    %v1310 = vadd.f32 0.0, %v1309
    %1311 = vmatprep.mubr.bf16.mxu0 0
    %1312 = vmatmul.mubr.bf16.gmra.mrb[0].mxu0 %v975
    %v1313 = vpop.f32.mrb[0].mxu0
    %v1314 = vadd.f32 0.0, %v1313
    %v1315 = vpop.f32.mrb[0].mxu0
    %v1316 = vadd.f32 0.0, %v1315
    %v1317 = vpop.f32.mrb[0].mxu0
    %v1318 = vadd.f32 0.0, %v1317
    %v1319 = vpop.f32.mrb[0].mxu0
    %v1320 = vadd.f32 0.0, %v1319
    %1321 = vmatprep.mubr.bf16.mxu0 0
    %1322 = vmatmul.mubr.bf16.gmra.mrb[0].mxu0 %v978
    %v1323 = vpop.f32.mrb[0].mxu0
    %v1324 = vadd.f32 0.0, %v1323
    %v1325 = vpop.f32.mrb[0].mxu0
    %v1326 = vadd.f32 0.0, %v1325
    %v1327 = vpop.f32.mrb[0].mxu0
    %v1328 = vadd.f32 0.0, %v1327
    %v1329 = vpop.f32.mrb[0].mxu0
    %v1330 = vadd.f32 0.0, %v1329
    %1331 = vmatprep.mubr.bf16.mxu0 0
    %1332 = vmatmul.mubr.bf16.gmra.mrb[0].mxu0 %v981
    %v1333 = vpop.f32.mrb[0].mxu0
    %v1334 = vadd.f32 0.0, %v1333
    %v1335 = vpop.f32.mrb[0].mxu0
    %v1336 = vadd.f32 0.0, %v1335
    %v1337 = vpop.f32.mrb[0].mxu0
    %v1338 = vadd.f32 0.0, %v1337
    %v1339 = vpop.f32.mrb[0].mxu0
    %v1340 = vadd.f32 0.0, %v1339
    %1341 = vmatprep.mubr.bf16.mxu0 0
    %1342 = vmatmul.mubr.bf16.gmra.mrb[0].mxu0 %v984
    %v1343 = vpop.f32.mrb[0].mxu0
    %v1344 = vadd.f32 0.0, %v1343
    %v1345 = vpop.f32.mrb[0].mxu0
    %v1346 = vadd.f32 0.0, %v1345
    %v1347 = vpop.f32.mrb[0].mxu0
    %v1348 = vpop.f32.mrb[0].mxu0
    %1349 = vdwg.mxu0
    %1350 = vmatprep.subr.bf16.mxu0 %v823
    %1351 = vmatpush1.bf16.msra.mxu0 %v822
    %1352 = vmatprep.subr.bf16.mxu0 %v835
    %1353 = vmatpush1.bf16.msra.mxu0 %v834
    %1354 = vmatprep.subr.bf16.mxu0 %v847
    %1355 = vmatpush1.bf16.msra.mxu0 %v846
    %1356 = vmatprep.subr.bf16.mxu0 %v859
    %1357 = vmatpush1.bf16.msra.mxu0 %v858
    %1358 = vmatprep.subr.bf16.mxu0 %v871
    %1359 = vmatpush1.bf16.msra.mxu0 %v870
    %1360 = vmatprep.subr.bf16.mxu0 %v883
    %1361 = vmatpush1.bf16.msra.mxu0 %v882
    %1362 = vmatprep.subr.bf16.mxu0 %v1018
    %1363 = vmatpush1.bf16.msra.mxu0 %v1015
    %1364 = vmatprep.subr.bf16.mxu0 0
    %1365 = vmatpush1.bf16.msra.mxu0 0
    %1366 = vmatprep.subr.bf16.mxu0 0
    %1367 = vmatpush1.bf16.msra.mxu0 0
    %1368 = vmatprep.subr.bf16.mxu0 0
    %1369 = vmatpush1.bf16.msra.mxu0 0
    %1370 = vmatprep.subr.bf16.mxu0 0
    %1371 = vmatpush1.bf16.msra.mxu0 0
    %1372 = vmatprep.subr.bf16.mxu0 0
    %1373 = vmatpush1.bf16.msra.mxu0 0
    %1374 = vmatprep.subr.bf16.mxu0 0
    %1375 = vmatpush1.bf16.msra.mxu0 0
    %1376 = vmatprep.subr.bf16.mxu0 0
    %1377 = vmatpush1.bf16.msra.mxu0 0
    %1378 = vmatprep.subr.bf16.mxu0 0
    %1379 = vmatpush1.bf16.msra.mxu0 0
    %1380 = vmatprep.subr.bf16.mxu0 0
    %1381 = vmatpush1.bf16.msra.mxu0 0
    %1382 = vmatprep.mubr.bf16.mxu0 0
    %1383 = vmatmul.mubr.bf16.gmra.mrb[0].mxu0 %v972
    %v1384 = vpop.f32.mrb[0].mxu0
    %v1385 = vadd.f32 0.0, %v1384
    %v1386 = vpop.f32.mrb[0].mxu0
    %v1387 = vadd.f32 0.0, %v1386
    %v1388 = vpop.f32.mrb[0].mxu0
    %v1389 = vadd.f32 0.0, %v1388
    %v1390 = vpop.f32.mrb[0].mxu0
    %v1391 = vadd.f32 0.0, %v1390
    %1392 = vmatprep.mubr.bf16.mxu0 0
    %1393 = vmatmul.mubr.bf16.gmra.mrb[0].mxu0 %v975
    %v1394 = vpop.f32.mrb[0].mxu0
    %v1395 = vadd.f32 0.0, %v1394
    %v1396 = vpop.f32.mrb[0].mxu0
    %v1397 = vadd.f32 0.0, %v1396
    %v1398 = vpop.f32.mrb[0].mxu0
    %v1399 = vadd.f32 0.0, %v1398
    %v1400 = vpop.f32.mrb[0].mxu0
    %v1401 = vadd.f32 0.0, %v1400
    %1402 = vmatprep.mubr.bf16.mxu0 0
    %1403 = vmatmul.mubr.bf16.gmra.mrb[0].mxu0 %v978
    %v1404 = vpop.f32.mrb[0].mxu0
    %v1405 = vadd.f32 0.0, %v1404
    %v1406 = vpop.f32.mrb[0].mxu0
    %v1407 = vadd.f32 0.0, %v1406
    %v1408 = vpop.f32.mrb[0].mxu0
    %v1409 = vadd.f32 0.0, %v1408
    %v1410 = vpop.f32.mrb[0].mxu0
    %v1411 = vadd.f32 0.0, %v1410
    %1412 = vmatprep.mubr.bf16.mxu0 0
    %1413 = vmatmul.mubr.bf16.gmra.mrb[0].mxu0 %v981
    %v1414 = vpop.f32.mrb[0].mxu0
    %v1415 = vadd.f32 0.0, %v1414
    %v1416 = vpop.f32.mrb[0].mxu0
    %v1417 = vadd.f32 0.0, %v1416
    %v1418 = vpop.f32.mrb[0].mxu0
    %v1419 = vadd.f32 0.0, %v1418
    %v1420 = vpop.f32.mrb[0].mxu0
    %v1421 = vadd.f32 0.0, %v1420
    %1422 = vmatprep.mubr.bf16.mxu0 0
    %1423 = vmatmul.mubr.bf16.gmra.mrb[0].mxu0 %v984
    %v1424 = vpop.f32.mrb[0].mxu0
    %v1425 = vadd.f32 0.0, %v1424
    %v1426 = vpop.f32.mrb[0].mxu0
    %v1427 = vadd.f32 0.0, %v1426
    %v1428 = vpop.f32.mrb[0].mxu0
    %v1429 = vpop.f32.mrb[0].mxu0
    %1430 = vdwg.mxu0
    %1431 = vmatprep.subr.bf16.mxu0 %v825
    %1432 = vmatpush1.bf16.msra.mxu0 %v824
    %1433 = vmatprep.subr.bf16.mxu0 %v837
    %1434 = vmatpush1.bf16.msra.mxu0 %v836
    %1435 = vmatprep.subr.bf16.mxu0 %v849
    %1436 = vmatpush1.bf16.msra.mxu0 %v848
    %1437 = vmatprep.subr.bf16.mxu0 %v861
    %1438 = vmatpush1.bf16.msra.mxu0 %v860
    %1439 = vmatprep.subr.bf16.mxu0 %v873
    %1440 = vmatpush1.bf16.msra.mxu0 %v872
    %1441 = vmatprep.subr.bf16.mxu0 %v885
    %1442 = vmatpush1.bf16.msra.mxu0 %v884
    %1443 = vmatprep.subr.bf16.mxu0 %v1024
    %1444 = vmatpush1.bf16.msra.mxu0 %v1021
    %1445 = vmatprep.subr.bf16.mxu0 0
    %1446 = vmatpush1.bf16.msra.mxu0 0
    %1447 = vmatprep.subr.bf16.mxu0 0
    %1448 = vmatpush1.bf16.msra.mxu0 0
    %1449 = vmatprep.subr.bf16.mxu0 0
    %1450 = vmatpush1.bf16.msra.mxu0 0
    %1451 = vmatprep.subr.bf16.mxu0 0
    %1452 = vmatpush1.bf16.msra.mxu0 0
    %1453 = vmatprep.subr.bf16.mxu0 0
    %1454 = vmatpush1.bf16.msra.mxu0 0
    %1455 = vmatprep.subr.bf16.mxu0 0
    %1456 = vmatpush1.bf16.msra.mxu0 0
    %1457 = vmatprep.subr.bf16.mxu0 0
    %1458 = vmatpush1.bf16.msra.mxu0 0
    %1459 = vmatprep.subr.bf16.mxu0 0
    %1460 = vmatpush1.bf16.msra.mxu0 0
    %1461 = vmatprep.subr.bf16.mxu0 0
    %1462 = vmatpush1.bf16.msra.mxu0 0
    %1463 = vmatprep.mubr.bf16.mxu0 0
    %1464 = vmatmul.mubr.bf16.gmra.mrb[0].mxu0 %v972
    %v1465 = vpop.f32.mrb[0].mxu0
    %v1466 = vadd.f32 0.0, %v1465
    %v1467 = vpop.f32.mrb[0].mxu0
    %v1468 = vadd.f32 0.0, %v1467
    %v1469 = vpop.f32.mrb[0].mxu0
    %v1470 = vadd.f32 0.0, %v1469
    %v1471 = vpop.f32.mrb[0].mxu0
    %v1472 = vadd.f32 0.0, %v1471
    %1473 = vmatprep.mubr.bf16.mxu0 0
    %1474 = vmatmul.mubr.bf16.gmra.mrb[0].mxu0 %v975
    %v1475 = vpop.f32.mrb[0].mxu0
    %v1476 = vadd.f32 0.0, %v1475
    %v1477 = vpop.f32.mrb[0].mxu0
    %v1478 = vadd.f32 0.0, %v1477
    %v1479 = vpop.f32.mrb[0].mxu0
    %v1480 = vadd.f32 0.0, %v1479
    %v1481 = vpop.f32.mrb[0].mxu0
    %v1482 = vadd.f32 0.0, %v1481
    %1483 = vmatprep.mubr.bf16.mxu0 0
    %1484 = vmatmul.mubr.bf16.gmra.mrb[0].mxu0 %v978
    %v1485 = vpop.f32.mrb[0].mxu0
    %v1486 = vadd.f32 0.0, %v1485
    %v1487 = vpop.f32.mrb[0].mxu0
    %v1488 = vadd.f32 0.0, %v1487
    %v1489 = vpop.f32.mrb[0].mxu0
    %v1490 = vadd.f32 0.0, %v1489
    %v1491 = vpop.f32.mrb[0].mxu0
    %v1492 = vadd.f32 0.0, %v1491
    %1493 = vmatprep.mubr.bf16.mxu0 0
    %1494 = vmatmul.mubr.bf16.gmra.mrb[0].mxu0 %v981
    %v1495 = vpop.f32.mrb[0].mxu0
    %v1496 = vadd.f32 0.0, %v1495
    %v1497 = vpop.f32.mrb[0].mxu0
    %v1498 = vadd.f32 0.0, %v1497
    %v1499 = vpop.f32.mrb[0].mxu0
    %v1500 = vadd.f32 0.0, %v1499
    %v1501 = vpop.f32.mrb[0].mxu0
    %v1502 = vadd.f32 0.0, %v1501
    %1503 = vmatprep.mubr.bf16.mxu0 0
    %1504 = vmatmul.mubr.bf16.gmra.mrb[0].mxu0 %v984
    %v1505 = vpop.f32.mrb[0].mxu0
    %v1506 = vadd.f32 0.0, %v1505
    %v1507 = vpop.f32.mrb[0].mxu0
    %v1508 = vadd.f32 0.0, %v1507
    %v1509 = vpop.f32.mrb[0].mxu0
    %v1510 = vpop.f32.mrb[0].mxu0
    %1511 = vdwg.mxu0
    %v1512 = vpack.c.bf16 %v1065, %v1061
    %v1513 = vpack.c.bf16 %v1067, %v1063
    %v1514 = vpack.c.bf16 %v1146, %v1142
    %v1515 = vpack.c.bf16 %v1148, %v1144
    %v1516 = vpack.c.bf16 %v1075, %v1071
    %v1517 = vpack.c.bf16 %v1077, %v1073
    %v1518 = vpack.c.bf16 %v1156, %v1152
    %v1519 = vpack.c.bf16 %v1158, %v1154
    %v1520 = vpack.c.bf16 %v1085, %v1081
    %v1521 = vpack.c.bf16 %v1087, %v1083
    %v1522 = vpack.c.bf16 %v1166, %v1162
    %v1523 = vpack.c.bf16 %v1168, %v1164
    %v1524 = vpack.c.bf16 %v1095, %v1091
    %v1525 = vpack.c.bf16 %v1097, %v1093
    %v1526 = vpack.c.bf16 %v1176, %v1172
    %v1527 = vpack.c.bf16 %v1178, %v1174
    %v1528 = vpack.c.bf16 %v1101, %v1101
    %v1529 = vpack.c.bf16 %v1103, %v1103
    %v1530 = vpack.c.bf16 %v1182, %v1182
    %v1531 = vpack.c.bf16 %v1184, %v1184
    %v1552 = vunpack.c.l.b16 %v1512
    %v1553 = vunpack.c.l.b16 %v1513
    %v1554 = vunpack.c.l.b16 %v1514
    %v1555 = vunpack.c.l.b16 %v1515
    %v1556 = vunpack.c.h.b16 %v1512
    %v1557 = vunpack.c.h.b16 %v1513
    %v1558 = vunpack.c.h.b16 %v1514
    %v1559 = vunpack.c.h.b16 %v1515
    %v1560 = vunpack.c.l.b16 %v1516
    %v1561 = vunpack.c.l.b16 %v1517
    %v1562 = vunpack.c.l.b16 %v1518
    %v1563 = vunpack.c.l.b16 %v1519
    %v1564 = vunpack.c.h.b16 %v1516
    %v1565 = vunpack.c.h.b16 %v1517
    %v1566 = vunpack.c.h.b16 %v1518
    %v1567 = vunpack.c.h.b16 %v1519
    %v1568 = vunpack.c.l.b16 %v1520
    %v1569 = vunpack.c.l.b16 %v1521
    %v1570 = vunpack.c.l.b16 %v1522
    %v1571 = vunpack.c.l.b16 %v1523
    %v1572 = vunpack.c.h.b16 %v1520
    %v1573 = vunpack.c.h.b16 %v1521
    %v1574 = vunpack.c.h.b16 %v1522
    %v1575 = vunpack.c.h.b16 %v1523
    %v1576 = vunpack.c.l.b16 %v1524
    %v1577 = vunpack.c.l.b16 %v1525
    %v1578 = vunpack.c.l.b16 %v1526
    %v1579 = vunpack.c.l.b16 %v1527
    %v1580 = vunpack.c.h.b16 %v1524
    %v1581 = vunpack.c.h.b16 %v1525
    %v1582 = vunpack.c.h.b16 %v1526
    %v1583 = vunpack.c.h.b16 %v1527
    %v1584 = vunpack.c.l.b16 %v1528
    %v1585 = vunpack.c.l.b16 %v1529
    %v1586 = vunpack.c.l.b16 %v1530
    %v1587 = vunpack.c.l.b16 %v1531
    %v1588 = vpack.c.b16 %v1553, %v1552
    %v1589 = vpack.c.b16 %v1555, %v1554
    %v1590 = vpack.c.b16 %v1557, %v1556
    %v1591 = vpack.c.b16 %v1559, %v1558
    %v1592 = vpack.c.b16 %v1561, %v1560
    %v1593 = vpack.c.b16 %v1563, %v1562
    %v1594 = vpack.c.b16 %v1565, %v1564
    %v1595 = vpack.c.b16 %v1567, %v1566
    %v1596 = vpack.c.b16 %v1569, %v1568
    %v1597 = vpack.c.b16 %v1571, %v1570
    %v1598 = vpack.c.b16 %v1573, %v1572
    %v1599 = vpack.c.b16 %v1575, %v1574
    %v1600 = vpack.c.b16 %v1577, %v1576
    %v1601 = vpack.c.b16 %v1579, %v1578
    %v1602 = vpack.c.b16 %v1581, %v1580
    %v1603 = vpack.c.b16 %v1583, %v1582
    %v1604 = vpack.c.b16 %v1585, %v1584
    %v1605 = vpack.c.b16 %v1587, %v1586
    %1624 = vst [vmem:[#allocation2] sm:$0xff] %v1588
    %1625 = vst [vmem:[#allocation2 + $0x8] sm:$0xff] %v1589
    %1626 = vst [vmem:[#allocation2 + $0x10] sm:$0xff] %v1590
    %1627 = vst [vmem:[#allocation2 + $0x18] sm:$0xff] %v1591
    %1628 = vst [vmem:[#allocation2 + $0x20] sm:$0xff] %v1592
    %1629 = vst [vmem:[#allocation2 + $0x28] sm:$0xff] %v1593
    %1630 = vst [vmem:[#allocation2 + $0x30] sm:$0xff] %v1594
    %1631 = vst [vmem:[#allocation2 + $0x38] sm:$0xff] %v1595
    %1632 = vst [vmem:[#allocation2 + $0x40] sm:$0xff] %v1596
    %1633 = vst [vmem:[#allocation2 + $0x48] sm:$0xff] %v1597
    %1634 = vst [vmem:[#allocation2 + $0x50] sm:$0xff] %v1598
    %1635 = vst [vmem:[#allocation2 + $0x58] sm:$0xff] %v1599
    %1636 = vst [vmem:[#allocation2 + $0x60] sm:$0xff] %v1600
    %1637 = vst [vmem:[#allocation2 + $0x68] sm:$0xff] %v1601
    %1638 = vst [vmem:[#allocation2 + $0x70] sm:$0xff] %v1602
    %1639 = vst [vmem:[#allocation2 + $0x78] sm:$0xff] %v1603
    %1640 = vst [vmem:[#allocation2 + $0x80] sm:$0x11] %v1604
    %1641 = vst [vmem:[#allocation2 + $0x88] sm:$0x11] %v1605
    %v1642 = vpack.c.bf16 %v1227, %v1223
    %v1643 = vpack.c.bf16 %v1229, %v1225
    %v1644 = vpack.c.bf16 %v1308, %v1304
    %v1645 = vpack.c.bf16 %v1310, %v1306
    %v1646 = vpack.c.bf16 %v1237, %v1233
    %v1647 = vpack.c.bf16 %v1239, %v1235
    %v1648 = vpack.c.bf16 %v1318, %v1314
    %v1649 = vpack.c.bf16 %v1320, %v1316
    %v1650 = vpack.c.bf16 %v1247, %v1243
    %v1651 = vpack.c.bf16 %v1249, %v1245
    %v1652 = vpack.c.bf16 %v1328, %v1324
    %v1653 = vpack.c.bf16 %v1330, %v1326
    %v1654 = vpack.c.bf16 %v1257, %v1253
    %v1655 = vpack.c.bf16 %v1259, %v1255
    %v1656 = vpack.c.bf16 %v1338, %v1334
    %v1657 = vpack.c.bf16 %v1340, %v1336
    %v1658 = vpack.c.bf16 %v1263, %v1263
    %v1659 = vpack.c.bf16 %v1265, %v1265
    %v1660 = vpack.c.bf16 %v1344, %v1344
    %v1661 = vpack.c.bf16 %v1346, %v1346
    %v1682 = vunpack.c.l.b16 %v1642
    %v1683 = vunpack.c.l.b16 %v1643
    %v1684 = vunpack.c.l.b16 %v1644
    %v1685 = vunpack.c.l.b16 %v1645
    %v1686 = vunpack.c.h.b16 %v1642
    %v1687 = vunpack.c.h.b16 %v1643
    %v1688 = vunpack.c.h.b16 %v1644
    %v1689 = vunpack.c.h.b16 %v1645
    %v1690 = vunpack.c.l.b16 %v1646
    %v1691 = vunpack.c.l.b16 %v1647
    %v1692 = vunpack.c.l.b16 %v1648
    %v1693 = vunpack.c.l.b16 %v1649
    %v1694 = vunpack.c.h.b16 %v1646
    %v1695 = vunpack.c.h.b16 %v1647
    %v1696 = vunpack.c.h.b16 %v1648
    %v1697 = vunpack.c.h.b16 %v1649
    %v1698 = vunpack.c.l.b16 %v1650
    %v1699 = vunpack.c.l.b16 %v1651
    %v1700 = vunpack.c.l.b16 %v1652
    %v1701 = vunpack.c.l.b16 %v1653
    %v1702 = vunpack.c.h.b16 %v1650
    %v1703 = vunpack.c.h.b16 %v1651
    %v1704 = vunpack.c.h.b16 %v1652
    %v1705 = vunpack.c.h.b16 %v1653
    %v1706 = vunpack.c.l.b16 %v1654
    %v1707 = vunpack.c.l.b16 %v1655
    %v1708 = vunpack.c.l.b16 %v1656
    %v1709 = vunpack.c.l.b16 %v1657
    %v1710 = vunpack.c.h.b16 %v1654
    %v1711 = vunpack.c.h.b16 %v1655
    %v1712 = vunpack.c.h.b16 %v1656
    %v1713 = vunpack.c.h.b16 %v1657
    %v1714 = vunpack.c.l.b16 %v1658
    %v1715 = vunpack.c.l.b16 %v1659
    %v1716 = vunpack.c.l.b16 %v1660
    %v1717 = vunpack.c.l.b16 %v1661
    %v1718 = vpack.c.b16 %v1683, %v1682
    %v1719 = vpack.c.b16 %v1685, %v1684
    %v1720 = vpack.c.b16 %v1687, %v1686
    %v1721 = vpack.c.b16 %v1689, %v1688
    %v1722 = vpack.c.b16 %v1691, %v1690
    %v1723 = vpack.c.b16 %v1693, %v1692
    %v1724 = vpack.c.b16 %v1695, %v1694
    %v1725 = vpack.c.b16 %v1697, %v1696
    %v1726 = vpack.c.b16 %v1699, %v1698
    %v1727 = vpack.c.b16 %v1701, %v1700
    %v1728 = vpack.c.b16 %v1703, %v1702
    %v1729 = vpack.c.b16 %v1705, %v1704
    %v1730 = vpack.c.b16 %v1707, %v1706
    %v1731 = vpack.c.b16 %v1709, %v1708
    %v1732 = vpack.c.b16 %v1711, %v1710
    %v1733 = vpack.c.b16 %v1713, %v1712
    %v1734 = vpack.c.b16 %v1715, %v1714
    %v1735 = vpack.c.b16 %v1717, %v1716
    %vm1736 = vcmask 1040384
    %vm1737 = vcmask 1044484
    %vm1738 = vmor %vm1736, %vm1737
    %v1739 = vrot.slane %v1718, 7
    %v1740 = vrot.slane %v1719, 7
    %v1741 = vrot.slane %v1739, 4
    %v1742 = vrot.slane %v1720, 7
    %v1743 = vsel %vm1738, %v1741, %v1742
    %v1744 = vrot.slane %v1740, 4
    %v1745 = vrot.slane %v1721, 7
    %v1746 = vsel %vm1738, %v1744, %v1745
    %v1747 = vrot.slane %v1742, 4
    %v1748 = vrot.slane %v1722, 7
    %v1749 = vsel %vm1738, %v1747, %v1748
    %v1750 = vrot.slane %v1745, 4
    %v1751 = vrot.slane %v1723, 7
    %v1752 = vsel %vm1738, %v1750, %v1751
    %v1753 = vrot.slane %v1748, 4
    %v1754 = vrot.slane %v1724, 7
    %v1755 = vsel %vm1738, %v1753, %v1754
    %v1756 = vrot.slane %v1751, 4
    %v1757 = vrot.slane %v1725, 7
    %v1758 = vsel %vm1738, %v1756, %v1757
    %v1759 = vrot.slane %v1754, 4
    %v1760 = vrot.slane %v1726, 7
    %v1761 = vsel %vm1738, %v1759, %v1760
    %v1762 = vrot.slane %v1757, 4
    %v1763 = vrot.slane %v1727, 7
    %v1764 = vsel %vm1738, %v1762, %v1763
    %v1765 = vrot.slane %v1760, 4
    %v1766 = vrot.slane %v1728, 7
    %v1767 = vsel %vm1738, %v1765, %v1766
    %v1768 = vrot.slane %v1763, 4
    %v1769 = vrot.slane %v1729, 7
    %v1770 = vsel %vm1738, %v1768, %v1769
    %v1771 = vrot.slane %v1766, 4
    %v1772 = vrot.slane %v1730, 7
    %v1773 = vsel %vm1738, %v1771, %v1772
    %v1774 = vrot.slane %v1769, 4
    %v1775 = vrot.slane %v1731, 7
    %v1776 = vsel %vm1738, %v1774, %v1775
    %v1777 = vrot.slane %v1772, 4
    %v1778 = vrot.slane %v1732, 7
    %v1779 = vsel %vm1738, %v1777, %v1778
    %v1780 = vrot.slane %v1775, 4
    %v1781 = vrot.slane %v1733, 7
    %v1782 = vsel %vm1738, %v1780, %v1781
    %v1783 = vrot.slane %v1778, 4
    %v1784 = vrot.slane %v1734, 7
    %v1785 = vsel %vm1738, %v1783, %v1784
    %v1786 = vrot.slane %v1781, 4
    %v1787 = vrot.slane %v1735, 7
    %v1788 = vsel %vm1738, %v1786, %v1787
    %1807 = vst [vmem:[#allocation2 + $0x80] sm:$0xee] %v1739
    %1808 = vst [vmem:[#allocation2 + $0x88] sm:$0xee] %v1740
    %1809 = vst [vmem:[#allocation2 + $0x90] sm:$0xff] %v1743
    %1810 = vst [vmem:[#allocation2 + $0x98] sm:$0xff] %v1746
    %1811 = vst [vmem:[#allocation2 + $0xa0] sm:$0xff] %v1749
    %1812 = vst [vmem:[#allocation2 + $0xa8] sm:$0xff] %v1752
    %1813 = vst [vmem:[#allocation2 + $0xb0] sm:$0xff] %v1755
    %1814 = vst [vmem:[#allocation2 + $0xb8] sm:$0xff] %v1758
    %1815 = vst [vmem:[#allocation2 + $0xc0] sm:$0xff] %v1761
    %1816 = vst [vmem:[#allocation2 + $0xc8] sm:$0xff] %v1764
    %1817 = vst [vmem:[#allocation2 + $0xd0] sm:$0xff] %v1767
    %1818 = vst [vmem:[#allocation2 + $0xd8] sm:$0xff] %v1770
    %1819 = vst [vmem:[#allocation2 + $0xe0] sm:$0xff] %v1773
    %1820 = vst [vmem:[#allocation2 + $0xe8] sm:$0xff] %v1776
    %1821 = vst [vmem:[#allocation2 + $0xf0] sm:$0xff] %v1779
    %1822 = vst [vmem:[#allocation2 + $0xf8] sm:$0xff] %v1782
    %1823 = vst [vmem:[#allocation2 + $0x100] sm:$0x33] %v1785
    %1824 = vst [vmem:[#allocation2 + $0x108] sm:$0x33] %v1788
    %v1825 = vpack.c.bf16 %v1389, %v1385
    %v1826 = vpack.c.bf16 %v1391, %v1387
    %v1827 = vpack.c.bf16 %v1470, %v1466
    %v1828 = vpack.c.bf16 %v1472, %v1468
    %v1829 = vpack.c.bf16 %v1399, %v1395
    %v1830 = vpack.c.bf16 %v1401, %v1397
    %v1831 = vpack.c.bf16 %v1480, %v1476
    %v1832 = vpack.c.bf16 %v1482, %v1478
    %v1833 = vpack.c.bf16 %v1409, %v1405
    %v1834 = vpack.c.bf16 %v1411, %v1407
    %v1835 = vpack.c.bf16 %v1490, %v1486
    %v1836 = vpack.c.bf16 %v1492, %v1488
    %v1837 = vpack.c.bf16 %v1419, %v1415
    %v1838 = vpack.c.bf16 %v1421, %v1417
    %v1839 = vpack.c.bf16 %v1500, %v1496
    %v1840 = vpack.c.bf16 %v1502, %v1498
    %v1841 = vpack.c.bf16 %v1425, %v1425
    %v1842 = vpack.c.bf16 %v1427, %v1427
    %v1843 = vpack.c.bf16 %v1506, %v1506
    %v1844 = vpack.c.bf16 %v1508, %v1508
    %v1865 = vunpack.c.l.b16 %v1825
    %v1866 = vunpack.c.l.b16 %v1826
    %v1867 = vunpack.c.l.b16 %v1827
    %v1868 = vunpack.c.l.b16 %v1828
    %v1869 = vunpack.c.h.b16 %v1825
    %v1870 = vunpack.c.h.b16 %v1826
    %v1871 = vunpack.c.h.b16 %v1827
    %v1872 = vunpack.c.h.b16 %v1828
    %v1873 = vunpack.c.l.b16 %v1829
    %v1874 = vunpack.c.l.b16 %v1830
    %v1875 = vunpack.c.l.b16 %v1831
    %v1876 = vunpack.c.l.b16 %v1832
    %v1877 = vunpack.c.h.b16 %v1829
    %v1878 = vunpack.c.h.b16 %v1830
    %v1879 = vunpack.c.h.b16 %v1831
    %v1880 = vunpack.c.h.b16 %v1832
    %v1881 = vunpack.c.l.b16 %v1833
    %v1882 = vunpack.c.l.b16 %v1834
    %v1883 = vunpack.c.l.b16 %v1835
    %v1884 = vunpack.c.l.b16 %v1836
    %v1885 = vunpack.c.h.b16 %v1833
    %v1886 = vunpack.c.h.b16 %v1834
    %v1887 = vunpack.c.h.b16 %v1835
    %v1888 = vunpack.c.h.b16 %v1836
    %v1889 = vunpack.c.l.b16 %v1837
    %v1890 = vunpack.c.l.b16 %v1838
    %v1891 = vunpack.c.l.b16 %v1839
    %v1892 = vunpack.c.l.b16 %v1840
    %v1893 = vunpack.c.h.b16 %v1837
    %v1894 = vunpack.c.h.b16 %v1838
    %v1895 = vunpack.c.h.b16 %v1839
    %v1896 = vunpack.c.h.b16 %v1840
    %v1897 = vunpack.c.l.b16 %v1841
    %v1898 = vunpack.c.l.b16 %v1842
    %v1899 = vunpack.c.l.b16 %v1843
    %v1900 = vunpack.c.l.b16 %v1844
    %v1901 = vpack.c.b16 %v1866, %v1865
    %v1902 = vpack.c.b16 %v1868, %v1867
    %v1903 = vpack.c.b16 %v1870, %v1869
    %v1904 = vpack.c.b16 %v1872, %v1871
    %v1905 = vpack.c.b16 %v1874, %v1873
    %v1906 = vpack.c.b16 %v1876, %v1875
    %v1907 = vpack.c.b16 %v1878, %v1877
    %v1908 = vpack.c.b16 %v1880, %v1879
    %v1909 = vpack.c.b16 %v1882, %v1881
    %v1910 = vpack.c.b16 %v1884, %v1883
    %v1911 = vpack.c.b16 %v1886, %v1885
    %v1912 = vpack.c.b16 %v1888, %v1887
    %v1913 = vpack.c.b16 %v1890, %v1889
    %v1914 = vpack.c.b16 %v1892, %v1891
    %v1915 = vpack.c.b16 %v1894, %v1893
    %v1916 = vpack.c.b16 %v1896, %v1895
    %v1917 = vpack.c.b16 %v1898, %v1897
    %v1918 = vpack.c.b16 %v1900, %v1899
    %vm1919 = vcmask 1041408
    %vm1920 = vcmask 1045508
    %vm1921 = vmor %vm1919, %vm1920
    %v1922 = vrot.slane %v1901, 6
    %v1923 = vrot.slane %v1902, 6
    %v1924 = vrot.slane %v1922, 4
    %v1925 = vrot.slane %v1903, 6
    %v1926 = vsel %vm1921, %v1924, %v1925
    %v1927 = vrot.slane %v1923, 4
    %v1928 = vrot.slane %v1904, 6
    %v1929 = vsel %vm1921, %v1927, %v1928
    %v1930 = vrot.slane %v1925, 4
    %v1931 = vrot.slane %v1905, 6
    %v1932 = vsel %vm1921, %v1930, %v1931
    %v1933 = vrot.slane %v1928, 4
    %v1934 = vrot.slane %v1906, 6
    %v1935 = vsel %vm1921, %v1933, %v1934
    %v1936 = vrot.slane %v1931, 4
    %v1937 = vrot.slane %v1907, 6
    %v1938 = vsel %vm1921, %v1936, %v1937
    %v1939 = vrot.slane %v1934, 4
    %v1940 = vrot.slane %v1908, 6
    %v1941 = vsel %vm1921, %v1939, %v1940
    %v1942 = vrot.slane %v1937, 4
    %v1943 = vrot.slane %v1909, 6
    %v1944 = vsel %vm1921, %v1942, %v1943
    %v1945 = vrot.slane %v1940, 4
    %v1946 = vrot.slane %v1910, 6
    %v1947 = vsel %vm1921, %v1945, %v1946
    %v1948 = vrot.slane %v1943, 4
    %v1949 = vrot.slane %v1911, 6
    %v1950 = vsel %vm1921, %v1948, %v1949
    %v1951 = vrot.slane %v1946, 4
    %v1952 = vrot.slane %v1912, 6
    %v1953 = vsel %vm1921, %v1951, %v1952
    %v1954 = vrot.slane %v1949, 4
    %v1955 = vrot.slane %v1913, 6
    %v1956 = vsel %vm1921, %v1954, %v1955
    %v1957 = vrot.slane %v1952, 4
    %v1958 = vrot.slane %v1914, 6
    %v1959 = vsel %vm1921, %v1957, %v1958
    %v1960 = vrot.slane %v1955, 4
    %v1961 = vrot.slane %v1915, 6
    %v1962 = vsel %vm1921, %v1960, %v1961
    %v1963 = vrot.slane %v1958, 4
    %v1964 = vrot.slane %v1916, 6
    %v1965 = vsel %vm1921, %v1963, %v1964
    %v1966 = vrot.slane %v1961, 4
    %v1967 = vrot.slane %v1917, 6
    %v1968 = vsel %vm1921, %v1966, %v1967
    %v1969 = vrot.slane %v1964, 4
    %v1970 = vrot.slane %v1918, 6
    %v1971 = vsel %vm1921, %v1969, %v1970
    %1990 = vst [vmem:[#allocation2 + $0x100] sm:$0xcc] %v1922
    %1991 = vst [vmem:[#allocation2 + $0x108] sm:$0xcc] %v1923
    %1992 = vst [vmem:[#allocation2 + $0x110] sm:$0xff] %v1926
    %1993 = vst [vmem:[#allocation2 + $0x118] sm:$0xff] %v1929
    %1994 = vst [vmem:[#allocation2 + $0x120] sm:$0xff] %v1932
    %1995 = vst [vmem:[#allocation2 + $0x128] sm:$0xff] %v1935
    %1996 = vst [vmem:[#allocation2 + $0x130] sm:$0xff] %v1938
    %1997 = vst [vmem:[#allocation2 + $0x138] sm:$0xff] %v1941
    %1998 = vst [vmem:[#allocation2 + $0x140] sm:$0xff] %v1944
    %1999 = vst [vmem:[#allocation2 + $0x148] sm:$0xff] %v1947
    %2000 = vst [vmem:[#allocation2 + $0x150] sm:$0xff] %v1950
    %2001 = vst [vmem:[#allocation2 + $0x158] sm:$0xff] %v1953
    %2002 = vst [vmem:[#allocation2 + $0x160] sm:$0xff] %v1956
    %2003 = vst [vmem:[#allocation2 + $0x168] sm:$0xff] %v1959
    %2004 = vst [vmem:[#allocation2 + $0x170] sm:$0xff] %v1962
    %2005 = vst [vmem:[#allocation2 + $0x178] sm:$0xff] %v1965
    %2006 = vst [vmem:[#allocation2 + $0x180] sm:$0x77] %v1968
    %2007 = vst [vmem:[#allocation2 + $0x188] sm:$0x77] %v1971
    %v2008 = vld [vmem:[%s4] sm:$0xff]
    %v2009 = vld [vmem:[%s4 + $0x8] sm:$0xff]
    %v2010 = vld [vmem:[%s4 + $0x10] sm:$0xff]
    %v2011 = vld [vmem:[%s4 + $0x18] sm:$0xff]
    %v2012 = vld [vmem:[#allocation2] sm:$0xff]
    %v2013 = vld [vmem:[#allocation2 + $0x8] sm:$0xff]
    %v2014 = vld [vmem:[#allocation2 + $0x10] sm:$0xff]
    %v2015 = vld [vmem:[#allocation2 + $0x18] sm:$0xff]
    %v2016 = vld [vmem:[#allocation2 + $0x20] sm:$0xff]
    %v2017 = vld [vmem:[#allocation2 + $0x28] sm:$0xff]
    %v2018 = vld [vmem:[#allocation2 + $0x30] sm:$0xff]
    %v2019 = vld [vmem:[#allocation2 + $0x38] sm:$0xff]
    %v2020 = vld [vmem:[#allocation2 + $0x40] sm:$0xff]
    %v2021 = vld [vmem:[#allocation2 + $0x48] sm:$0xff]
    %v2022 = vld [vmem:[#allocation2 + $0x50] sm:$0xff]
    %v2023 = vld [vmem:[#allocation2 + $0x58] sm:$0xff]
    %v2024 = vld [vmem:[#allocation2 + $0x60] sm:$0xff]
    %v2025 = vld [vmem:[#allocation2 + $0x68] sm:$0xff]
    %v2026 = vld [vmem:[#allocation2 + $0x70] sm:$0xff]
    %v2027 = vld [vmem:[#allocation2 + $0x78] sm:$0xff]
    %v2028 = vld [vmem:[#allocation2 + $0x80] sm:$0xff]
    %v2029 = vld [vmem:[#allocation2 + $0x88] sm:$0xff]
    %v2030 = vld [vmem:[#allocation2 + $0x90] sm:$0xff]
    %v2031 = vld [vmem:[#allocation2 + $0x98] sm:$0xff]
    %v2032 = vld [vmem:[#allocation2 + $0xa0] sm:$0xff]
    %v2033 = vld [vmem:[#allocation2 + $0xa8] sm:$0xff]
    %v2034 = vld [vmem:[#allocation2 + $0xb0] sm:$0xff]
    %v2035 = vld [vmem:[#allocation2 + $0xb8] sm:$0xff]
    %v2036 = vld [vmem:[#allocation2 + $0xc0] sm:$0xff]
    %v2037 = vld [vmem:[#allocation2 + $0xc8] sm:$0xff]
    %v2038 = vld [vmem:[#allocation2 + $0xd0] sm:$0xff]
    %v2039 = vld [vmem:[#allocation2 + $0xd8] sm:$0xff]
    %v2040 = vld [vmem:[#allocation2 + $0xe0] sm:$0xff]
    %v2041 = vld [vmem:[#allocation2 + $0xe8] sm:$0xff]
    %v2042 = vld [vmem:[#allocation2 + $0xf0] sm:$0xff]
    %v2043 = vld [vmem:[#allocation2 + $0xf8] sm:$0xff]
    %v2044 = vld [vmem:[#allocation2 + $0x100] sm:$0xff]
    %v2045 = vld [vmem:[#allocation2 + $0x108] sm:$0xff]
    %v2046 = vld [vmem:[#allocation2 + $0x110] sm:$0xff]
    %v2047 = vld [vmem:[#allocation2 + $0x118] sm:$0xff]
    %v2048 = vld [vmem:[#allocation2 + $0x120] sm:$0xff]
    %v2049 = vld [vmem:[#allocation2 + $0x128] sm:$0xff]
    %v2050 = vld [vmem:[#allocation2 + $0x130] sm:$0xff]
    %v2051 = vld [vmem:[#allocation2 + $0x138] sm:$0xff]
    %v2052 = vld [vmem:[#allocation2 + $0x140] sm:$0xff]
    %v2053 = vld [vmem:[#allocation2 + $0x148] sm:$0xff]
    %v2054 = vld [vmem:[#allocation2 + $0x150] sm:$0xff]
    %v2055 = vld [vmem:[#allocation2 + $0x158] sm:$0xff]
    %v2056 = vld [vmem:[#allocation2 + $0x160] sm:$0xff]
    %v2057 = vld [vmem:[#allocation2 + $0x168] sm:$0xff]
    %v2058 = vld [vmem:[#allocation2 + $0x170] sm:$0xff]
    %v2059 = vld [vmem:[#allocation2 + $0x178] sm:$0xff]
    %v2060 = vld [vmem:[#allocation2 + $0x180] sm:$0x77]
    %v2061 = vld [vmem:[#allocation2 + $0x188] sm:$0x77]
    %v2062 = vld [vmem:[%s5] sm:$0xf]
    %v2064 = vlaneseq
    %v2065 = vshrl.u32 %v2064, 7
    %v2066 = vsub.s32 0, %v2065
    %v2067 = vrot.slane %v2062, %v2066
    %v2068 = vlaneseq
    %v2069 = vshrl.u32 %v2068, 7
    %v2070 = vsub.s32 1, %v2069
    %v2071 = vrot.slane %v2062, %v2070
    %v2072 = vlaneseq
    %v2073 = vshrl.u32 %v2072, 7
    %v2074 = vsub.s32 2, %v2073
    %v2075 = vrot.slane %v2062, %v2074
    %v2076 = vlaneseq
    %v2077 = vshrl.u32 %v2076, 7
    %v2078 = vsub.s32 3, %v2077
    %v2079 = vrot.slane %v2062, %v2078
    %v2088 = vunpack.c.l.b16 %v2008
    %v2089 = vunpack.c.h.b16 %v2008
    %v2090 = vunpack.c.l.b16 %v2009
    %v2091 = vunpack.c.h.b16 %v2009
    %v2092 = vunpack.c.l.b16 %v2010
    %v2093 = vunpack.c.h.b16 %v2010
    %v2094 = vunpack.c.l.b16 %v2011
    %v2095 = vunpack.c.h.b16 %v2011
    %v2096 = vpack.c.b16 %v2090, %v2088
    %v2097 = vpack.c.b16 %v2091, %v2089
    %v2098 = vpack.c.b16 %v2094, %v2092
    %v2099 = vpack.c.b16 %v2095, %v2093
    %v2152 = vunpack.c.l.b16 %v2012
    %v2153 = vunpack.c.h.b16 %v2012
    %v2154 = vunpack.c.l.b16 %v2013
    %v2155 = vunpack.c.h.b16 %v2013
    %v2156 = vunpack.c.l.b16 %v2014
    %v2157 = vunpack.c.h.b16 %v2014
    %v2158 = vunpack.c.l.b16 %v2015
    %v2159 = vunpack.c.h.b16 %v2015
    %v2160 = vunpack.c.l.b16 %v2016
    %v2161 = vunpack.c.h.b16 %v2016
    %v2162 = vunpack.c.l.b16 %v2017
    %v2163 = vunpack.c.h.b16 %v2017
    %v2164 = vunpack.c.l.b16 %v2018
    %v2165 = vunpack.c.h.b16 %v2018
    %v2166 = vunpack.c.l.b16 %v2019
    %v2167 = vunpack.c.h.b16 %v2019
    %v2168 = vunpack.c.l.b16 %v2020
    %v2169 = vunpack.c.h.b16 %v2020
    %v2170 = vunpack.c.l.b16 %v2021
    %v2171 = vunpack.c.h.b16 %v2021
    %v2172 = vunpack.c.l.b16 %v2022
    %v2173 = vunpack.c.h.b16 %v2022
    %v2174 = vunpack.c.l.b16 %v2023
    %v2175 = vunpack.c.h.b16 %v2023
    %v2176 = vunpack.c.l.b16 %v2024
    %v2177 = vunpack.c.h.b16 %v2024
    %v2178 = vunpack.c.l.b16 %v2025
    %v2179 = vunpack.c.h.b16 %v2025
    %v2180 = vunpack.c.l.b16 %v2026
    %v2181 = vunpack.c.h.b16 %v2026
    %v2182 = vunpack.c.l.b16 %v2027
    %v2183 = vunpack.c.h.b16 %v2027
    %v2184 = vunpack.c.l.b16 %v2028
    %v2185 = vunpack.c.h.b16 %v2028
    %v2186 = vunpack.c.l.b16 %v2029
    %v2187 = vunpack.c.h.b16 %v2029
    %v2188 = vunpack.c.l.b16 %v2030
    %v2189 = vunpack.c.h.b16 %v2030
    %v2190 = vunpack.c.l.b16 %v2031
    %v2191 = vunpack.c.h.b16 %v2031
    %v2192 = vunpack.c.l.b16 %v2032
    %v2193 = vunpack.c.h.b16 %v2032
    %v2194 = vunpack.c.l.b16 %v2033
    %v2195 = vunpack.c.h.b16 %v2033
    %v2196 = vunpack.c.l.b16 %v2034
    %v2197 = vunpack.c.h.b16 %v2034
    %v2198 = vunpack.c.l.b16 %v2035
    %v2199 = vunpack.c.h.b16 %v2035
    %v2200 = vunpack.c.l.b16 %v2036
    %v2201 = vunpack.c.h.b16 %v2036
    %v2202 = vunpack.c.l.b16 %v2037
    %v2203 = vunpack.c.h.b16 %v2037
    %v2204 = vunpack.c.l.b16 %v2038
    %v2205 = vunpack.c.h.b16 %v2038
    %v2206 = vunpack.c.l.b16 %v2039
    %v2207 = vunpack.c.h.b16 %v2039
    %v2208 = vunpack.c.l.b16 %v2040
    %v2209 = vunpack.c.h.b16 %v2040
    %v2210 = vunpack.c.l.b16 %v2041
    %v2211 = vunpack.c.h.b16 %v2041
    %v2212 = vunpack.c.l.b16 %v2042
    %v2213 = vunpack.c.h.b16 %v2042
    %v2214 = vunpack.c.l.b16 %v2043
    %v2215 = vunpack.c.h.b16 %v2043
    %v2216 = vunpack.c.l.b16 %v2044
    %v2217 = vunpack.c.h.b16 %v2044
    %v2218 = vunpack.c.l.b16 %v2045
    %v2219 = vunpack.c.h.b16 %v2045
    %v2220 = vunpack.c.l.b16 %v2046
    %v2221 = vunpack.c.h.b16 %v2046
    %v2222 = vunpack.c.l.b16 %v2047
    %v2223 = vunpack.c.h.b16 %v2047
    %v2224 = vunpack.c.l.b16 %v2048
    %v2225 = vunpack.c.h.b16 %v2048
    %v2226 = vunpack.c.l.b16 %v2049
    %v2227 = vunpack.c.h.b16 %v2049
    %v2228 = vunpack.c.l.b16 %v2050
    %v2229 = vunpack.c.h.b16 %v2050
    %v2230 = vunpack.c.l.b16 %v2051
    %v2231 = vunpack.c.h.b16 %v2051
    %v2232 = vunpack.c.l.b16 %v2052
    %v2233 = vunpack.c.h.b16 %v2052
    %v2234 = vunpack.c.l.b16 %v2053
    %v2235 = vunpack.c.h.b16 %v2053
    %v2236 = vunpack.c.l.b16 %v2054
    %v2237 = vunpack.c.h.b16 %v2054
    %v2238 = vunpack.c.l.b16 %v2055
    %v2239 = vunpack.c.h.b16 %v2055
    %v2240 = vunpack.c.l.b16 %v2056
    %v2241 = vunpack.c.h.b16 %v2056
    %v2242 = vunpack.c.l.b16 %v2057
    %v2243 = vunpack.c.h.b16 %v2057
    %v2244 = vunpack.c.l.b16 %v2058
    %v2245 = vunpack.c.h.b16 %v2058
    %v2246 = vunpack.c.l.b16 %v2059
    %v2247 = vunpack.c.h.b16 %v2059
    %v2248 = vunpack.c.l.b16 %v2060
    %v2249 = vunpack.c.h.b16 %v2060
    %v2250 = vunpack.c.l.b16 %v2061
    %v2251 = vunpack.c.h.b16 %v2061
    %v2252 = vpack.c.b16 %v2156, %v2152
    %v2253 = vpack.c.b16 %v2157, %v2153
    %v2254 = vpack.c.b16 %v2158, %v2154
    %v2255 = vpack.c.b16 %v2159, %v2155
    %v2256 = vpack.c.b16 %v2164, %v2160
    %v2257 = vpack.c.b16 %v2165, %v2161
    %v2258 = vpack.c.b16 %v2166, %v2162
    %v2259 = vpack.c.b16 %v2167, %v2163
    %v2260 = vpack.c.b16 %v2172, %v2168
    %v2261 = vpack.c.b16 %v2173, %v2169
    %v2262 = vpack.c.b16 %v2174, %v2170
    %v2263 = vpack.c.b16 %v2175, %v2171
    %v2264 = vpack.c.b16 %v2180, %v2176
    %v2265 = vpack.c.b16 %v2181, %v2177
    %v2266 = vpack.c.b16 %v2182, %v2178
    %v2267 = vpack.c.b16 %v2183, %v2179
    %v2268 = vpack.c.b16 %v2188, %v2184
    %v2269 = vpack.c.b16 %v2189, %v2185
    %v2270 = vpack.c.b16 %v2190, %v2186
    %v2271 = vpack.c.b16 %v2191, %v2187
    %v2272 = vpack.c.b16 %v2196, %v2192
    %v2273 = vpack.c.b16 %v2197, %v2193
    %v2274 = vpack.c.b16 %v2198, %v2194
    %v2275 = vpack.c.b16 %v2199, %v2195
    %v2276 = vpack.c.b16 %v2204, %v2200
    %v2277 = vpack.c.b16 %v2205, %v2201
    %v2278 = vpack.c.b16 %v2206, %v2202
    %v2279 = vpack.c.b16 %v2207, %v2203
    %v2280 = vpack.c.b16 %v2212, %v2208
    %v2281 = vpack.c.b16 %v2213, %v2209
    %v2282 = vpack.c.b16 %v2214, %v2210
    %v2283 = vpack.c.b16 %v2215, %v2211
    %v2284 = vpack.c.b16 %v2220, %v2216
    %v2285 = vpack.c.b16 %v2221, %v2217
    %v2286 = vpack.c.b16 %v2222, %v2218
    %v2287 = vpack.c.b16 %v2223, %v2219
    %v2288 = vpack.c.b16 %v2228, %v2224
    %v2289 = vpack.c.b16 %v2229, %v2225
    %v2290 = vpack.c.b16 %v2230, %v2226
    %v2291 = vpack.c.b16 %v2231, %v2227
    %v2292 = vpack.c.b16 %v2236, %v2232
    %v2293 = vpack.c.b16 %v2237, %v2233
    %v2294 = vpack.c.b16 %v2238, %v2234
    %v2295 = vpack.c.b16 %v2239, %v2235
    %v2296 = vpack.c.b16 %v2244, %v2240
    %v2297 = vpack.c.b16 %v2245, %v2241
    %v2298 = vpack.c.b16 %v2246, %v2242
    %v2299 = vpack.c.b16 %v2247, %v2243
    %v2300 = vpack.c.b16 %v2248, %v2248
    %v2301 = vpack.c.b16 %v2249, %v2249
    %v2302 = vpack.c.b16 %v2250, %v2250
    %v2303 = vpack.c.b16 %v2251, %v2251
    %vm2352 = vcmask 572416
    %v2354 = vsel %vm2352, %v2097, 0
    %v2357 = vsel %vm2352, %v2099, 0
    %vm2359 = vcmask 1042432
    %v2361 = vsel %vm2359, %v2300, 0
    %v2364 = vsel %vm2359, %v2301, 0
    %v2367 = vsel %vm2359, %v2302, 0
    %v2370 = vsel %vm2359, %v2303, 0
    %2372 = vmatprep.subr.bf16.mxu0 %v2253
    %2373 = vmatpush1.bf16.msra.mxu0 %v2252
    %2374 = vmatprep.subr.bf16.mxu0 %v2257
    %2375 = vmatpush1.bf16.msra.mxu0 %v2256
    %2376 = vmatprep.subr.bf16.mxu0 %v2261
    %2377 = vmatpush1.bf16.msra.mxu0 %v2260
    %2378 = vmatprep.subr.bf16.mxu0 %v2265
    %2379 = vmatpush1.bf16.msra.mxu0 %v2264
    %2380 = vmatprep.subr.bf16.mxu0 %v2269
    %2381 = vmatpush1.bf16.msra.mxu0 %v2268
    %2382 = vmatprep.subr.bf16.mxu0 %v2273
    %2383 = vmatpush1.bf16.msra.mxu0 %v2272
    %2384 = vmatprep.subr.bf16.mxu0 %v2277
    %2385 = vmatpush1.bf16.msra.mxu0 %v2276
    %2386 = vmatprep.subr.bf16.mxu0 %v2281
    %2387 = vmatpush1.bf16.msra.mxu0 %v2280
    %2388 = vmatprep.subr.bf16.mxu0 %v2285
    %2389 = vmatpush1.bf16.msra.mxu0 %v2284
    %2390 = vmatprep.subr.bf16.mxu0 %v2289
    %2391 = vmatpush1.bf16.msra.mxu0 %v2288
    %2392 = vmatprep.subr.bf16.mxu0 %v2293
    %2393 = vmatpush1.bf16.msra.mxu0 %v2292
    %2394 = vmatprep.subr.bf16.mxu0 %v2297
    %2395 = vmatpush1.bf16.msra.mxu0 %v2296
    %2396 = vmatprep.subr.bf16.mxu0 %v2364
    %2397 = vmatpush1.bf16.msra.mxu0 %v2361
    %2398 = vmatprep.subr.bf16.mxu0 0
    %2399 = vmatpush1.bf16.msra.mxu0 0
    %2400 = vmatprep.subr.bf16.mxu0 0
    %2401 = vmatpush1.bf16.msra.mxu0 0
    %2402 = vmatprep.subr.bf16.mxu0 0
    %2403 = vmatpush1.bf16.msra.mxu0 0
    %2404 = vmatprep.mubr.bf16.mxu0 %v2354
    %2405 = vmatmul.mubr.bf16.gmra.mrb[0].mxu0 %v2096
    %v2406 = vpop.f32.mrb[0].mxu0
    %v2407 = vadd.f32 %v2067, %v2406
    %v2408 = vpop.f32.mrb[0].mxu0
    %v2409 = vadd.f32 %v2071, %v2408
    %v2410 = vpop.f32.mrb[0].mxu0
    %v2411 = vadd.f32 %v2067, %v2410
    %v2412 = vpop.f32.mrb[0].mxu0
    %v2413 = vadd.f32 %v2071, %v2412
    %2414 = vmatprep.mubr.bf16.mxu0 %v2357
    %2415 = vmatmul.mubr.bf16.gmra.mrb[0].mxu0 %v2098
    %v2416 = vpop.f32.mrb[0].mxu0
    %v2417 = vadd.f32 %v2067, %v2416
    %v2418 = vpop.f32.mrb[0].mxu0
    %v2419 = vadd.f32 %v2071, %v2418
    %v2420 = vpop.f32.mrb[0].mxu0
    %v2421 = vadd.f32 %v2067, %v2420
    %v2422 = vpop.f32.mrb[0].mxu0
    %v2423 = vadd.f32 %v2071, %v2422
    %2424 = vdwg.mxu0
    %2425 = vmatprep.subr.bf16.mxu0 %v2255
    %2426 = vmatpush1.bf16.msra.mxu0 %v2254
    %2427 = vmatprep.subr.bf16.mxu0 %v2259
    %2428 = vmatpush1.bf16.msra.mxu0 %v2258
    %2429 = vmatprep.subr.bf16.mxu0 %v2263
    %2430 = vmatpush1.bf16.msra.mxu0 %v2262
    %2431 = vmatprep.subr.bf16.mxu0 %v2267
    %2432 = vmatpush1.bf16.msra.mxu0 %v2266
    %2433 = vmatprep.subr.bf16.mxu0 %v2271
    %2434 = vmatpush1.bf16.msra.mxu0 %v2270
    %2435 = vmatprep.subr.bf16.mxu0 %v2275
    %2436 = vmatpush1.bf16.msra.mxu0 %v2274
    %2437 = vmatprep.subr.bf16.mxu0 %v2279
    %2438 = vmatpush1.bf16.msra.mxu0 %v2278
    %2439 = vmatprep.subr.bf16.mxu0 %v2283
    %2440 = vmatpush1.bf16.msra.mxu0 %v2282
    %2441 = vmatprep.subr.bf16.mxu0 %v2287
    %2442 = vmatpush1.bf16.msra.mxu0 %v2286
    %2443 = vmatprep.subr.bf16.mxu0 %v2291
    %2444 = vmatpush1.bf16.msra.mxu0 %v2290
    %2445 = vmatprep.subr.bf16.mxu0 %v2295
    %2446 = vmatpush1.bf16.msra.mxu0 %v2294
    %2447 = vmatprep.subr.bf16.mxu0 %v2299
    %2448 = vmatpush1.bf16.msra.mxu0 %v2298
    %2449 = vmatprep.subr.bf16.mxu0 %v2370
    %2450 = vmatpush1.bf16.msra.mxu0 %v2367
    %2451 = vmatprep.subr.bf16.mxu0 0
    %2452 = vmatpush1.bf16.msra.mxu0 0
    %2453 = vmatprep.subr.bf16.mxu0 0
    %2454 = vmatpush1.bf16.msra.mxu0 0
    %2455 = vmatprep.subr.bf16.mxu0 0
    %2456 = vmatpush1.bf16.msra.mxu0 0
    %2457 = vmatprep.mubr.bf16.mxu0 %v2354
    %2458 = vmatmul.mubr.bf16.gmra.mrb[0].mxu0 %v2096
    %v2459 = vpop.f32.mrb[0].mxu0
    %v2460 = vadd.f32 %v2075, %v2459
    %v2461 = vpop.f32.mrb[0].mxu0
    %v2462 = vadd.f32 %v2079, %v2461
    %v2463 = vpop.f32.mrb[0].mxu0
    %v2464 = vadd.f32 %v2075, %v2463
    %v2465 = vpop.f32.mrb[0].mxu0
    %v2466 = vadd.f32 %v2079, %v2465
    %2467 = vmatprep.mubr.bf16.mxu0 %v2357
    %2468 = vmatmul.mubr.bf16.gmra.mrb[0].mxu0 %v2098
    %v2469 = vpop.f32.mrb[0].mxu0
    %v2470 = vadd.f32 %v2075, %v2469
    %v2471 = vpop.f32.mrb[0].mxu0
    %v2472 = vadd.f32 %v2079, %v2471
    %v2473 = vpop.f32.mrb[0].mxu0
    %v2474 = vadd.f32 %v2075, %v2473
    %v2475 = vpop.f32.mrb[0].mxu0
    %v2476 = vadd.f32 %v2079, %v2475
    %2477 = vdwg.mxu0
    %v2478 = vmax.f32 %v2407, 0.0
    %v2479 = vmax.f32 %v2409, 0.0
    %v2480 = vmax.f32 %v2460, 0.0
    %v2481 = vmax.f32 %v2462, 0.0
    %v2482 = vmax.f32 %v2411, 0.0
    %v2483 = vmax.f32 %v2413, 0.0
    %v2484 = vmax.f32 %v2464, 0.0
    %v2485 = vmax.f32 %v2466, 0.0
    %v2486 = vmax.f32 %v2417, 0.0
    %v2487 = vmax.f32 %v2419, 0.0
    %v2488 = vmax.f32 %v2470, 0.0
    %v2489 = vmax.f32 %v2472, 0.0
    %v2490 = vmax.f32 %v2421, 0.0
    %v2491 = vmax.f32 %v2423, 0.0
    %v2492 = vmax.f32 %v2474, 0.0
    %v2493 = vmax.f32 %v2476, 0.0
    %vm2494 = vcmask 257024
    %2495 = vst.msk [vmem:[#allocation3 + $0x10] sm:$0xf] %vm2494, 0
    %2496 = vst.msk [vmem:[#allocation3 + $0x24] sm:$0xf] %vm2494, 0
    %2497 = vst.msk [vmem:[#allocation3 + $0x38] sm:$0xf] %vm2494, 0
    %2498 = vst.msk [vmem:[#allocation3 + $0x4c] sm:$0xf] %vm2494, 0
    %vm2499 = vcmask 253952
    %2500 = vst.msk [vmem:[#allocation3 + $0x60] sm:$0x1] %vm2499, 0
    %vm2501 = vsmask.f32 256
    %vm2502 = vmand %vm1736, %vm2501
    %vm2503 = vsmask.f32 4352
    %vm2504 = vmand %vm1737, %vm2503
    %vm2505 = vmor %vm2504, %vm2502
    %v2506 = vld [vmem:[#allocation3 + $0x28] sm:$0x11]
    %v2507 = vsel %vm2505, 0, %v2506
    %2508 = vst [vmem:[#allocation3 + $0x28] sm:$0x11] %v2507
    %v2509 = vld [vmem:[#allocation3 + $0x30] sm:$0x11]
    %v2510 = vsel %vm2505, 0, %v2509
    %2511 = vst [vmem:[#allocation3 + $0x30] sm:$0x11] %v2510
    %v2512 = vpack.c.bf16 %v2482, %v2478
    %v2513 = vpack.c.bf16 %v2483, %v2479
    %v2514 = vpack.c.bf16 %v2484, %v2480
    %v2515 = vpack.c.bf16 %v2485, %v2481
    %v2520 = vunpack.c.l.b16 %v2512
    %v2521 = vunpack.c.l.b16 %v2513
    %v2522 = vunpack.c.l.b16 %v2514
    %v2523 = vunpack.c.l.b16 %v2515
    %v2524 = vunpack.c.h.b16 %v2512
    %v2525 = vunpack.c.h.b16 %v2513
    %v2526 = vunpack.c.h.b16 %v2514
    %v2527 = vunpack.c.h.b16 %v2515
    %v2528 = vpack.c.b16 %v2521, %v2520
    %v2529 = vpack.c.b16 %v2523, %v2522
    %v2530 = vpack.c.b16 %v2525, %v2524
    %v2531 = vpack.c.b16 %v2527, %v2526
    %2536 = vst [vmem:[#allocation3] sm:$0xff] %v2528
    %2537 = vst [vmem:[#allocation3 + $0x8] sm:$0xff] %v2529
    %2538 = vst [vmem:[#allocation3 + $0x14] sm:$0xff] %v2530
    %2539 = vst [vmem:[#allocation3 + $0x1c] sm:$0xff] %v2531
    %vm2540 = vsmask.f32 7938
    %vm2541 = vmand %vm1736, %vm2540
    %vm2542 = vsmask.f32 7954
    %vm2543 = vmand %vm1737, %vm2542
    %vm2544 = vmor %vm2543, %vm2541
    %v2545 = vld [vmem:[#allocation3 + $0x50] sm:$0x11]
    %v2546 = vsel %vm2544, 0, %v2545
    %2547 = vst [vmem:[#allocation3 + $0x50] sm:$0x11] %v2546
    %v2548 = vld [vmem:[#allocation3 + $0x58] sm:$0x11]
    %v2549 = vsel %vm2544, 0, %v2548
    %2550 = vst [vmem:[#allocation3 + $0x58] sm:$0x11] %v2549
    %v2551 = vpack.c.bf16 %v2490, %v2486
    %v2552 = vpack.c.bf16 %v2491, %v2487
    %v2553 = vpack.c.bf16 %v2492, %v2488
    %v2554 = vpack.c.bf16 %v2493, %v2489
    %v2559 = vunpack.c.l.b16 %v2551
    %v2560 = vunpack.c.l.b16 %v2552
    %v2561 = vunpack.c.l.b16 %v2553
    %v2562 = vunpack.c.l.b16 %v2554
    %v2563 = vunpack.c.h.b16 %v2551
    %v2564 = vunpack.c.h.b16 %v2552
    %v2565 = vunpack.c.h.b16 %v2553
    %v2566 = vunpack.c.h.b16 %v2554
    %v2567 = vpack.c.b16 %v2560, %v2559
    %v2568 = vpack.c.b16 %v2562, %v2561
    %v2569 = vpack.c.b16 %v2564, %v2563
    %v2570 = vpack.c.b16 %v2566, %v2565
    %vm2571 = vsmask.f32 4368
    %vm2572 = vmor %vm2501, %vm2571
    %v2574 = vshrl.u32 %v2567, 16
    %v2576 = vrot.slane %v2574, 7
    %v2577 = vshll.u32 %v2567, 16
    %v2579 = vor.u32 %v2576, %v2577
    %v2581 = vshrl.u32 %v2568, 16
    %v2583 = vrot.slane %v2581, 7
    %v2584 = vshll.u32 %v2568, 16
    %v2586 = vor.u32 %v2583, %v2584
    %v2587 = vrot.slane %v2576, 4
    %v2589 = vshrl.u32 %v2569, 16
    %v2591 = vrot.slane %v2589, 7
    %v2592 = vshll.u32 %v2569, 16
    %v2594 = vor.u32 %v2591, %v2592
    %v2595 = vsel %vm2572, %v2587, %v2594
    %v2596 = vrot.slane %v2583, 4
    %v2598 = vshrl.u32 %v2570, 16
    %v2600 = vrot.slane %v2598, 7
    %v2601 = vshll.u32 %v2570, 16
    %v2603 = vor.u32 %v2600, %v2601
    %v2604 = vsel %vm2572, %v2596, %v2603
    %v2605 = vrot.slane %v2591, 4
    %v2606 = vrot.slane %v2600, 4
    %vm2613 = vcmask 1043456
    %vm2614 = vmand %vm2613, %vm2540
    %vm2615 = vcmask 1047556
    %vm2616 = vmand %vm2615, %vm2542
    %vm2617 = vmor %vm2616, %vm2614
    %v2618 = vld [vmem:[#allocation3 + $0x28] sm:$0xff]
    %v2619 = vsel %vm2617, %v2579, %v2618
    %2620 = vst [vmem:[#allocation3 + $0x28] sm:$0xff] %v2619
    %v2621 = vld [vmem:[#allocation3 + $0x30] sm:$0xff]
    %v2622 = vsel %vm2617, %v2586, %v2621
    %2623 = vst [vmem:[#allocation3 + $0x30] sm:$0xff] %v2622
    %2624 = vst [vmem:[#allocation3 + $0x3c] sm:$0xff] %v2595
    %2625 = vst [vmem:[#allocation3 + $0x44] sm:$0xff] %v2604
    %v2626 = vld [vmem:[#allocation3 + $0x50] sm:$0x11]
    %v2627 = vsel %vm2505, %v2605, %v2626
    %2628 = vst [vmem:[#allocation3 + $0x50] sm:$0x11] %v2627
    %v2629 = vld [vmem:[#allocation3 + $0x58] sm:$0x11]
    %v2630 = vsel %vm2505, %v2606, %v2629
    %2631 = vst [vmem:[#allocation3 + $0x58] sm:$0x11] %v2630
    %v2632 = vld [vmem:[#allocation3] sm:$0xff]
    %v2633 = vld [vmem:[#allocation3 + $0x8] sm:$0xff]
    %v2634 = vld [vmem:[#allocation3 + $0x10] sm:$0xf]
    %v2635 = vld [vmem:[#allocation3 + $0x14] sm:$0xff]
    %v2636 = vld [vmem:[#allocation3 + $0x1c] sm:$0xff]
    %v2637 = vld [vmem:[#allocation3 + $0x24] sm:$0xf]
    %v2638 = vld [vmem:[#allocation3 + $0x28] sm:$0xff]
    %v2639 = vld [vmem:[#allocation3 + $0x30] sm:$0xff]
    %v2640 = vld [vmem:[#allocation3 + $0x38] sm:$0xf]
    %v2641 = vld [vmem:[#allocation3 + $0x3c] sm:$0xff]
    %v2642 = vld [vmem:[#allocation3 + $0x44] sm:$0xff]
    %v2643 = vld [vmem:[#allocation3 + $0x4c] sm:$0xf]
    %v2644 = vld [vmem:[#allocation3 + $0x50] sm:$0x11]
    %v2645 = vld [vmem:[#allocation3 + $0x58] sm:$0x11]
    %v2646 = vld [vmem:[#allocation3 + $0x60] sm:$0x1]
    %v2647 = vld [vmem:[#allocation13] sm:$0xff]
    %v2648 = vld [vmem:[#allocation13 + $0x8] sm:$0xff]
    %v2649 = vld [vmem:[#allocation13 + $0x10] sm:$0xff]
    %v2650 = vld [vmem:[#allocation13 + $0x18] sm:$0xff]
    %v2651 = vld [vmem:[#allocation13 + $0x20] sm:$0xff]
    %v2652 = vld [vmem:[#allocation13 + $0x28] sm:$0xff]
    %v2653 = vld [vmem:[#allocation13 + $0x30] sm:$0xff]
    %v2654 = vld [vmem:[#allocation13 + $0x38] sm:$0xff]
    %v2655 = vld [vmem:[#allocation13 + $0x40] sm:$0xff]
    %v2656 = vld [vmem:[#allocation13 + $0x48] sm:$0xff]
    %v2657 = vld [vmem:[#allocation13 + $0x50] sm:$0xff]
    %v2658 = vld [vmem:[#allocation13 + $0x58] sm:$0xff]
    %v2659 = vld [vmem:[#allocation13 + $0x60] sm:$0xff]
    %v2660 = vld [vmem:[#allocation13 + $0x68] sm:$0xff]
    %v2661 = vld [vmem:[#allocation13 + $0x70] sm:$0xff]
    %v2662 = vld [vmem:[#allocation13 + $0x78] sm:$0xff]
    %v2663 = vld [vmem:[#allocation13 + $0x80] sm:$0xff]
    %v2664 = vld [vmem:[#allocation13 + $0x88] sm:$0xff]
    %v2665 = vld [vmem:[#allocation13 + $0x90] sm:$0xff]
    %v2666 = vld [vmem:[#allocation13 + $0x98] sm:$0xff]
    %v2667 = vld [vmem:[#allocation13 + $0xa0] sm:$0xff]
    %v2668 = vld [vmem:[#allocation13 + $0xa8] sm:$0xff]
    %v2669 = vld [vmem:[#allocation13 + $0xb0] sm:$0xff]
    %v2670 = vld [vmem:[#allocation13 + $0xb8] sm:$0xff]
    %v2671 = vld [vmem:[#allocation13 + $0xc0] sm:$0xff]
    %v2672 = vld [vmem:[#allocation13 + $0xc8] sm:$0xff]
    %v2673 = vld [vmem:[#allocation13 + $0xd0] sm:$0xff]
    %v2674 = vld [vmem:[#allocation13 + $0xd8] sm:$0xff]
    %v2675 = vld [vmem:[#allocation13 + $0xe0] sm:$0xff]
    %v2676 = vld [vmem:[#allocation13 + $0xe8] sm:$0xff]
    %v2677 = vld [vmem:[#allocation13 + $0xf0] sm:$0xff]
    %v2678 = vld [vmem:[#allocation13 + $0xf8] sm:$0xff]
    %v2679 = vld [vmem:[#allocation13 + $0x100] sm:$0xff]
    %v2680 = vld [vmem:[#allocation13 + $0x108] sm:$0xff]
    %v2681 = vld [vmem:[#allocation13 + $0x110] sm:$0xff]
    %v2682 = vld [vmem:[#allocation13 + $0x118] sm:$0xff]
    %v2683 = vld [vmem:[#allocation13 + $0x120] sm:$0xff]
    %v2684 = vld [vmem:[#allocation13 + $0x128] sm:$0xff]
    %v2685 = vld [vmem:[#allocation13 + $0x130] sm:$0xff]
    %v2686 = vld [vmem:[#allocation13 + $0x138] sm:$0xff]
    %v2687 = vld [vmem:[#allocation13 + $0x140] sm:$0xff]
    %v2688 = vld [vmem:[#allocation13 + $0x148] sm:$0xff]
    %v2689 = vld [vmem:[#allocation13 + $0x150] sm:$0xff]
    %v2690 = vld [vmem:[#allocation13 + $0x158] sm:$0xff]
    %v2691 = vld [vmem:[#allocation13 + $0x160] sm:$0xff]
    %v2692 = vld [vmem:[#allocation13 + $0x168] sm:$0xff]
    %v2693 = vld [vmem:[#allocation13 + $0x170] sm:$0xff]
    %v2694 = vld [vmem:[#allocation13 + $0x178] sm:$0xff]
    %v2695 = vld [vmem:[#allocation13 + $0x180] sm:$0xff]
    %v2696 = vld [vmem:[#allocation13 + $0x188] sm:$0xff]
    %v2697 = vld [vmem:[#allocation13 + $0x190] sm:$0xff]
    %v2698 = vld [vmem:[#allocation13 + $0x198] sm:$0xff]
    %v2699 = vld [vmem:[#allocation13 + $0x1a0] sm:$0xff]
    %v2700 = vld [vmem:[#allocation13 + $0x1a8] sm:$0xff]
    %v2701 = vld [vmem:[#allocation13 + $0x1b0] sm:$0xff]
    %v2702 = vld [vmem:[#allocation13 + $0x1b8] sm:$0xff]
    %v2703 = vld [vmem:[#allocation13 + $0x1c0] sm:$0xff]
    %v2704 = vld [vmem:[#allocation13 + $0x1c8] sm:$0xff]
    %v2705 = vld [vmem:[#allocation13 + $0x1d0] sm:$0xff]
    %v2706 = vld [vmem:[#allocation13 + $0x1d8] sm:$0xff]
    %v2707 = vld [vmem:[#allocation13 + $0x1e0] sm:$0xff]
    %v2708 = vld [vmem:[#allocation13 + $0x1e8] sm:$0xff]
    %v2709 = vld [vmem:[#allocation13 + $0x1f0] sm:$0xff]
    %v2710 = vld [vmem:[#allocation13 + $0x1f8] sm:$0xff]
    %v2711 = vld [vmem:[#allocation13 + $0x200] sm:$0xff]
    %v2712 = vld [vmem:[#allocation13 + $0x208] sm:$0xff]
    %v2713 = vld [vmem:[#allocation13 + $0x210] sm:$0xff]
    %v2714 = vld [vmem:[#allocation13 + $0x218] sm:$0xff]
    %v2715 = vld [vmem:[#allocation13 + $0x220] sm:$0xff]
    %v2716 = vld [vmem:[#allocation13 + $0x228] sm:$0xff]
    %v2717 = vld [vmem:[#allocation13 + $0x230] sm:$0xff]
    %v2718 = vld [vmem:[#allocation13 + $0x238] sm:$0xff]
    %v2719 = vld [vmem:[#allocation13 + $0x240] sm:$0xff]
    %v2720 = vld [vmem:[#allocation13 + $0x248] sm:$0xff]
    %v2721 = vld [vmem:[#allocation13 + $0x250] sm:$0xff]
    %v2722 = vld [vmem:[#allocation13 + $0x258] sm:$0xff]
    %v2723 = vld [vmem:[#allocation13 + $0x260] sm:$0xff]
    %v2724 = vld [vmem:[#allocation13 + $0x268] sm:$0xff]
    %v2725 = vld [vmem:[#allocation13 + $0x270] sm:$0xff]
    %v2726 = vld [vmem:[#allocation13 + $0x278] sm:$0xff]
    %v2727 = vld [vmem:[#allocation13 + $0x280] sm:$0xff]
    %v2728 = vld [vmem:[#allocation13 + $0x288] sm:$0xff]
    %v2729 = vld [vmem:[#allocation13 + $0x290] sm:$0xff]
    %v2730 = vld [vmem:[#allocation13 + $0x298] sm:$0xff]
    %v2731 = vld [vmem:[#allocation13 + $0x2a0] sm:$0xff]
    %v2732 = vld [vmem:[#allocation13 + $0x2a8] sm:$0xff]
    %v2733 = vld [vmem:[#allocation13 + $0x2b0] sm:$0xff]
    %v2734 = vld [vmem:[#allocation13 + $0x2b8] sm:$0xff]
    %v2735 = vld [vmem:[#allocation13 + $0x2c0] sm:$0xff]
    %v2736 = vld [vmem:[#allocation13 + $0x2c8] sm:$0xff]
    %v2737 = vld [vmem:[#allocation13 + $0x2d0] sm:$0xff]
    %v2738 = vld [vmem:[#allocation13 + $0x2d8] sm:$0xff]
    %v2739 = vld [vmem:[#allocation13 + $0x2e0] sm:$0xff]
    %v2740 = vld [vmem:[#allocation13 + $0x2e8] sm:$0xff]
    %v2741 = vld [vmem:[#allocation13 + $0x2f0] sm:$0xff]
    %v2742 = vld [vmem:[#allocation13 + $0x2f8] sm:$0xff]
    %v2743 = vld [vmem:[#allocation13 + $0x300] sm:$0xff]
    %v2744 = vld [vmem:[#allocation13 + $0x308] sm:$0xff]
    %v2745 = vld [vmem:[#allocation13 + $0x310] sm:$0xff]
    %v2746 = vld [vmem:[#allocation13 + $0x318] sm:$0xff]
    %v2747 = vld [vmem:[#allocation13 + $0x320] sm:$0xff]
    %v2748 = vld [vmem:[#allocation13 + $0x328] sm:$0xff]
    %v2749 = vld [vmem:[#allocation13 + $0x330] sm:$0xff]
    %v2750 = vld [vmem:[#allocation13 + $0x338] sm:$0xff]
    %v2751 = vld [vmem:[#allocation13 + $0x340] sm:$0xff]
    %v2752 = vld [vmem:[#allocation13 + $0x348] sm:$0xff]
    %v2753 = vld [vmem:[#allocation13 + $0x350] sm:$0xff]
    %v2754 = vld [vmem:[#allocation13 + $0x358] sm:$0xff]
    %v2755 = vld [vmem:[#allocation13 + $0x360] sm:$0xff]
    %v2756 = vld [vmem:[#allocation13 + $0x368] sm:$0xff]
    %v2757 = vld [vmem:[#allocation13 + $0x370] sm:$0xff]
    %v2758 = vld [vmem:[#allocation13 + $0x378] sm:$0xff]
    %v2759 = vld [vmem:[#allocation13 + $0x380] sm:$0xff]
    %v2760 = vld [vmem:[#allocation13 + $0x388] sm:$0xff]
    %v2761 = vld [vmem:[#allocation13 + $0x390] sm:$0xff]
    %v2762 = vld [vmem:[#allocation13 + $0x398] sm:$0xff]
    %v2763 = vld [vmem:[#allocation13 + $0x3a0] sm:$0xff]
    %v2764 = vld [vmem:[#allocation13 + $0x3a8] sm:$0xff]
    %v2765 = vld [vmem:[#allocation13 + $0x3b0] sm:$0xff]
    %v2766 = vld [vmem:[#allocation13 + $0x3b8] sm:$0xff]
    %v2767 = vld [vmem:[#allocation13 + $0x3c0] sm:$0xff]
    %v2768 = vld [vmem:[#allocation13 + $0x3c8] sm:$0xff]
    %v2769 = vld [vmem:[#allocation13 + $0x3d0] sm:$0xff]
    %v2770 = vld [vmem:[#allocation13 + $0x3d8] sm:$0xff]
    %v2771 = vld [vmem:[#allocation13 + $0x3e0] sm:$0xff]
    %v2772 = vld [vmem:[#allocation13 + $0x3e8] sm:$0xff]
    %v2773 = vld [vmem:[#allocation13 + $0x3f0] sm:$0xff]
    %v2774 = vld [vmem:[#allocation13 + $0x3f8] sm:$0xff]
    %v2775 = vld [vmem:[#allocation13 + $0x400] sm:$0xff]
    %v2776 = vld [vmem:[#allocation13 + $0x408] sm:$0xff]
    %v2777 = vld [vmem:[#allocation13 + $0x410] sm:$0xff]
    %v2778 = vld [vmem:[#allocation13 + $0x418] sm:$0xff]
    %v2779 = vld [vmem:[#allocation13 + $0x420] sm:$0xff]
    %v2780 = vld [vmem:[#allocation13 + $0x428] sm:$0xff]
    %v2781 = vld [vmem:[#allocation13 + $0x430] sm:$0xff]
    %v2782 = vld [vmem:[#allocation13 + $0x438] sm:$0xff]
    %v2783 = vld [vmem:[#allocation13 + $0x440] sm:$0xff]
    %v2784 = vld [vmem:[#allocation13 + $0x448] sm:$0xff]
    %v2785 = vld [vmem:[#allocation13 + $0x450] sm:$0xff]
    %v2786 = vld [vmem:[#allocation13 + $0x458] sm:$0xff]
    %v2787 = vld [vmem:[#allocation13 + $0x460] sm:$0xff]
    %v2788 = vld [vmem:[#allocation13 + $0x468] sm:$0xff]
    %v2789 = vld [vmem:[#allocation13 + $0x470] sm:$0xff]
    %v2790 = vld [vmem:[#allocation13 + $0x478] sm:$0xff]
    %v2791 = vld [vmem:[#allocation13 + $0x480] sm:$0xff]
    %v2792 = vld [vmem:[#allocation13 + $0x488] sm:$0xff]
    %v2793 = vld [vmem:[#allocation13 + $0x490] sm:$0xff]
    %v2794 = vld [vmem:[#allocation13 + $0x498] sm:$0xff]
    %v2795 = vld [vmem:[#allocation13 + $0x4a0] sm:$0xff]
    %v2796 = vld [vmem:[#allocation13 + $0x4a8] sm:$0xff]
    %v2797 = vld [vmem:[#allocation13 + $0x4b0] sm:$0xff]
    %v2798 = vld [vmem:[#allocation13 + $0x4b8] sm:$0xff]
    %v2799 = vld [vmem:[#allocation13 + $0x4c0] sm:$0xff]
    %v2800 = vld [vmem:[#allocation13 + $0x4c8] sm:$0xff]
    %v2801 = vld [vmem:[#allocation13 + $0x4d0] sm:$0xff]
    %v2802 = vld [vmem:[#allocation13 + $0x4d8] sm:$0xff]
    %v2803 = vld [vmem:[#allocation13 + $0x4e0] sm:$0xff]
    %v2804 = vld [vmem:[#allocation13 + $0x4e8] sm:$0xff]
    %v2805 = vld [vmem:[#allocation13 + $0x4f0] sm:$0xff]
    %v2806 = vld [vmem:[#allocation13 + $0x4f8] sm:$0xff]
    %v2807 = vld [vmem:[#allocation13 + $0x500] sm:$0xff]
    %v2808 = vld [vmem:[#allocation13 + $0x508] sm:$0xff]
    %v2809 = vld [vmem:[#allocation13 + $0x510] sm:$0xff]
    %v2810 = vld [vmem:[#allocation13 + $0x518] sm:$0xff]
    %v2811 = vld [vmem:[#allocation13 + $0x520] sm:$0xff]
    %v2812 = vld [vmem:[#allocation13 + $0x528] sm:$0xff]
    %v2813 = vld [vmem:[#allocation13 + $0x530] sm:$0xff]
    %v2814 = vld [vmem:[#allocation13 + $0x538] sm:$0xff]
    %v2815 = vld [vmem:[#allocation13 + $0x540] sm:$0xff]
    %v2816 = vld [vmem:[#allocation13 + $0x548] sm:$0xff]
    %v2817 = vld [vmem:[#allocation13 + $0x550] sm:$0xff]
    %v2818 = vld [vmem:[#allocation13 + $0x558] sm:$0xff]
    %v2819 = vld [vmem:[#allocation13 + $0x560] sm:$0xff]
    %v2820 = vld [vmem:[#allocation13 + $0x568] sm:$0xff]
    %v2821 = vld [vmem:[#allocation13 + $0x570] sm:$0xff]
    %v2822 = vld [vmem:[#allocation13 + $0x578] sm:$0xff]
    %v2823 = vld [vmem:[#allocation13 + $0x580] sm:$0xff]
    %v2824 = vld [vmem:[#allocation13 + $0x588] sm:$0xff]
    %v2825 = vld [vmem:[#allocation13 + $0x590] sm:$0xff]
    %v2826 = vld [vmem:[#allocation13 + $0x598] sm:$0xff]
    %v2827 = vld [vmem:[#allocation13 + $0x5a0] sm:$0xff]
    %v2828 = vld [vmem:[#allocation13 + $0x5a8] sm:$0xff]
    %v2829 = vld [vmem:[#allocation13 + $0x5b0] sm:$0xff]
    %v2830 = vld [vmem:[#allocation13 + $0x5b8] sm:$0xff]
    %v2831 = vld [vmem:[#allocation13 + $0x5c0] sm:$0xff]
    %v2832 = vld [vmem:[#allocation13 + $0x5c8] sm:$0xff]
    %v2833 = vld [vmem:[#allocation13 + $0x5d0] sm:$0xff]
    %v2834 = vld [vmem:[#allocation13 + $0x5d8] sm:$0xff]
    %v2835 = vld [vmem:[#allocation13 + $0x5e0] sm:$0xff]
    %v2836 = vld [vmem:[#allocation13 + $0x5e8] sm:$0xff]
    %v2837 = vld [vmem:[#allocation13 + $0x5f0] sm:$0xff]
    %v2838 = vld [vmem:[#allocation13 + $0x5f8] sm:$0xff]
    %v2839 = vld [vmem:[#allocation13 + $0x600] sm:$0xff]
    %v2840 = vld [vmem:[#allocation13 + $0x608] sm:$0xff]
    %v2841 = vld [vmem:[#allocation13 + $0x610] sm:$0xff]
    %v2842 = vld [vmem:[#allocation13 + $0x618] sm:$0xff]
    %v2843 = vld [vmem:[#allocation13 + $0x620] sm:$0xff]
    %v2844 = vld [vmem:[#allocation13 + $0x628] sm:$0xff]
    %v2845 = vld [vmem:[#allocation13 + $0x630] sm:$0xff]
    %v2846 = vld [vmem:[#allocation13 + $0x638] sm:$0xff]
    %v2847 = vld [vmem:[#allocation13 + $0x640] sm:$0xff]
    %v2848 = vld [vmem:[#allocation13 + $0x648] sm:$0xff]
    %v2849 = vld [vmem:[#allocation13 + $0x650] sm:$0xff]
    %v2850 = vld [vmem:[#allocation13 + $0x658] sm:$0xff]
    %v2866 = vunpack.c.l.b16 %v2632
    %v2867 = vunpack.c.h.b16 %v2632
    %v2868 = vunpack.c.l.b16 %v2633
    %v2869 = vunpack.c.h.b16 %v2633
    %v2870 = vunpack.c.l.b16 %v2634
    %v2871 = vunpack.c.l.b16 %v2635
    %v2872 = vunpack.c.h.b16 %v2635
    %v2873 = vunpack.c.l.b16 %v2636
    %v2874 = vunpack.c.h.b16 %v2636
    %v2875 = vunpack.c.l.b16 %v2637
    %v2876 = vunpack.c.l.b16 %v2638
    %v2877 = vunpack.c.h.b16 %v2638
    %v2878 = vunpack.c.l.b16 %v2639
    %v2879 = vunpack.c.h.b16 %v2639
    %v2880 = vunpack.c.l.b16 %v2640
    %v2881 = vunpack.c.l.b16 %v2641
    %v2882 = vunpack.c.h.b16 %v2641
    %v2883 = vunpack.c.l.b16 %v2642
    %v2884 = vunpack.c.h.b16 %v2642
    %v2885 = vunpack.c.l.b16 %v2643
    %v2886 = vunpack.c.l.b16 %v2644
    %v2887 = vunpack.c.h.b16 %v2644
    %v2888 = vunpack.c.l.b16 %v2645
    %v2889 = vunpack.c.h.b16 %v2645
    %v2890 = vunpack.c.l.b16 %v2646
    %v2891 = vpack.c.b16 %v2871, %v2866
    %v2892 = vpack.c.b16 %v2872, %v2867
    %v2893 = vpack.c.b16 %v2873, %v2868
    %v2894 = vpack.c.b16 %v2874, %v2869
    %v2895 = vpack.c.b16 %v2875, %v2870
    %v2896 = vpack.c.b16 %v2881, %v2876
    %v2897 = vpack.c.b16 %v2882, %v2877
    %v2898 = vpack.c.b16 %v2883, %v2878
    %v2899 = vpack.c.b16 %v2884, %v2879
    %v2900 = vpack.c.b16 %v2885, %v2880
    %v2901 = vpack.c.b16 %v2886, %v2886
    %v2902 = vpack.c.b16 %v2887, %v2887
    %v2903 = vpack.c.b16 %v2888, %v2888
    %v2904 = vpack.c.b16 %v2889, %v2889
    %v2905 = vpack.c.b16 %v2890, %v2890
    %v3122 = vunpack.c.l.b16 %v2647
    %v3123 = vunpack.c.h.b16 %v2647
    %v3124 = vunpack.c.l.b16 %v2648
    %v3125 = vunpack.c.h.b16 %v2648
    %v3126 = vunpack.c.l.b16 %v2649
    %v3127 = vunpack.c.h.b16 %v2649
    %v3128 = vunpack.c.l.b16 %v2650
    %v3129 = vunpack.c.h.b16 %v2650
    %v3130 = vunpack.c.l.b16 %v2651
    %v3131 = vunpack.c.h.b16 %v2651
    %v3132 = vunpack.c.l.b16 %v2652
    %v3133 = vunpack.c.h.b16 %v2652
    %v3134 = vunpack.c.l.b16 %v2653
    %v3135 = vunpack.c.h.b16 %v2653
    %v3136 = vunpack.c.l.b16 %v2654
    %v3137 = vunpack.c.h.b16 %v2654
    %v3138 = vunpack.c.l.b16 %v2655
    %v3139 = vunpack.c.h.b16 %v2655
    %v3140 = vunpack.c.l.b16 %v2656
    %v3141 = vunpack.c.h.b16 %v2656
    %v3142 = vunpack.c.l.b16 %v2657
    %v3143 = vunpack.c.h.b16 %v2657
    %v3144 = vunpack.c.l.b16 %v2658
    %v3145 = vunpack.c.h.b16 %v2658
    %v3146 = vunpack.c.l.b16 %v2659
    %v3147 = vunpack.c.h.b16 %v2659
    %v3148 = vunpack.c.l.b16 %v2660
    %v3149 = vunpack.c.h.b16 %v2660
    %v3150 = vunpack.c.l.b16 %v2661
    %v3151 = vunpack.c.h.b16 %v2661
    %v3152 = vunpack.c.l.b16 %v2662
    %v3153 = vunpack.c.h.b16 %v2662
    %v3154 = vunpack.c.l.b16 %v2663
    %v3155 = vunpack.c.h.b16 %v2663
    %v3156 = vunpack.c.l.b16 %v2664
    %v3157 = vunpack.c.h.b16 %v2664
    %v3158 = vunpack.c.l.b16 %v2665
    %v3159 = vunpack.c.h.b16 %v2665
    %v3160 = vunpack.c.l.b16 %v2666
    %v3161 = vunpack.c.h.b16 %v2666
    %v3162 = vunpack.c.l.b16 %v2667
    %v3163 = vunpack.c.h.b16 %v2667
    %v3164 = vunpack.c.l.b16 %v2668
    %v3165 = vunpack.c.h.b16 %v2668
    %v3166 = vunpack.c.l.b16 %v2669
    %v3167 = vunpack.c.h.b16 %v2669
    %v3168 = vunpack.c.l.b16 %v2670
    %v3169 = vunpack.c.h.b16 %v2670
    %v3170 = vunpack.c.l.b16 %v2671
    %v3171 = vunpack.c.h.b16 %v2671
    %v3172 = vunpack.c.l.b16 %v2672
    %v3173 = vunpack.c.h.b16 %v2672
    %v3174 = vunpack.c.l.b16 %v2673
    %v3175 = vunpack.c.h.b16 %v2673
    %v3176 = vunpack.c.l.b16 %v2674
    %v3177 = vunpack.c.h.b16 %v2674
    %v3178 = vunpack.c.l.b16 %v2675
    %v3179 = vunpack.c.h.b16 %v2675
    %v3180 = vunpack.c.l.b16 %v2676
    %v3181 = vunpack.c.h.b16 %v2676
    %v3182 = vunpack.c.l.b16 %v2677
    %v3183 = vunpack.c.h.b16 %v2677
    %v3184 = vunpack.c.l.b16 %v2678
    %v3185 = vunpack.c.h.b16 %v2678
    %v3186 = vunpack.c.l.b16 %v2679
    %v3187 = vunpack.c.h.b16 %v2679
    %v3188 = vunpack.c.l.b16 %v2680
    %v3189 = vunpack.c.h.b16 %v2680
    %v3190 = vunpack.c.l.b16 %v2681
    %v3191 = vunpack.c.h.b16 %v2681
    %v3192 = vunpack.c.l.b16 %v2682
    %v3193 = vunpack.c.h.b16 %v2682
    %v3194 = vunpack.c.l.b16 %v2683
    %v3195 = vunpack.c.h.b16 %v2683
    %v3196 = vunpack.c.l.b16 %v2684
    %v3197 = vunpack.c.h.b16 %v2684
    %v3198 = vunpack.c.l.b16 %v2685
    %v3199 = vunpack.c.h.b16 %v2685
    %v3200 = vunpack.c.l.b16 %v2686
    %v3201 = vunpack.c.h.b16 %v2686
    %v3202 = vunpack.c.l.b16 %v2687
    %v3203 = vunpack.c.h.b16 %v2687
    %v3204 = vunpack.c.l.b16 %v2688
    %v3205 = vunpack.c.h.b16 %v2688
    %v3206 = vunpack.c.l.b16 %v2689
    %v3207 = vunpack.c.h.b16 %v2689
    %v3208 = vunpack.c.l.b16 %v2690
    %v3209 = vunpack.c.h.b16 %v2690
    %v3210 = vunpack.c.l.b16 %v2691
    %v3211 = vunpack.c.h.b16 %v2691
    %v3212 = vunpack.c.l.b16 %v2692
    %v3213 = vunpack.c.h.b16 %v2692
    %v3214 = vunpack.c.l.b16 %v2693
    %v3215 = vunpack.c.h.b16 %v2693
    %v3216 = vunpack.c.l.b16 %v2694
    %v3217 = vunpack.c.h.b16 %v2694
    %v3218 = vunpack.c.l.b16 %v2695
    %v3219 = vunpack.c.h.b16 %v2695
    %v3220 = vunpack.c.l.b16 %v2696
    %v3221 = vunpack.c.h.b16 %v2696
    %v3222 = vunpack.c.l.b16 %v2697
    %v3223 = vunpack.c.h.b16 %v2697
    %v3224 = vunpack.c.l.b16 %v2698
    %v3225 = vunpack.c.h.b16 %v2698
    %v3226 = vunpack.c.l.b16 %v2699
    %v3227 = vunpack.c.h.b16 %v2699
    %v3228 = vunpack.c.l.b16 %v2700
    %v3229 = vunpack.c.h.b16 %v2700
    %v3230 = vunpack.c.l.b16 %v2701
    %v3231 = vunpack.c.h.b16 %v2701
    %v3232 = vunpack.c.l.b16 %v2702
    %v3233 = vunpack.c.h.b16 %v2702
    %v3234 = vunpack.c.l.b16 %v2703
    %v3235 = vunpack.c.h.b16 %v2703
    %v3236 = vunpack.c.l.b16 %v2704
    %v3237 = vunpack.c.h.b16 %v2704
    %v3238 = vunpack.c.l.b16 %v2705
    %v3239 = vunpack.c.h.b16 %v2705
    %v3240 = vunpack.c.l.b16 %v2706
    %v3241 = vunpack.c.h.b16 %v2706
    %v3242 = vunpack.c.l.b16 %v2707
    %v3243 = vunpack.c.h.b16 %v2707
    %v3244 = vunpack.c.l.b16 %v2708
    %v3245 = vunpack.c.h.b16 %v2708
    %v3246 = vunpack.c.l.b16 %v2709
    %v3247 = vunpack.c.h.b16 %v2709
    %v3248 = vunpack.c.l.b16 %v2710
    %v3249 = vunpack.c.h.b16 %v2710
    %v3250 = vunpack.c.l.b16 %v2711
    %v3251 = vunpack.c.h.b16 %v2711
    %v3252 = vunpack.c.l.b16 %v2712
    %v3253 = vunpack.c.h.b16 %v2712
    %v3254 = vunpack.c.l.b16 %v2713
    %v3255 = vunpack.c.h.b16 %v2713
    %v3256 = vunpack.c.l.b16 %v2714
    %v3257 = vunpack.c.h.b16 %v2714
    %v3258 = vunpack.c.l.b16 %v2715
    %v3259 = vunpack.c.h.b16 %v2715
    %v3260 = vunpack.c.l.b16 %v2716
    %v3261 = vunpack.c.h.b16 %v2716
    %v3262 = vunpack.c.l.b16 %v2717
    %v3263 = vunpack.c.h.b16 %v2717
    %v3264 = vunpack.c.l.b16 %v2718
    %v3265 = vunpack.c.h.b16 %v2718
    %v3266 = vunpack.c.l.b16 %v2719
    %v3267 = vunpack.c.h.b16 %v2719
    %v3268 = vunpack.c.l.b16 %v2720
    %v3269 = vunpack.c.h.b16 %v2720
    %v3270 = vunpack.c.l.b16 %v2721
    %v3271 = vunpack.c.h.b16 %v2721
    %v3272 = vunpack.c.l.b16 %v2722
    %v3273 = vunpack.c.h.b16 %v2722
    %v3274 = vunpack.c.l.b16 %v2723
    %v3275 = vunpack.c.h.b16 %v2723
    %v3276 = vunpack.c.l.b16 %v2724
    %v3277 = vunpack.c.h.b16 %v2724
    %v3278 = vunpack.c.l.b16 %v2725
    %v3279 = vunpack.c.h.b16 %v2725
    %v3280 = vunpack.c.l.b16 %v2726
    %v3281 = vunpack.c.h.b16 %v2726
    %v3282 = vunpack.c.l.b16 %v2727
    %v3283 = vunpack.c.h.b16 %v2727
    %v3284 = vunpack.c.l.b16 %v2728
    %v3285 = vunpack.c.h.b16 %v2728
    %v3286 = vunpack.c.l.b16 %v2729
    %v3287 = vunpack.c.h.b16 %v2729
    %v3288 = vunpack.c.l.b16 %v2730
    %v3289 = vunpack.c.h.b16 %v2730
    %v3290 = vunpack.c.l.b16 %v2731
    %v3291 = vunpack.c.h.b16 %v2731
    %v3292 = vunpack.c.l.b16 %v2732
    %v3293 = vunpack.c.h.b16 %v2732
    %v3294 = vunpack.c.l.b16 %v2733
    %v3295 = vunpack.c.h.b16 %v2733
    %v3296 = vunpack.c.l.b16 %v2734
    %v3297 = vunpack.c.h.b16 %v2734
    %v3298 = vunpack.c.l.b16 %v2735
    %v3299 = vunpack.c.h.b16 %v2735
    %v3300 = vunpack.c.l.b16 %v2736
    %v3301 = vunpack.c.h.b16 %v2736
    %v3302 = vunpack.c.l.b16 %v2737
    %v3303 = vunpack.c.h.b16 %v2737
    %v3304 = vunpack.c.l.b16 %v2738
    %v3305 = vunpack.c.h.b16 %v2738
    %v3306 = vunpack.c.l.b16 %v2739
    %v3307 = vunpack.c.h.b16 %v2739
    %v3308 = vunpack.c.l.b16 %v2740
    %v3309 = vunpack.c.h.b16 %v2740
    %v3310 = vunpack.c.l.b16 %v2741
    %v3311 = vunpack.c.h.b16 %v2741
    %v3312 = vunpack.c.l.b16 %v2742
    %v3313 = vunpack.c.h.b16 %v2742
    %v3314 = vunpack.c.l.b16 %v2743
    %v3315 = vunpack.c.h.b16 %v2743
    %v3316 = vunpack.c.l.b16 %v2744
    %v3317 = vunpack.c.h.b16 %v2744
    %v3318 = vunpack.c.l.b16 %v2745
    %v3319 = vunpack.c.h.b16 %v2745
    %v3320 = vunpack.c.l.b16 %v2746
    %v3321 = vunpack.c.h.b16 %v2746
    %v3322 = vunpack.c.l.b16 %v2747
    %v3323 = vunpack.c.h.b16 %v2747
    %v3324 = vunpack.c.l.b16 %v2748
    %v3325 = vunpack.c.h.b16 %v2748
    %v3326 = vunpack.c.l.b16 %v2749
    %v3327 = vunpack.c.h.b16 %v2749
    %v3328 = vunpack.c.l.b16 %v2750
    %v3329 = vunpack.c.h.b16 %v2750
    %v3330 = vunpack.c.l.b16 %v2751
    %v3331 = vunpack.c.h.b16 %v2751
    %v3332 = vunpack.c.l.b16 %v2752
    %v3333 = vunpack.c.h.b16 %v2752
    %v3334 = vunpack.c.l.b16 %v2753
    %v3335 = vunpack.c.h.b16 %v2753
    %v3336 = vunpack.c.l.b16 %v2754
    %v3337 = vunpack.c.h.b16 %v2754
    %v3338 = vunpack.c.l.b16 %v2755
    %v3339 = vunpack.c.h.b16 %v2755
    %v3340 = vunpack.c.l.b16 %v2756
    %v3341 = vunpack.c.h.b16 %v2756
    %v3342 = vunpack.c.l.b16 %v2757
    %v3343 = vunpack.c.h.b16 %v2757
    %v3344 = vunpack.c.l.b16 %v2758
    %v3345 = vunpack.c.h.b16 %v2758
    %v3346 = vunpack.c.l.b16 %v2759
    %v3347 = vunpack.c.h.b16 %v2759
    %v3348 = vunpack.c.l.b16 %v2760
    %v3349 = vunpack.c.h.b16 %v2760
    %v3350 = vunpack.c.l.b16 %v2761
    %v3351 = vunpack.c.h.b16 %v2761
    %v3352 = vunpack.c.l.b16 %v2762
    %v3353 = vunpack.c.h.b16 %v2762
    %v3354 = vunpack.c.l.b16 %v2763
    %v3355 = vunpack.c.h.b16 %v2763
    %v3356 = vunpack.c.l.b16 %v2764
    %v3357 = vunpack.c.h.b16 %v2764
    %v3358 = vunpack.c.l.b16 %v2765
    %v3359 = vunpack.c.h.b16 %v2765
    %v3360 = vunpack.c.l.b16 %v2766
    %v3361 = vunpack.c.h.b16 %v2766
    %v3362 = vunpack.c.l.b16 %v2767
    %v3363 = vunpack.c.h.b16 %v2767
    %v3364 = vunpack.c.l.b16 %v2768
    %v3365 = vunpack.c.h.b16 %v2768
    %v3366 = vunpack.c.l.b16 %v2769
    %v3367 = vunpack.c.h.b16 %v2769
    %v3368 = vunpack.c.l.b16 %v2770
    %v3369 = vunpack.c.h.b16 %v2770
    %v3370 = vunpack.c.l.b16 %v2771
    %v3371 = vunpack.c.h.b16 %v2771
    %v3372 = vunpack.c.l.b16 %v2772
    %v3373 = vunpack.c.h.b16 %v2772
    %v3374 = vunpack.c.l.b16 %v2773
    %v3375 = vunpack.c.h.b16 %v2773
    %v3376 = vunpack.c.l.b16 %v2774
    %v3377 = vunpack.c.h.b16 %v2774
    %v3378 = vunpack.c.l.b16 %v2775
    %v3379 = vunpack.c.h.b16 %v2775
    %v3380 = vunpack.c.l.b16 %v2776
    %v3381 = vunpack.c.h.b16 %v2776
    %v3382 = vunpack.c.l.b16 %v2777
    %v3383 = vunpack.c.h.b16 %v2777
    %v3384 = vunpack.c.l.b16 %v2778
    %v3385 = vunpack.c.h.b16 %v2778
    %v3386 = vunpack.c.l.b16 %v2779
    %v3387 = vunpack.c.h.b16 %v2779
    %v3388 = vunpack.c.l.b16 %v2780
    %v3389 = vunpack.c.h.b16 %v2780
    %v3390 = vunpack.c.l.b16 %v2781
    %v3391 = vunpack.c.h.b16 %v2781
    %v3392 = vunpack.c.l.b16 %v2782
    %v3393 = vunpack.c.h.b16 %v2782
    %v3394 = vunpack.c.l.b16 %v2783
    %v3395 = vunpack.c.h.b16 %v2783
    %v3396 = vunpack.c.l.b16 %v2784
    %v3397 = vunpack.c.h.b16 %v2784
    %v3398 = vunpack.c.l.b16 %v2785
    %v3399 = vunpack.c.h.b16 %v2785
    %v3400 = vunpack.c.l.b16 %v2786
    %v3401 = vunpack.c.h.b16 %v2786
    %v3402 = vunpack.c.l.b16 %v2787
    %v3403 = vunpack.c.h.b16 %v2787
    %v3404 = vunpack.c.l.b16 %v2788
    %v3405 = vunpack.c.h.b16 %v2788
    %v3406 = vunpack.c.l.b16 %v2789
    %v3407 = vunpack.c.h.b16 %v2789
    %v3408 = vunpack.c.l.b16 %v2790
    %v3409 = vunpack.c.h.b16 %v2790
    %v3410 = vunpack.c.l.b16 %v2791
    %v3411 = vunpack.c.h.b16 %v2791
    %v3412 = vunpack.c.l.b16 %v2792
    %v3413 = vunpack.c.h.b16 %v2792
    %v3414 = vunpack.c.l.b16 %v2793
    %v3415 = vunpack.c.h.b16 %v2793
    %v3416 = vunpack.c.l.b16 %v2794
    %v3417 = vunpack.c.h.b16 %v2794
    %v3418 = vunpack.c.l.b16 %v2795
    %v3419 = vunpack.c.h.b16 %v2795
    %v3420 = vunpack.c.l.b16 %v2796
    %v3421 = vunpack.c.h.b16 %v2796
    %v3422 = vunpack.c.l.b16 %v2797
    %v3423 = vunpack.c.h.b16 %v2797
    %v3424 = vunpack.c.l.b16 %v2798
    %v3425 = vunpack.c.h.b16 %v2798
    %v3426 = vunpack.c.l.b16 %v2799
    %v3427 = vunpack.c.h.b16 %v2799
    %v3428 = vunpack.c.l.b16 %v2800
    %v3429 = vunpack.c.h.b16 %v2800
    %v3430 = vunpack.c.l.b16 %v2801
    %v3431 = vunpack.c.h.b16 %v2801
    %v3432 = vunpack.c.l.b16 %v2802
    %v3433 = vunpack.c.h.b16 %v2802
    %v3434 = vunpack.c.l.b16 %v2803
    %v3435 = vunpack.c.h.b16 %v2803
    %v3436 = vunpack.c.l.b16 %v2804
    %v3437 = vunpack.c.h.b16 %v2804
    %v3438 = vunpack.c.l.b16 %v2805
    %v3439 = vunpack.c.h.b16 %v2805
    %v3440 = vunpack.c.l.b16 %v2806
    %v3441 = vunpack.c.h.b16 %v2806
    %v3442 = vunpack.c.l.b16 %v2807
    %v3443 = vunpack.c.h.b16 %v2807
    %v3444 = vunpack.c.l.b16 %v2808
    %v3445 = vunpack.c.h.b16 %v2808
    %v3446 = vunpack.c.l.b16 %v2809
    %v3447 = vunpack.c.h.b16 %v2809
    %v3448 = vunpack.c.l.b16 %v2810
    %v3449 = vunpack.c.h.b16 %v2810
    %v3450 = vunpack.c.l.b16 %v2811
    %v3451 = vunpack.c.h.b16 %v2811
    %v3452 = vunpack.c.l.b16 %v2812
    %v3453 = vunpack.c.h.b16 %v2812
    %v3454 = vunpack.c.l.b16 %v2813
    %v3455 = vunpack.c.h.b16 %v2813
    %v3456 = vunpack.c.l.b16 %v2814
    %v3457 = vunpack.c.h.b16 %v2814
    %v3458 = vunpack.c.l.b16 %v2815
    %v3459 = vunpack.c.h.b16 %v2815
    %v3460 = vunpack.c.l.b16 %v2816
    %v3461 = vunpack.c.h.b16 %v2816
    %v3462 = vunpack.c.l.b16 %v2817
    %v3463 = vunpack.c.h.b16 %v2817
    %v3464 = vunpack.c.l.b16 %v2818
    %v3465 = vunpack.c.h.b16 %v2818
    %v3466 = vunpack.c.l.b16 %v2819
    %v3467 = vunpack.c.h.b16 %v2819
    %v3468 = vunpack.c.l.b16 %v2820
    %v3469 = vunpack.c.h.b16 %v2820
    %v3470 = vunpack.c.l.b16 %v2821
    %v3471 = vunpack.c.h.b16 %v2821
    %v3472 = vunpack.c.l.b16 %v2822
    %v3473 = vunpack.c.h.b16 %v2822
    %v3474 = vunpack.c.l.b16 %v2823
    %v3475 = vunpack.c.h.b16 %v2823
    %v3476 = vunpack.c.l.b16 %v2824
    %v3477 = vunpack.c.h.b16 %v2824
    %v3478 = vunpack.c.l.b16 %v2825
    %v3479 = vunpack.c.h.b16 %v2825
    %v3480 = vunpack.c.l.b16 %v2826
    %v3481 = vunpack.c.h.b16 %v2826
    %v3482 = vunpack.c.l.b16 %v2827
    %v3483 = vunpack.c.h.b16 %v2827
    %v3484 = vunpack.c.l.b16 %v2828
    %v3485 = vunpack.c.h.b16 %v2828
    %v3486 = vunpack.c.l.b16 %v2829
    %v3487 = vunpack.c.h.b16 %v2829
    %v3488 = vunpack.c.l.b16 %v2830
    %v3489 = vunpack.c.h.b16 %v2830
    %v3490 = vunpack.c.l.b16 %v2831
    %v3491 = vunpack.c.h.b16 %v2831
    %v3492 = vunpack.c.l.b16 %v2832
    %v3493 = vunpack.c.h.b16 %v2832
    %v3494 = vunpack.c.l.b16 %v2833
    %v3495 = vunpack.c.h.b16 %v2833
    %v3496 = vunpack.c.l.b16 %v2834
    %v3497 = vunpack.c.h.b16 %v2834
    %v3498 = vunpack.c.l.b16 %v2835
    %v3499 = vunpack.c.h.b16 %v2835
    %v3500 = vunpack.c.l.b16 %v2836
    %v3501 = vunpack.c.h.b16 %v2836
    %v3502 = vunpack.c.l.b16 %v2837
    %v3503 = vunpack.c.h.b16 %v2837
    %v3504 = vunpack.c.l.b16 %v2838
    %v3505 = vunpack.c.h.b16 %v2838
    %v3506 = vunpack.c.l.b16 %v2839
    %v3507 = vunpack.c.h.b16 %v2839
    %v3508 = vunpack.c.l.b16 %v2840
    %v3509 = vunpack.c.h.b16 %v2840
    %v3510 = vunpack.c.l.b16 %v2841
    %v3511 = vunpack.c.h.b16 %v2841
    %v3512 = vunpack.c.l.b16 %v2842
    %v3513 = vunpack.c.h.b16 %v2842
    %v3514 = vunpack.c.l.b16 %v2843
    %v3515 = vunpack.c.h.b16 %v2843
    %v3516 = vunpack.c.l.b16 %v2844
    %v3517 = vunpack.c.h.b16 %v2844
    %v3518 = vunpack.c.l.b16 %v2845
    %v3519 = vunpack.c.h.b16 %v2845
    %v3520 = vunpack.c.l.b16 %v2846
    %v3521 = vunpack.c.h.b16 %v2846
    %v3522 = vunpack.c.l.b16 %v2847
    %v3523 = vunpack.c.h.b16 %v2847
    %v3524 = vunpack.c.l.b16 %v2848
    %v3525 = vunpack.c.h.b16 %v2848
    %v3526 = vunpack.c.l.b16 %v2849
    %v3527 = vunpack.c.h.b16 %v2849
    %v3528 = vunpack.c.l.b16 %v2850
    %v3529 = vunpack.c.h.b16 %v2850
    %v3530 = vpack.c.b16 %v3128, %v3122
    %v3531 = vpack.c.b16 %v3129, %v3123
    %v3532 = vpack.c.b16 %v3130, %v3124
    %v3533 = vpack.c.b16 %v3131, %v3125
    %v3534 = vpack.c.b16 %v3132, %v3126
    %v3535 = vpack.c.b16 %v3133, %v3127
    %v3536 = vpack.c.b16 %v3140, %v3134
    %v3537 = vpack.c.b16 %v3141, %v3135
    %v3538 = vpack.c.b16 %v3142, %v3136
    %v3539 = vpack.c.b16 %v3143, %v3137
    %v3540 = vpack.c.b16 %v3144, %v3138
    %v3541 = vpack.c.b16 %v3145, %v3139
    %v3542 = vpack.c.b16 %v3152, %v3146
    %v3543 = vpack.c.b16 %v3153, %v3147
    %v3544 = vpack.c.b16 %v3154, %v3148
    %v3545 = vpack.c.b16 %v3155, %v3149
    %v3546 = vpack.c.b16 %v3156, %v3150
    %v3547 = vpack.c.b16 %v3157, %v3151
    %v3548 = vpack.c.b16 %v3164, %v3158
    %v3549 = vpack.c.b16 %v3165, %v3159
    %v3550 = vpack.c.b16 %v3166, %v3160
    %v3551 = vpack.c.b16 %v3167, %v3161
    %v3552 = vpack.c.b16 %v3168, %v3162
    %v3553 = vpack.c.b16 %v3169, %v3163
    %v3554 = vpack.c.b16 %v3176, %v3170
    %v3555 = vpack.c.b16 %v3177, %v3171
    %v3556 = vpack.c.b16 %v3178, %v3172
    %v3557 = vpack.c.b16 %v3179, %v3173
    %v3558 = vpack.c.b16 %v3180, %v3174
    %v3559 = vpack.c.b16 %v3181, %v3175
    %v3560 = vpack.c.b16 %v3188, %v3182
    %v3561 = vpack.c.b16 %v3189, %v3183
    %v3562 = vpack.c.b16 %v3190, %v3184
    %v3563 = vpack.c.b16 %v3191, %v3185
    %v3564 = vpack.c.b16 %v3192, %v3186
    %v3565 = vpack.c.b16 %v3193, %v3187
    %v3566 = vpack.c.b16 %v3200, %v3194
    %v3567 = vpack.c.b16 %v3201, %v3195
    %v3568 = vpack.c.b16 %v3202, %v3196
    %v3569 = vpack.c.b16 %v3203, %v3197
    %v3570 = vpack.c.b16 %v3204, %v3198
    %v3571 = vpack.c.b16 %v3205, %v3199
    %v3572 = vpack.c.b16 %v3212, %v3206
    %v3573 = vpack.c.b16 %v3213, %v3207
    %v3574 = vpack.c.b16 %v3214, %v3208
    %v3575 = vpack.c.b16 %v3215, %v3209
    %v3576 = vpack.c.b16 %v3216, %v3210
    %v3577 = vpack.c.b16 %v3217, %v3211
    %v3578 = vpack.c.b16 %v3224, %v3218
    %v3579 = vpack.c.b16 %v3225, %v3219
    %v3580 = vpack.c.b16 %v3226, %v3220
    %v3581 = vpack.c.b16 %v3227, %v3221
    %v3582 = vpack.c.b16 %v3228, %v3222
    %v3583 = vpack.c.b16 %v3229, %v3223
    %v3584 = vpack.c.b16 %v3236, %v3230
    %v3585 = vpack.c.b16 %v3237, %v3231
    %v3586 = vpack.c.b16 %v3238, %v3232
    %v3587 = vpack.c.b16 %v3239, %v3233
    %v3588 = vpack.c.b16 %v3240, %v3234
    %v3589 = vpack.c.b16 %v3241, %v3235
    %v3590 = vpack.c.b16 %v3248, %v3242
    %v3591 = vpack.c.b16 %v3249, %v3243
    %v3592 = vpack.c.b16 %v3250, %v3244
    %v3593 = vpack.c.b16 %v3251, %v3245
    %v3594 = vpack.c.b16 %v3252, %v3246
    %v3595 = vpack.c.b16 %v3253, %v3247
    %v3596 = vpack.c.b16 %v3260, %v3254
    %v3597 = vpack.c.b16 %v3261, %v3255
    %v3598 = vpack.c.b16 %v3262, %v3256
    %v3599 = vpack.c.b16 %v3263, %v3257
    %v3600 = vpack.c.b16 %v3264, %v3258
    %v3601 = vpack.c.b16 %v3265, %v3259
    %v3602 = vpack.c.b16 %v3272, %v3266
    %v3603 = vpack.c.b16 %v3273, %v3267
    %v3604 = vpack.c.b16 %v3274, %v3268
    %v3605 = vpack.c.b16 %v3275, %v3269
    %v3606 = vpack.c.b16 %v3276, %v3270
    %v3607 = vpack.c.b16 %v3277, %v3271
    %v3608 = vpack.c.b16 %v3284, %v3278
    %v3609 = vpack.c.b16 %v3285, %v3279
    %v3610 = vpack.c.b16 %v3286, %v3280
    %v3611 = vpack.c.b16 %v3287, %v3281
    %v3612 = vpack.c.b16 %v3288, %v3282
    %v3613 = vpack.c.b16 %v3289, %v3283
    %v3614 = vpack.c.b16 %v3296, %v3290
    %v3615 = vpack.c.b16 %v3297, %v3291
    %v3616 = vpack.c.b16 %v3298, %v3292
    %v3617 = vpack.c.b16 %v3299, %v3293
    %v3618 = vpack.c.b16 %v3300, %v3294
    %v3619 = vpack.c.b16 %v3301, %v3295
    %v3620 = vpack.c.b16 %v3308, %v3302
    %v3621 = vpack.c.b16 %v3309, %v3303
    %v3622 = vpack.c.b16 %v3310, %v3304
    %v3623 = vpack.c.b16 %v3311, %v3305
    %v3624 = vpack.c.b16 %v3312, %v3306
    %v3625 = vpack.c.b16 %v3313, %v3307
    %v3626 = vpack.c.b16 %v3320, %v3314
    %v3627 = vpack.c.b16 %v3321, %v3315
    %v3628 = vpack.c.b16 %v3322, %v3316
    %v3629 = vpack.c.b16 %v3323, %v3317
    %v3630 = vpack.c.b16 %v3324, %v3318
    %v3631 = vpack.c.b16 %v3325, %v3319
    %v3632 = vpack.c.b16 %v3332, %v3326
    %v3633 = vpack.c.b16 %v3333, %v3327
    %v3634 = vpack.c.b16 %v3334, %v3328
    %v3635 = vpack.c.b16 %v3335, %v3329
    %v3636 = vpack.c.b16 %v3336, %v3330
    %v3637 = vpack.c.b16 %v3337, %v3331
    %v3638 = vpack.c.b16 %v3344, %v3338
    %v3639 = vpack.c.b16 %v3345, %v3339
    %v3640 = vpack.c.b16 %v3346, %v3340
    %v3641 = vpack.c.b16 %v3347, %v3341
    %v3642 = vpack.c.b16 %v3348, %v3342
    %v3643 = vpack.c.b16 %v3349, %v3343
    %v3644 = vpack.c.b16 %v3356, %v3350
    %v3645 = vpack.c.b16 %v3357, %v3351
    %v3646 = vpack.c.b16 %v3358, %v3352
    %v3647 = vpack.c.b16 %v3359, %v3353
    %v3648 = vpack.c.b16 %v3360, %v3354
    %v3649 = vpack.c.b16 %v3361, %v3355
    %v3650 = vpack.c.b16 %v3368, %v3362
    %v3651 = vpack.c.b16 %v3369, %v3363
    %v3652 = vpack.c.b16 %v3370, %v3364
    %v3653 = vpack.c.b16 %v3371, %v3365
    %v3654 = vpack.c.b16 %v3372, %v3366
    %v3655 = vpack.c.b16 %v3373, %v3367
    %v3656 = vpack.c.b16 %v3380, %v3374
    %v3657 = vpack.c.b16 %v3381, %v3375
    %v3658 = vpack.c.b16 %v3382, %v3376
    %v3659 = vpack.c.b16 %v3383, %v3377
    %v3660 = vpack.c.b16 %v3384, %v3378
    %v3661 = vpack.c.b16 %v3385, %v3379
    %v3662 = vpack.c.b16 %v3392, %v3386
    %v3663 = vpack.c.b16 %v3393, %v3387
    %v3664 = vpack.c.b16 %v3394, %v3388
    %v3665 = vpack.c.b16 %v3395, %v3389
    %v3666 = vpack.c.b16 %v3396, %v3390
    %v3667 = vpack.c.b16 %v3397, %v3391
    %v3668 = vpack.c.b16 %v3404, %v3398
    %v3669 = vpack.c.b16 %v3405, %v3399
    %v3670 = vpack.c.b16 %v3406, %v3400
    %v3671 = vpack.c.b16 %v3407, %v3401
    %v3672 = vpack.c.b16 %v3408, %v3402
    %v3673 = vpack.c.b16 %v3409, %v3403
    %v3674 = vpack.c.b16 %v3416, %v3410
    %v3675 = vpack.c.b16 %v3417, %v3411
    %v3676 = vpack.c.b16 %v3418, %v3412
    %v3677 = vpack.c.b16 %v3419, %v3413
    %v3678 = vpack.c.b16 %v3420, %v3414
    %v3679 = vpack.c.b16 %v3421, %v3415
    %v3680 = vpack.c.b16 %v3428, %v3422
    %v3681 = vpack.c.b16 %v3429, %v3423
    %v3682 = vpack.c.b16 %v3430, %v3424
    %v3683 = vpack.c.b16 %v3431, %v3425
    %v3684 = vpack.c.b16 %v3432, %v3426
    %v3685 = vpack.c.b16 %v3433, %v3427
    %v3686 = vpack.c.b16 %v3440, %v3434
    %v3687 = vpack.c.b16 %v3441, %v3435
    %v3688 = vpack.c.b16 %v3442, %v3436
    %v3689 = vpack.c.b16 %v3443, %v3437
    %v3690 = vpack.c.b16 %v3444, %v3438
    %v3691 = vpack.c.b16 %v3445, %v3439
    %v3692 = vpack.c.b16 %v3452, %v3446
    %v3693 = vpack.c.b16 %v3453, %v3447
    %v3694 = vpack.c.b16 %v3454, %v3448
    %v3695 = vpack.c.b16 %v3455, %v3449
    %v3696 = vpack.c.b16 %v3456, %v3450
    %v3697 = vpack.c.b16 %v3457, %v3451
    %v3698 = vpack.c.b16 %v3464, %v3458
    %v3699 = vpack.c.b16 %v3465, %v3459
    %v3700 = vpack.c.b16 %v3466, %v3460
    %v3701 = vpack.c.b16 %v3467, %v3461
    %v3702 = vpack.c.b16 %v3468, %v3462
    %v3703 = vpack.c.b16 %v3469, %v3463
    %v3704 = vpack.c.b16 %v3476, %v3470
    %v3705 = vpack.c.b16 %v3477, %v3471
    %v3706 = vpack.c.b16 %v3478, %v3472
    %v3707 = vpack.c.b16 %v3479, %v3473
    %v3708 = vpack.c.b16 %v3480, %v3474
    %v3709 = vpack.c.b16 %v3481, %v3475
    %v3710 = vpack.c.b16 %v3488, %v3482
    %v3711 = vpack.c.b16 %v3489, %v3483
    %v3712 = vpack.c.b16 %v3490, %v3484
    %v3713 = vpack.c.b16 %v3491, %v3485
    %v3714 = vpack.c.b16 %v3492, %v3486
    %v3715 = vpack.c.b16 %v3493, %v3487
    %v3716 = vpack.c.b16 %v3500, %v3494
    %v3717 = vpack.c.b16 %v3501, %v3495
    %v3718 = vpack.c.b16 %v3502, %v3496
    %v3719 = vpack.c.b16 %v3503, %v3497
    %v3720 = vpack.c.b16 %v3504, %v3498
    %v3721 = vpack.c.b16 %v3505, %v3499
    %v3722 = vpack.c.b16 %v3512, %v3506
    %v3723 = vpack.c.b16 %v3513, %v3507
    %v3724 = vpack.c.b16 %v3514, %v3508
    %v3725 = vpack.c.b16 %v3515, %v3509
    %v3726 = vpack.c.b16 %v3516, %v3510
    %v3727 = vpack.c.b16 %v3517, %v3511
    %v3728 = vpack.c.b16 %v3524, %v3518
    %v3729 = vpack.c.b16 %v3525, %v3519
    %v3730 = vpack.c.b16 %v3526, %v3520
    %v3731 = vpack.c.b16 %v3527, %v3521
    %v3732 = vpack.c.b16 %v3528, %v3522
    %v3733 = vpack.c.b16 %v3529, %v3523
    %vm3938 = vcmask 261120
    %v3940 = vsel %vm3938, %v2895, 0
    %v3943 = vsel %vm3938, %v2900, 0
    %v3946 = vsel %vm3938, %v2905, 0
    %3948 = vmatprep.subr.bf16.mxu0 %v3531
    %3949 = vmatpush1.bf16.msra.mxu0 %v3530
    %3950 = vmatprep.subr.bf16.mxu0 %v3537
    %3951 = vmatpush1.bf16.msra.mxu0 %v3536
    %3952 = vmatprep.subr.bf16.mxu0 %v3543
    %3953 = vmatpush1.bf16.msra.mxu0 %v3542
    %3954 = vmatprep.subr.bf16.mxu0 %v3549
    %3955 = vmatpush1.bf16.msra.mxu0 %v3548
    %3956 = vmatprep.subr.bf16.mxu0 %v3555
    %3957 = vmatpush1.bf16.msra.mxu0 %v3554
    %3958 = vmatprep.subr.bf16.mxu0 %v3561
    %3959 = vmatpush1.bf16.msra.mxu0 %v3560
    %3960 = vmatprep.subr.bf16.mxu0 %v3567
    %3961 = vmatpush1.bf16.msra.mxu0 %v3566
    %3962 = vmatprep.subr.bf16.mxu0 %v3573
    %3963 = vmatpush1.bf16.msra.mxu0 %v3572
    %3964 = vmatprep.subr.bf16.mxu0 %v3579
    %3965 = vmatpush1.bf16.msra.mxu0 %v3578
    %3966 = vmatprep.subr.bf16.mxu0 %v3585
    %3967 = vmatpush1.bf16.msra.mxu0 %v3584
    %3968 = vmatprep.subr.bf16.mxu0 %v3591
    %3969 = vmatpush1.bf16.msra.mxu0 %v3590
    %3970 = vmatprep.subr.bf16.mxu0 %v3597
    %3971 = vmatpush1.bf16.msra.mxu0 %v3596
    %3972 = vmatprep.subr.bf16.mxu0 %v3603
    %3973 = vmatpush1.bf16.msra.mxu0 %v3602
    %3974 = vmatprep.subr.bf16.mxu0 %v3609
    %3975 = vmatpush1.bf16.msra.mxu0 %v3608
    %3976 = vmatprep.subr.bf16.mxu0 %v3615
    %3977 = vmatpush1.bf16.msra.mxu0 %v3614
    %3978 = vmatprep.subr.bf16.mxu0 %v3621
    %3979 = vmatpush1.bf16.msra.mxu0 %v3620
    %3980 = vmatprep.mubr.bf16.mxu0 %v2892
    %3981 = vmatmul.mubr.bf16.gmra.mrb[0].mxu0 %v2891
    %v3982 = vpop.f32.mrb[0].mxu0
    %v3983 = vadd.f32 0.0, %v3982
    %v3984 = vpop.f32.mrb[0].mxu0
    %v3985 = vadd.f32 0.0, %v3984
    %v3986 = vpop.f32.mrb[0].mxu0
    %v3987 = vadd.f32 0.0, %v3986
    %v3988 = vpop.f32.mrb[0].mxu0
    %v3989 = vadd.f32 0.0, %v3988
    %3990 = vmatprep.mubr.bf16.mxu0 %v2897
    %3991 = vmatmul.mubr.bf16.gmra.mrb[0].mxu0 %v2896
    %v3992 = vpop.f32.mrb[0].mxu0
    %v3993 = vadd.f32 0.0, %v3992
    %v3994 = vpop.f32.mrb[0].mxu0
    %v3995 = vadd.f32 0.0, %v3994
    %v3996 = vpop.f32.mrb[0].mxu0
    %v3997 = vadd.f32 0.0, %v3996
    %v3998 = vpop.f32.mrb[0].mxu0
    %v3999 = vadd.f32 0.0, %v3998
    %4000 = vmatprep.mubr.bf16.mxu0 %v2902
    %4001 = vmatmul.mubr.bf16.gmra.mrb[0].mxu0 %v2901
    %v4002 = vpop.f32.mrb[0].mxu0
    %v4003 = vadd.f32 0.0, %v4002
    %v4004 = vpop.f32.mrb[0].mxu0
    %v4005 = vadd.f32 0.0, %v4004
    %v4006 = vpop.f32.mrb[0].mxu0
    %v4007 = vpop.f32.mrb[0].mxu0
    %4008 = vdwg.mxu0
    %4009 = vmatprep.subr.bf16.mxu0 %v3627
    %4010 = vmatpush1.bf16.msra.mxu0 %v3626
    %4011 = vmatprep.subr.bf16.mxu0 %v3633
    %4012 = vmatpush1.bf16.msra.mxu0 %v3632
    %4013 = vmatprep.subr.bf16.mxu0 %v3639
    %4014 = vmatpush1.bf16.msra.mxu0 %v3638
    %4015 = vmatprep.subr.bf16.mxu0 %v3645
    %4016 = vmatpush1.bf16.msra.mxu0 %v3644
    %4017 = vmatprep.subr.bf16.mxu0 %v3651
    %4018 = vmatpush1.bf16.msra.mxu0 %v3650
    %4019 = vmatprep.subr.bf16.mxu0 %v3657
    %4020 = vmatpush1.bf16.msra.mxu0 %v3656
    %4021 = vmatprep.subr.bf16.mxu0 %v3663
    %4022 = vmatpush1.bf16.msra.mxu0 %v3662
    %4023 = vmatprep.subr.bf16.mxu0 %v3669
    %4024 = vmatpush1.bf16.msra.mxu0 %v3668
    %4025 = vmatprep.subr.bf16.mxu0 %v3675
    %4026 = vmatpush1.bf16.msra.mxu0 %v3674
    %4027 = vmatprep.subr.bf16.mxu0 %v3681
    %4028 = vmatpush1.bf16.msra.mxu0 %v3680
    %4029 = vmatprep.subr.bf16.mxu0 %v3687
    %4030 = vmatpush1.bf16.msra.mxu0 %v3686
    %4031 = vmatprep.subr.bf16.mxu0 %v3693
    %4032 = vmatpush1.bf16.msra.mxu0 %v3692
    %4033 = vmatprep.subr.bf16.mxu0 %v3699
    %4034 = vmatpush1.bf16.msra.mxu0 %v3698
    %4035 = vmatprep.subr.bf16.mxu0 %v3705
    %4036 = vmatpush1.bf16.msra.mxu0 %v3704
    %4037 = vmatprep.subr.bf16.mxu0 %v3711
    %4038 = vmatpush1.bf16.msra.mxu0 %v3710
    %4039 = vmatprep.subr.bf16.mxu0 %v3717
    %4040 = vmatpush1.bf16.msra.mxu0 %v3716
    %4041 = vmatprep.mubr.bf16.mxu0 %v2894
    %4042 = vmatmul.mubr.bf16.gmra.mrb[0].mxu0 %v2893
    %v4043 = vpop.f32.mrb[0].mxu0
    %v4044 = vadd.f32 %v3983, %v4043
    %v4045 = vpop.f32.mrb[0].mxu0
    %v4046 = vadd.f32 %v3985, %v4045
    %v4047 = vpop.f32.mrb[0].mxu0
    %v4048 = vadd.f32 %v3987, %v4047
    %v4049 = vpop.f32.mrb[0].mxu0
    %v4050 = vadd.f32 %v3989, %v4049
    %4051 = vmatprep.mubr.bf16.mxu0 %v2899
    %4052 = vmatmul.mubr.bf16.gmra.mrb[0].mxu0 %v2898
    %v4053 = vpop.f32.mrb[0].mxu0
    %v4054 = vadd.f32 %v3993, %v4053
    %v4055 = vpop.f32.mrb[0].mxu0
    %v4056 = vadd.f32 %v3995, %v4055
    %v4057 = vpop.f32.mrb[0].mxu0
    %v4058 = vadd.f32 %v3997, %v4057
    %v4059 = vpop.f32.mrb[0].mxu0
    %v4060 = vadd.f32 %v3999, %v4059
    %4061 = vmatprep.mubr.bf16.mxu0 %v2904
    %4062 = vmatmul.mubr.bf16.gmra.mrb[0].mxu0 %v2903
    %v4063 = vpop.f32.mrb[0].mxu0
    %v4064 = vadd.f32 %v4003, %v4063
    %v4065 = vpop.f32.mrb[0].mxu0
    %v4066 = vadd.f32 %v4005, %v4065
    %v4067 = vpop.f32.mrb[0].mxu0
    %v4068 = vpop.f32.mrb[0].mxu0
    %4069 = vdwg.mxu0
    %4070 = vmatprep.subr.bf16.mxu0 %v3723
    %4071 = vmatpush1.bf16.msra.mxu0 %v3722
    %4072 = vmatprep.subr.bf16.mxu0 %v3729
    %4073 = vmatpush1.bf16.msra.mxu0 %v3728
    %4074 = vmatprep.subr.bf16.mxu0 0
    %4075 = vmatpush1.bf16.msra.mxu0 0
    %4076 = vmatprep.subr.bf16.mxu0 0
    %4077 = vmatpush1.bf16.msra.mxu0 0
    %4078 = vmatprep.subr.bf16.mxu0 0
    %4079 = vmatpush1.bf16.msra.mxu0 0
    %4080 = vmatprep.subr.bf16.mxu0 0
    %4081 = vmatpush1.bf16.msra.mxu0 0
    %4082 = vmatprep.subr.bf16.mxu0 0
    %4083 = vmatpush1.bf16.msra.mxu0 0
    %4084 = vmatprep.subr.bf16.mxu0 0
    %4085 = vmatpush1.bf16.msra.mxu0 0
    %4086 = vmatprep.subr.bf16.mxu0 0
    %4087 = vmatpush1.bf16.msra.mxu0 0
    %4088 = vmatprep.subr.bf16.mxu0 0
    %4089 = vmatpush1.bf16.msra.mxu0 0
    %4090 = vmatprep.subr.bf16.mxu0 0
    %4091 = vmatpush1.bf16.msra.mxu0 0
    %4092 = vmatprep.subr.bf16.mxu0 0
    %4093 = vmatpush1.bf16.msra.mxu0 0
    %4094 = vmatprep.subr.bf16.mxu0 0
    %4095 = vmatpush1.bf16.msra.mxu0 0
    %4096 = vmatprep.subr.bf16.mxu0 0
    %4097 = vmatpush1.bf16.msra.mxu0 0
    %4098 = vmatprep.subr.bf16.mxu0 0
    %4099 = vmatpush1.bf16.msra.mxu0 0
    %4100 = vmatprep.subr.bf16.mxu0 0
    %4101 = vmatpush1.bf16.msra.mxu0 0
    %4102 = vmatprep.mubr.bf16.mxu0 0
    %4103 = vmatmul.mubr.bf16.gmra.mrb[0].mxu0 %v3940
    %v4104 = vpop.f32.mrb[0].mxu0
    %v4105 = vadd.f32 %v4044, %v4104
    %v4106 = vpop.f32.mrb[0].mxu0
    %v4107 = vadd.f32 %v4046, %v4106
    %v4108 = vpop.f32.mrb[0].mxu0
    %v4109 = vadd.f32 %v4048, %v4108
    %v4110 = vpop.f32.mrb[0].mxu0
    %v4111 = vadd.f32 %v4050, %v4110
    %4112 = vmatprep.mubr.bf16.mxu0 0
    %4113 = vmatmul.mubr.bf16.gmra.mrb[0].mxu0 %v3943
    %v4114 = vpop.f32.mrb[0].mxu0
    %v4115 = vadd.f32 %v4054, %v4114
    %v4116 = vpop.f32.mrb[0].mxu0
    %v4117 = vadd.f32 %v4056, %v4116
    %v4118 = vpop.f32.mrb[0].mxu0
    %v4119 = vadd.f32 %v4058, %v4118
    %v4120 = vpop.f32.mrb[0].mxu0
    %v4121 = vadd.f32 %v4060, %v4120
    %4122 = vmatprep.mubr.bf16.mxu0 0
    %4123 = vmatmul.mubr.bf16.gmra.mrb[0].mxu0 %v3946
    %v4124 = vpop.f32.mrb[0].mxu0
    %v4125 = vadd.f32 %v4064, %v4124
    %v4126 = vpop.f32.mrb[0].mxu0
    %v4127 = vadd.f32 %v4066, %v4126
    %v4128 = vpop.f32.mrb[0].mxu0
    %v4129 = vpop.f32.mrb[0].mxu0
    %4130 = vdwg.mxu0
    %4131 = vmatprep.subr.bf16.mxu0 %v3533
    %4132 = vmatpush1.bf16.msra.mxu0 %v3532
    %4133 = vmatprep.subr.bf16.mxu0 %v3539
    %4134 = vmatpush1.bf16.msra.mxu0 %v3538
    %4135 = vmatprep.subr.bf16.mxu0 %v3545
    %4136 = vmatpush1.bf16.msra.mxu0 %v3544
    %4137 = vmatprep.subr.bf16.mxu0 %v3551
    %4138 = vmatpush1.bf16.msra.mxu0 %v3550
    %4139 = vmatprep.subr.bf16.mxu0 %v3557
    %4140 = vmatpush1.bf16.msra.mxu0 %v3556
    %4141 = vmatprep.subr.bf16.mxu0 %v3563
    %4142 = vmatpush1.bf16.msra.mxu0 %v3562
    %4143 = vmatprep.subr.bf16.mxu0 %v3569
    %4144 = vmatpush1.bf16.msra.mxu0 %v3568
    %4145 = vmatprep.subr.bf16.mxu0 %v3575
    %4146 = vmatpush1.bf16.msra.mxu0 %v3574
    %4147 = vmatprep.subr.bf16.mxu0 %v3581
    %4148 = vmatpush1.bf16.msra.mxu0 %v3580
    %4149 = vmatprep.subr.bf16.mxu0 %v3587
    %4150 = vmatpush1.bf16.msra.mxu0 %v3586
    %4151 = vmatprep.subr.bf16.mxu0 %v3593
    %4152 = vmatpush1.bf16.msra.mxu0 %v3592
    %4153 = vmatprep.subr.bf16.mxu0 %v3599
    %4154 = vmatpush1.bf16.msra.mxu0 %v3598
    %4155 = vmatprep.subr.bf16.mxu0 %v3605
    %4156 = vmatpush1.bf16.msra.mxu0 %v3604
    %4157 = vmatprep.subr.bf16.mxu0 %v3611
    %4158 = vmatpush1.bf16.msra.mxu0 %v3610
    %4159 = vmatprep.subr.bf16.mxu0 %v3617
    %4160 = vmatpush1.bf16.msra.mxu0 %v3616
    %4161 = vmatprep.subr.bf16.mxu0 %v3623
    %4162 = vmatpush1.bf16.msra.mxu0 %v3622
    %4163 = vmatprep.mubr.bf16.mxu0 %v2892
    %4164 = vmatmul.mubr.bf16.gmra.mrb[0].mxu0 %v2891
    %v4165 = vpop.f32.mrb[0].mxu0
    %v4166 = vadd.f32 0.0, %v4165
    %v4167 = vpop.f32.mrb[0].mxu0
    %v4168 = vadd.f32 0.0, %v4167
    %v4169 = vpop.f32.mrb[0].mxu0
    %v4170 = vadd.f32 0.0, %v4169
    %v4171 = vpop.f32.mrb[0].mxu0
    %v4172 = vadd.f32 0.0, %v4171
    %4173 = vmatprep.mubr.bf16.mxu0 %v2897
    %4174 = vmatmul.mubr.bf16.gmra.mrb[0].mxu0 %v2896
    %v4175 = vpop.f32.mrb[0].mxu0
    %v4176 = vadd.f32 0.0, %v4175
    %v4177 = vpop.f32.mrb[0].mxu0
    %v4178 = vadd.f32 0.0, %v4177
    %v4179 = vpop.f32.mrb[0].mxu0
    %v4180 = vadd.f32 0.0, %v4179
    %v4181 = vpop.f32.mrb[0].mxu0
    %v4182 = vadd.f32 0.0, %v4181
    %4183 = vmatprep.mubr.bf16.mxu0 %v2902
    %4184 = vmatmul.mubr.bf16.gmra.mrb[0].mxu0 %v2901
    %v4185 = vpop.f32.mrb[0].mxu0
    %v4186 = vadd.f32 0.0, %v4185
    %v4187 = vpop.f32.mrb[0].mxu0
    %v4188 = vadd.f32 0.0, %v4187
    %v4189 = vpop.f32.mrb[0].mxu0
    %v4190 = vpop.f32.mrb[0].mxu0
    %4191 = vdwg.mxu0
    %4192 = vmatprep.subr.bf16.mxu0 %v3629
    %4193 = vmatpush1.bf16.msra.mxu0 %v3628
    %4194 = vmatprep.subr.bf16.mxu0 %v3635
    %4195 = vmatpush1.bf16.msra.mxu0 %v3634
    %4196 = vmatprep.subr.bf16.mxu0 %v3641
    %4197 = vmatpush1.bf16.msra.mxu0 %v3640
    %4198 = vmatprep.subr.bf16.mxu0 %v3647
    %4199 = vmatpush1.bf16.msra.mxu0 %v3646
    %4200 = vmatprep.subr.bf16.mxu0 %v3653
    %4201 = vmatpush1.bf16.msra.mxu0 %v3652
    %4202 = vmatprep.subr.bf16.mxu0 %v3659
    %4203 = vmatpush1.bf16.msra.mxu0 %v3658
    %4204 = vmatprep.subr.bf16.mxu0 %v3665
    %4205 = vmatpush1.bf16.msra.mxu0 %v3664
    %4206 = vmatprep.subr.bf16.mxu0 %v3671
    %4207 = vmatpush1.bf16.msra.mxu0 %v3670
    %4208 = vmatprep.subr.bf16.mxu0 %v3677
    %4209 = vmatpush1.bf16.msra.mxu0 %v3676
    %4210 = vmatprep.subr.bf16.mxu0 %v3683
    %4211 = vmatpush1.bf16.msra.mxu0 %v3682
    %4212 = vmatprep.subr.bf16.mxu0 %v3689
    %4213 = vmatpush1.bf16.msra.mxu0 %v3688
    %4214 = vmatprep.subr.bf16.mxu0 %v3695
    %4215 = vmatpush1.bf16.msra.mxu0 %v3694
    %4216 = vmatprep.subr.bf16.mxu0 %v3701
    %4217 = vmatpush1.bf16.msra.mxu0 %v3700
    %4218 = vmatprep.subr.bf16.mxu0 %v3707
    %4219 = vmatpush1.bf16.msra.mxu0 %v3706
    %4220 = vmatprep.subr.bf16.mxu0 %v3713
    %4221 = vmatpush1.bf16.msra.mxu0 %v3712
    %4222 = vmatprep.subr.bf16.mxu0 %v3719
    %4223 = vmatpush1.bf16.msra.mxu0 %v3718
    %4224 = vmatprep.mubr.bf16.mxu0 %v2894
    %4225 = vmatmul.mubr.bf16.gmra.mrb[0].mxu0 %v2893
    %v4226 = vpop.f32.mrb[0].mxu0
    %v4227 = vadd.f32 %v4166, %v4226
    %v4228 = vpop.f32.mrb[0].mxu0
    %v4229 = vadd.f32 %v4168, %v4228
    %v4230 = vpop.f32.mrb[0].mxu0
    %v4231 = vadd.f32 %v4170, %v4230
    %v4232 = vpop.f32.mrb[0].mxu0
    %v4233 = vadd.f32 %v4172, %v4232
    %4234 = vmatprep.mubr.bf16.mxu0 %v2899
    %4235 = vmatmul.mubr.bf16.gmra.mrb[0].mxu0 %v2898
    %v4236 = vpop.f32.mrb[0].mxu0
    %v4237 = vadd.f32 %v4176, %v4236
    %v4238 = vpop.f32.mrb[0].mxu0
    %v4239 = vadd.f32 %v4178, %v4238
    %v4240 = vpop.f32.mrb[0].mxu0
    %v4241 = vadd.f32 %v4180, %v4240
    %v4242 = vpop.f32.mrb[0].mxu0
    %v4243 = vadd.f32 %v4182, %v4242
    %4244 = vmatprep.mubr.bf16.mxu0 %v2904
    %4245 = vmatmul.mubr.bf16.gmra.mrb[0].mxu0 %v2903
    %v4246 = vpop.f32.mrb[0].mxu0
    %v4247 = vadd.f32 %v4186, %v4246
    %v4248 = vpop.f32.mrb[0].mxu0
    %v4249 = vadd.f32 %v4188, %v4248
    %v4250 = vpop.f32.mrb[0].mxu0
    %v4251 = vpop.f32.mrb[0].mxu0
    %4252 = vdwg.mxu0
    %4253 = vmatprep.subr.bf16.mxu0 %v3725
    %4254 = vmatpush1.bf16.msra.mxu0 %v3724
    %4255 = vmatprep.subr.bf16.mxu0 %v3731
    %4256 = vmatpush1.bf16.msra.mxu0 %v3730
    %4257 = vmatprep.subr.bf16.mxu0 0
    %4258 = vmatpush1.bf16.msra.mxu0 0
    %4259 = vmatprep.subr.bf16.mxu0 0
    %4260 = vmatpush1.bf16.msra.mxu0 0
    %4261 = vmatprep.subr.bf16.mxu0 0
    %4262 = vmatpush1.bf16.msra.mxu0 0
    %4263 = vmatprep.subr.bf16.mxu0 0
    %4264 = vmatpush1.bf16.msra.mxu0 0
    %4265 = vmatprep.subr.bf16.mxu0 0
    %4266 = vmatpush1.bf16.msra.mxu0 0
    %4267 = vmatprep.subr.bf16.mxu0 0
    %4268 = vmatpush1.bf16.msra.mxu0 0
    %4269 = vmatprep.subr.bf16.mxu0 0
    %4270 = vmatpush1.bf16.msra.mxu0 0
    %4271 = vmatprep.subr.bf16.mxu0 0
    %4272 = vmatpush1.bf16.msra.mxu0 0
    %4273 = vmatprep.subr.bf16.mxu0 0
    %4274 = vmatpush1.bf16.msra.mxu0 0
    %4275 = vmatprep.subr.bf16.mxu0 0
    %4276 = vmatpush1.bf16.msra.mxu0 0
    %4277 = vmatprep.subr.bf16.mxu0 0
    %4278 = vmatpush1.bf16.msra.mxu0 0
    %4279 = vmatprep.subr.bf16.mxu0 0
    %4280 = vmatpush1.bf16.msra.mxu0 0
    %4281 = vmatprep.subr.bf16.mxu0 0
    %4282 = vmatpush1.bf16.msra.mxu0 0
    %4283 = vmatprep.subr.bf16.mxu0 0
    %4284 = vmatpush1.bf16.msra.mxu0 0
    %4285 = vmatprep.mubr.bf16.mxu0 0
    %4286 = vmatmul.mubr.bf16.gmra.mrb[0].mxu0 %v3940
    %v4287 = vpop.f32.mrb[0].mxu0
    %v4288 = vadd.f32 %v4227, %v4287
    %v4289 = vpop.f32.mrb[0].mxu0
    %v4290 = vadd.f32 %v4229, %v4289
    %v4291 = vpop.f32.mrb[0].mxu0
    %v4292 = vadd.f32 %v4231, %v4291
    %v4293 = vpop.f32.mrb[0].mxu0
    %v4294 = vadd.f32 %v4233, %v4293
    %4295 = vmatprep.mubr.bf16.mxu0 0
    %4296 = vmatmul.mubr.bf16.gmra.mrb[0].mxu0 %v3943
    %v4297 = vpop.f32.mrb[0].mxu0
    %v4298 = vadd.f32 %v4237, %v4297
    %v4299 = vpop.f32.mrb[0].mxu0
    %v4300 = vadd.f32 %v4239, %v4299
    %v4301 = vpop.f32.mrb[0].mxu0
    %v4302 = vadd.f32 %v4241, %v4301
    %v4303 = vpop.f32.mrb[0].mxu0
    %v4304 = vadd.f32 %v4243, %v4303
    %4305 = vmatprep.mubr.bf16.mxu0 0
    %4306 = vmatmul.mubr.bf16.gmra.mrb[0].mxu0 %v3946
    %v4307 = vpop.f32.mrb[0].mxu0
    %v4308 = vadd.f32 %v4247, %v4307
    %v4309 = vpop.f32.mrb[0].mxu0
    %v4310 = vadd.f32 %v4249, %v4309
    %v4311 = vpop.f32.mrb[0].mxu0
    %v4312 = vpop.f32.mrb[0].mxu0
    %4313 = vdwg.mxu0
    %4314 = vmatprep.subr.bf16.mxu0 %v3535
    %4315 = vmatpush1.bf16.msra.mxu0 %v3534
    %4316 = vmatprep.subr.bf16.mxu0 %v3541
    %4317 = vmatpush1.bf16.msra.mxu0 %v3540
    %4318 = vmatprep.subr.bf16.mxu0 %v3547
    %4319 = vmatpush1.bf16.msra.mxu0 %v3546
    %4320 = vmatprep.subr.bf16.mxu0 %v3553
    %4321 = vmatpush1.bf16.msra.mxu0 %v3552
    %4322 = vmatprep.subr.bf16.mxu0 %v3559
    %4323 = vmatpush1.bf16.msra.mxu0 %v3558
    %4324 = vmatprep.subr.bf16.mxu0 %v3565
    %4325 = vmatpush1.bf16.msra.mxu0 %v3564
    %4326 = vmatprep.subr.bf16.mxu0 %v3571
    %4327 = vmatpush1.bf16.msra.mxu0 %v3570
    %4328 = vmatprep.subr.bf16.mxu0 %v3577
    %4329 = vmatpush1.bf16.msra.mxu0 %v3576
    %4330 = vmatprep.subr.bf16.mxu0 %v3583
    %4331 = vmatpush1.bf16.msra.mxu0 %v3582
    %4332 = vmatprep.subr.bf16.mxu0 %v3589
    %4333 = vmatpush1.bf16.msra.mxu0 %v3588
    %4334 = vmatprep.subr.bf16.mxu0 %v3595
    %4335 = vmatpush1.bf16.msra.mxu0 %v3594
    %4336 = vmatprep.subr.bf16.mxu0 %v3601
    %4337 = vmatpush1.bf16.msra.mxu0 %v3600
    %4338 = vmatprep.subr.bf16.mxu0 %v3607
    %4339 = vmatpush1.bf16.msra.mxu0 %v3606
    %4340 = vmatprep.subr.bf16.mxu0 %v3613
    %4341 = vmatpush1.bf16.msra.mxu0 %v3612
    %4342 = vmatprep.subr.bf16.mxu0 %v3619
    %4343 = vmatpush1.bf16.msra.mxu0 %v3618
    %4344 = vmatprep.subr.bf16.mxu0 %v3625
    %4345 = vmatpush1.bf16.msra.mxu0 %v3624
    %4346 = vmatprep.mubr.bf16.mxu0 %v2892
    %4347 = vmatmul.mubr.bf16.gmra.mrb[0].mxu0 %v2891
    %v4348 = vpop.f32.mrb[0].mxu0
    %v4349 = vadd.f32 0.0, %v4348
    %v4350 = vpop.f32.mrb[0].mxu0
    %v4351 = vadd.f32 0.0, %v4350
    %v4352 = vpop.f32.mrb[0].mxu0
    %v4353 = vadd.f32 0.0, %v4352
    %v4354 = vpop.f32.mrb[0].mxu0
    %v4355 = vadd.f32 0.0, %v4354
    %4356 = vmatprep.mubr.bf16.mxu0 %v2897
    %4357 = vmatmul.mubr.bf16.gmra.mrb[0].mxu0 %v2896
    %v4358 = vpop.f32.mrb[0].mxu0
    %v4359 = vadd.f32 0.0, %v4358
    %v4360 = vpop.f32.mrb[0].mxu0
    %v4361 = vadd.f32 0.0, %v4360
    %v4362 = vpop.f32.mrb[0].mxu0
    %v4363 = vadd.f32 0.0, %v4362
    %v4364 = vpop.f32.mrb[0].mxu0
    %v4365 = vadd.f32 0.0, %v4364
    %4366 = vmatprep.mubr.bf16.mxu0 %v2902
    %4367 = vmatmul.mubr.bf16.gmra.mrb[0].mxu0 %v2901
    %v4368 = vpop.f32.mrb[0].mxu0
    %v4369 = vadd.f32 0.0, %v4368
    %v4370 = vpop.f32.mrb[0].mxu0
    %v4371 = vadd.f32 0.0, %v4370
    %v4372 = vpop.f32.mrb[0].mxu0
    %v4373 = vpop.f32.mrb[0].mxu0
    %4374 = vdwg.mxu0
    %4375 = vmatprep.subr.bf16.mxu0 %v3631
    %4376 = vmatpush1.bf16.msra.mxu0 %v3630
    %4377 = vmatprep.subr.bf16.mxu0 %v3637
    %4378 = vmatpush1.bf16.msra.mxu0 %v3636
    %4379 = vmatprep.subr.bf16.mxu0 %v3643
    %4380 = vmatpush1.bf16.msra.mxu0 %v3642
    %4381 = vmatprep.subr.bf16.mxu0 %v3649
    %4382 = vmatpush1.bf16.msra.mxu0 %v3648
    %4383 = vmatprep.subr.bf16.mxu0 %v3655
    %4384 = vmatpush1.bf16.msra.mxu0 %v3654
    %4385 = vmatprep.subr.bf16.mxu0 %v3661
    %4386 = vmatpush1.bf16.msra.mxu0 %v3660
    %4387 = vmatprep.subr.bf16.mxu0 %v3667
    %4388 = vmatpush1.bf16.msra.mxu0 %v3666
    %4389 = vmatprep.subr.bf16.mxu0 %v3673
    %4390 = vmatpush1.bf16.msra.mxu0 %v3672
    %4391 = vmatprep.subr.bf16.mxu0 %v3679
    %4392 = vmatpush1.bf16.msra.mxu0 %v3678
    %4393 = vmatprep.subr.bf16.mxu0 %v3685
    %4394 = vmatpush1.bf16.msra.mxu0 %v3684
    %4395 = vmatprep.subr.bf16.mxu0 %v3691
    %4396 = vmatpush1.bf16.msra.mxu0 %v3690
    %4397 = vmatprep.subr.bf16.mxu0 %v3697
    %4398 = vmatpush1.bf16.msra.mxu0 %v3696
    %4399 = vmatprep.subr.bf16.mxu0 %v3703
    %4400 = vmatpush1.bf16.msra.mxu0 %v3702
    %4401 = vmatprep.subr.bf16.mxu0 %v3709
    %4402 = vmatpush1.bf16.msra.mxu0 %v3708
    %4403 = vmatprep.subr.bf16.mxu0 %v3715
    %4404 = vmatpush1.bf16.msra.mxu0 %v3714
    %4405 = vmatprep.subr.bf16.mxu0 %v3721
    %4406 = vmatpush1.bf16.msra.mxu0 %v3720
    %4407 = vmatprep.mubr.bf16.mxu0 %v2894
    %4408 = vmatmul.mubr.bf16.gmra.mrb[0].mxu0 %v2893
    %v4409 = vpop.f32.mrb[0].mxu0
    %v4410 = vadd.f32 %v4349, %v4409
    %v4411 = vpop.f32.mrb[0].mxu0
    %v4412 = vadd.f32 %v4351, %v4411
    %v4413 = vpop.f32.mrb[0].mxu0
    %v4414 = vadd.f32 %v4353, %v4413
    %v4415 = vpop.f32.mrb[0].mxu0
    %v4416 = vadd.f32 %v4355, %v4415
    %4417 = vmatprep.mubr.bf16.mxu0 %v2899
    %4418 = vmatmul.mubr.bf16.gmra.mrb[0].mxu0 %v2898
    %v4419 = vpop.f32.mrb[0].mxu0
    %v4420 = vadd.f32 %v4359, %v4419
    %v4421 = vpop.f32.mrb[0].mxu0
    %v4422 = vadd.f32 %v4361, %v4421
    %v4423 = vpop.f32.mrb[0].mxu0
    %v4424 = vadd.f32 %v4363, %v4423
    %v4425 = vpop.f32.mrb[0].mxu0
    %v4426 = vadd.f32 %v4365, %v4425
    %4427 = vmatprep.mubr.bf16.mxu0 %v2904
    %4428 = vmatmul.mubr.bf16.gmra.mrb[0].mxu0 %v2903
    %v4429 = vpop.f32.mrb[0].mxu0
    %v4430 = vadd.f32 %v4369, %v4429
    %v4431 = vpop.f32.mrb[0].mxu0
    %v4432 = vadd.f32 %v4371, %v4431
    %v4433 = vpop.f32.mrb[0].mxu0
    %v4434 = vpop.f32.mrb[0].mxu0
    %4435 = vdwg.mxu0
    %4436 = vmatprep.subr.bf16.mxu0 %v3727
    %4437 = vmatpush1.bf16.msra.mxu0 %v3726
    %4438 = vmatprep.subr.bf16.mxu0 %v3733
    %4439 = vmatpush1.bf16.msra.mxu0 %v3732
    %4440 = vmatprep.subr.bf16.mxu0 0
    %4441 = vmatpush1.bf16.msra.mxu0 0
    %4442 = vmatprep.subr.bf16.mxu0 0
    %4443 = vmatpush1.bf16.msra.mxu0 0
    %4444 = vmatprep.subr.bf16.mxu0 0
    %4445 = vmatpush1.bf16.msra.mxu0 0
    %4446 = vmatprep.subr.bf16.mxu0 0
    %4447 = vmatpush1.bf16.msra.mxu0 0
    %4448 = vmatprep.subr.bf16.mxu0 0
    %4449 = vmatpush1.bf16.msra.mxu0 0
    %4450 = vmatprep.subr.bf16.mxu0 0
    %4451 = vmatpush1.bf16.msra.mxu0 0
    %4452 = vmatprep.subr.bf16.mxu0 0
    %4453 = vmatpush1.bf16.msra.mxu0 0
    %4454 = vmatprep.subr.bf16.mxu0 0
    %4455 = vmatpush1.bf16.msra.mxu0 0
    %4456 = vmatprep.subr.bf16.mxu0 0
    %4457 = vmatpush1.bf16.msra.mxu0 0
    %4458 = vmatprep.subr.bf16.mxu0 0
    %4459 = vmatpush1.bf16.msra.mxu0 0
    %4460 = vmatprep.subr.bf16.mxu0 0
    %4461 = vmatpush1.bf16.msra.mxu0 0
    %4462 = vmatprep.subr.bf16.mxu0 0
    %4463 = vmatpush1.bf16.msra.mxu0 0
    %4464 = vmatprep.subr.bf16.mxu0 0
    %4465 = vmatpush1.bf16.msra.mxu0 0
    %4466 = vmatprep.subr.bf16.mxu0 0
    %4467 = vmatpush1.bf16.msra.mxu0 0
    %4468 = vmatprep.mubr.bf16.mxu0 0
    %4469 = vmatmul.mubr.bf16.gmra.mrb[0].mxu0 %v3940
    %v4470 = vpop.f32.mrb[0].mxu0
    %v4471 = vadd.f32 %v4410, %v4470
    %v4472 = vpop.f32.mrb[0].mxu0
    %v4473 = vadd.f32 %v4412, %v4472
    %v4474 = vpop.f32.mrb[0].mxu0
    %v4475 = vadd.f32 %v4414, %v4474
    %v4476 = vpop.f32.mrb[0].mxu0
    %v4477 = vadd.f32 %v4416, %v4476
    %4478 = vmatprep.mubr.bf16.mxu0 0
    %4479 = vmatmul.mubr.bf16.gmra.mrb[0].mxu0 %v3943
    %v4480 = vpop.f32.mrb[0].mxu0
    %v4481 = vadd.f32 %v4420, %v4480
    %v4482 = vpop.f32.mrb[0].mxu0
    %v4483 = vadd.f32 %v4422, %v4482
    %v4484 = vpop.f32.mrb[0].mxu0
    %v4485 = vadd.f32 %v4424, %v4484
    %v4486 = vpop.f32.mrb[0].mxu0
    %v4487 = vadd.f32 %v4426, %v4486
    %4488 = vmatprep.mubr.bf16.mxu0 0
    %4489 = vmatmul.mubr.bf16.gmra.mrb[0].mxu0 %v3946
    %v4490 = vpop.f32.mrb[0].mxu0
    %v4491 = vadd.f32 %v4430, %v4490
    %v4492 = vpop.f32.mrb[0].mxu0
    %v4493 = vadd.f32 %v4432, %v4492
    %v4494 = vpop.f32.mrb[0].mxu0
    %v4495 = vpop.f32.mrb[0].mxu0
    %4496 = vdwg.mxu0
    %v4497 = vpack.c.bf16 %v4109, %v4105
    %v4498 = vpack.c.bf16 %v4111, %v4107
    %v4499 = vpack.c.bf16 %v4119, %v4115
    %v4500 = vpack.c.bf16 %v4121, %v4117
    %v4501 = vpack.c.bf16 %v4125, %v4125
    %v4502 = vpack.c.bf16 %v4127, %v4127
    %v4509 = vunpack.c.l.b16 %v4497
    %v4510 = vunpack.c.l.b16 %v4498
    %v4511 = vunpack.c.h.b16 %v4497
    %v4512 = vunpack.c.h.b16 %v4498
    %v4513 = vunpack.c.l.b16 %v4499
    %v4514 = vunpack.c.l.b16 %v4500
    %v4515 = vunpack.c.h.b16 %v4499
    %v4516 = vunpack.c.h.b16 %v4500
    %v4517 = vunpack.c.l.b16 %v4501
    %v4518 = vunpack.c.l.b16 %v4502
    %v4519 = vpack.c.b16 %v4510, %v4509
    %v4520 = vpack.c.b16 %v4512, %v4511
    %v4521 = vpack.c.b16 %v4514, %v4513
    %v4522 = vpack.c.b16 %v4516, %v4515
    %v4523 = vpack.c.b16 %v4518, %v4517
    %4529 = vst [vmem:[#allocation2] sm:$0xff] %v4519
    %4530 = vst [vmem:[#allocation2 + $0x10] sm:$0xff] %v4520
    %4531 = vst [vmem:[#allocation2 + $0x20] sm:$0xff] %v4521
    %4532 = vst [vmem:[#allocation2 + $0x30] sm:$0xff] %v4522
    %4533 = vst [vmem:[#allocation2 + $0x40] sm:$0x11] %v4523
    %v4534 = vpack.c.bf16 %v4292, %v4288
    %v4535 = vpack.c.bf16 %v4294, %v4290
    %v4536 = vpack.c.bf16 %v4302, %v4298
    %v4537 = vpack.c.bf16 %v4304, %v4300
    %v4538 = vpack.c.bf16 %v4308, %v4308
    %v4539 = vpack.c.bf16 %v4310, %v4310
    %v4546 = vunpack.c.l.b16 %v4534
    %v4547 = vunpack.c.l.b16 %v4535
    %v4548 = vunpack.c.h.b16 %v4534
    %v4549 = vunpack.c.h.b16 %v4535
    %v4550 = vunpack.c.l.b16 %v4536
    %v4551 = vunpack.c.l.b16 %v4537
    %v4552 = vunpack.c.h.b16 %v4536
    %v4553 = vunpack.c.h.b16 %v4537
    %v4554 = vunpack.c.l.b16 %v4538
    %v4555 = vunpack.c.l.b16 %v4539
    %v4556 = vpack.c.b16 %v4547, %v4546
    %v4557 = vpack.c.b16 %v4549, %v4548
    %v4558 = vpack.c.b16 %v4551, %v4550
    %v4559 = vpack.c.b16 %v4553, %v4552
    %v4560 = vpack.c.b16 %v4555, %v4554
    %v4561 = vrot.slane %v4556, 7
    %v4562 = vrot.slane %v4561, 4
    %v4563 = vrot.slane %v4557, 7
    %v4564 = vsel %vm1738, %v4562, %v4563
    %v4565 = vrot.slane %v4563, 4
    %v4566 = vrot.slane %v4558, 7
    %v4567 = vsel %vm1738, %v4565, %v4566
    %v4568 = vrot.slane %v4566, 4
    %v4569 = vrot.slane %v4559, 7
    %v4570 = vsel %vm1738, %v4568, %v4569
    %v4571 = vrot.slane %v4569, 4
    %v4572 = vrot.slane %v4560, 7
    %v4573 = vsel %vm1738, %v4571, %v4572
    %4579 = vst [vmem:[#allocation2 + $0x40] sm:$0xee] %v4561
    %4580 = vst [vmem:[#allocation2 + $0x50] sm:$0xff] %v4564
    %4581 = vst [vmem:[#allocation2 + $0x60] sm:$0xff] %v4567
    %4582 = vst [vmem:[#allocation2 + $0x70] sm:$0xff] %v4570
    %4583 = vst [vmem:[#allocation2 + $0x80] sm:$0x33] %v4573
    %v4584 = vpack.c.bf16 %v4475, %v4471
    %v4585 = vpack.c.bf16 %v4477, %v4473
    %v4586 = vpack.c.bf16 %v4485, %v4481
    %v4587 = vpack.c.bf16 %v4487, %v4483
    %v4588 = vpack.c.bf16 %v4491, %v4491
    %v4589 = vpack.c.bf16 %v4493, %v4493
    %v4596 = vunpack.c.l.b16 %v4584
    %v4597 = vunpack.c.l.b16 %v4585
    %v4598 = vunpack.c.h.b16 %v4584
    %v4599 = vunpack.c.h.b16 %v4585
    %v4600 = vunpack.c.l.b16 %v4586
    %v4601 = vunpack.c.l.b16 %v4587
    %v4602 = vunpack.c.h.b16 %v4586
    %v4603 = vunpack.c.h.b16 %v4587
    %v4604 = vunpack.c.l.b16 %v4588
    %v4605 = vunpack.c.l.b16 %v4589
    %v4606 = vpack.c.b16 %v4597, %v4596
    %v4607 = vpack.c.b16 %v4599, %v4598
    %v4608 = vpack.c.b16 %v4601, %v4600
    %v4609 = vpack.c.b16 %v4603, %v4602
    %v4610 = vpack.c.b16 %v4605, %v4604
    %v4611 = vrot.slane %v4606, 6
    %v4612 = vrot.slane %v4611, 4
    %v4613 = vrot.slane %v4607, 6
    %v4614 = vsel %vm1921, %v4612, %v4613
    %v4615 = vrot.slane %v4613, 4
    %v4616 = vrot.slane %v4608, 6
    %v4617 = vsel %vm1921, %v4615, %v4616
    %v4618 = vrot.slane %v4616, 4
    %v4619 = vrot.slane %v4609, 6
    %v4620 = vsel %vm1921, %v4618, %v4619
    %v4621 = vrot.slane %v4619, 4
    %v4622 = vrot.slane %v4610, 6
    %v4623 = vsel %vm1921, %v4621, %v4622
    %4629 = vst [vmem:[#allocation2 + $0x80] sm:$0xcc] %v4611
    %4630 = vst [vmem:[#allocation2 + $0x90] sm:$0xff] %v4614
    %4631 = vst [vmem:[#allocation2 + $0xa0] sm:$0xff] %v4617
    %4632 = vst [vmem:[#allocation2 + $0xb0] sm:$0xff] %v4620
    %4633 = vst [vmem:[#allocation2 + $0xc0] sm:$0x77] %v4623
    %v4634 = vld [vmem:[%s7] sm:$0xf]
    %v4635 = vld [vmem:[%s7 + $0x4] sm:$0xf]
    %v4636 = vld [vmem:[#allocation2] sm:$0xff]
    %v4637 = vld [vmem:[#allocation2 + $0x10] sm:$0xff]
    %v4638 = vld [vmem:[#allocation2 + $0x20] sm:$0xff]
    %v4639 = vld [vmem:[#allocation2 + $0x30] sm:$0xff]
    %v4640 = vld [vmem:[#allocation2 + $0x40] sm:$0xff]
    %v4641 = vld [vmem:[#allocation2 + $0x50] sm:$0xff]
    %v4642 = vld [vmem:[#allocation2 + $0x60] sm:$0xff]
    %v4643 = vld [vmem:[#allocation2 + $0x70] sm:$0xff]
    %v4644 = vld [vmem:[#allocation2 + $0x80] sm:$0xff]
    %v4645 = vld [vmem:[#allocation2 + $0x90] sm:$0xff]
    %v4646 = vld [vmem:[#allocation2 + $0xa0] sm:$0xff]
    %v4647 = vld [vmem:[#allocation2 + $0xb0] sm:$0xff]
    %v4648 = vld [vmem:[#allocation2 + $0xc0] sm:$0x77]
    %v4649 = vld [vmem:[%s8] sm:$0x3]
    %v4651 = vlaneseq
    %v4652 = vshrl.u32 %v4651, 7
    %v4653 = vsub.s32 0, %v4652
    %v4654 = vrot.slane %v4649, %v4653
    %v4655 = vlaneseq
    %v4656 = vshrl.u32 %v4655, 7
    %v4657 = vsub.s32 1, %v4656
    %v4658 = vrot.slane %v4649, %v4657
    %v4663 = vunpack.c.l.b16 %v4634
    %v4664 = vunpack.c.l.b16 %v4635
    %v4665 = vpack.c.b16 %v4664, %v4663
    %v4679 = vunpack.c.l.b16 %v4636
    %v4680 = vunpack.c.h.b16 %v4636
    %v4681 = vunpack.c.l.b16 %v4637
    %v4682 = vunpack.c.h.b16 %v4637
    %v4683 = vunpack.c.l.b16 %v4638
    %v4684 = vunpack.c.h.b16 %v4638
    %v4685 = vunpack.c.l.b16 %v4639
    %v4686 = vunpack.c.h.b16 %v4639
    %v4687 = vunpack.c.l.b16 %v4640
    %v4688 = vunpack.c.h.b16 %v4640
    %v4689 = vunpack.c.l.b16 %v4641
    %v4690 = vunpack.c.h.b16 %v4641
    %v4691 = vunpack.c.l.b16 %v4642
    %v4692 = vunpack.c.h.b16 %v4642
    %v4693 = vunpack.c.l.b16 %v4643
    %v4694 = vunpack.c.h.b16 %v4643
    %v4695 = vunpack.c.l.b16 %v4644
    %v4696 = vunpack.c.h.b16 %v4644
    %v4697 = vunpack.c.l.b16 %v4645
    %v4698 = vunpack.c.h.b16 %v4645
    %v4699 = vunpack.c.l.b16 %v4646
    %v4700 = vunpack.c.h.b16 %v4646
    %v4701 = vunpack.c.l.b16 %v4647
    %v4702 = vunpack.c.h.b16 %v4647
    %v4703 = vunpack.c.l.b16 %v4648
    %v4704 = vunpack.c.h.b16 %v4648
    %v4705 = vpack.c.b16 %v4681, %v4679
    %v4706 = vpack.c.b16 %v4682, %v4680
    %v4707 = vpack.c.b16 %v4685, %v4683
    %v4708 = vpack.c.b16 %v4686, %v4684
    %v4709 = vpack.c.b16 %v4689, %v4687
    %v4710 = vpack.c.b16 %v4690, %v4688
    %v4711 = vpack.c.b16 %v4693, %v4691
    %v4712 = vpack.c.b16 %v4694, %v4692
    %v4713 = vpack.c.b16 %v4697, %v4695
    %v4714 = vpack.c.b16 %v4698, %v4696
    %v4715 = vpack.c.b16 %v4701, %v4699
    %v4716 = vpack.c.b16 %v4702, %v4700
    %v4717 = vpack.c.b16 %v4703, %v4703
    %v4718 = vpack.c.b16 %v4704, %v4704
    %vm4731 = vcmask 834560
    %v4733 = vsel %vm4731, %v4665, 0
    %v4736 = vsel %vm2359, %v4717, 0
    %v4739 = vsel %vm2359, %v4718, 0
    %4741 = vmatprep.subr.bf16.mxu0 %v4706
    %4742 = vmatpush1.bf16.msra.mxu0 %v4705
    %4743 = vmatprep.subr.bf16.mxu0 %v4708
    %4744 = vmatpush1.bf16.msra.mxu0 %v4707
    %4745 = vmatprep.subr.bf16.mxu0 %v4710
    %4746 = vmatpush1.bf16.msra.mxu0 %v4709
    %4747 = vmatprep.subr.bf16.mxu0 %v4712
    %4748 = vmatpush1.bf16.msra.mxu0 %v4711
    %4749 = vmatprep.subr.bf16.mxu0 %v4714
    %4750 = vmatpush1.bf16.msra.mxu0 %v4713
    %4751 = vmatprep.subr.bf16.mxu0 %v4716
    %4752 = vmatpush1.bf16.msra.mxu0 %v4715
    %4753 = vmatprep.subr.bf16.mxu0 %v4739
    %4754 = vmatpush1.bf16.msra.mxu0 %v4736
    %4755 = vmatprep.subr.bf16.mxu0 0
    %4756 = vmatpush1.bf16.msra.mxu0 0
    %4757 = vmatprep.subr.bf16.mxu0 0
    %4758 = vmatpush1.bf16.msra.mxu0 0
    %4759 = vmatprep.subr.bf16.mxu0 0
    %4760 = vmatpush1.bf16.msra.mxu0 0
    %4761 = vmatprep.subr.bf16.mxu0 0
    %4762 = vmatpush1.bf16.msra.mxu0 0
    %4763 = vmatprep.subr.bf16.mxu0 0
    %4764 = vmatpush1.bf16.msra.mxu0 0
    %4765 = vmatprep.subr.bf16.mxu0 0
    %4766 = vmatpush1.bf16.msra.mxu0 0
    %4767 = vmatprep.subr.bf16.mxu0 0
    %4768 = vmatpush1.bf16.msra.mxu0 0
    %4769 = vmatprep.subr.bf16.mxu0 0
    %4770 = vmatpush1.bf16.msra.mxu0 0
    %4771 = vmatprep.subr.bf16.mxu0 0
    %4772 = vmatpush1.bf16.msra.mxu0 0
    %4773 = vmatprep.mubr.bf16.mxu0 0
    %4774 = vmatmul.mubr.bf16.gmra.mrb[0].mxu0 %v4733
    %v4775 = vpop.f32.mrb[0].mxu0
    %v4776 = vadd.f32 %v4654, %v4775
    %v4777 = vpop.f32.mrb[0].mxu0
    %v4778 = vadd.f32 %v4658, %v4777
    %v4779 = vpop.f32.mrb[0].mxu0
    %v4780 = vadd.f32 %v4654, %v4779
    %v4781 = vpop.f32.mrb[0].mxu0
    %v4782 = vadd.f32 %v4658, %v4781
    %4783 = vdwg.mxu0
    %v4784 = vmax.f32 %v4776, 0.0
    %v4785 = vmax.f32 %v4778, 0.0
    %v4786 = vmax.f32 %v4780, 0.0
    %v4787 = vmax.f32 %v4782, 0.0
    %s4788 = smul.u32 4, 36
    %s4789 = smul.u32 %s4788, 3
    %s4790 = sshll.u32 %s4789, 4
    %4791 = dma.done [#allocation12], %s4790
    %s4792 = smul.u32 4, 20
    %s4793 = smul.u32 %s4792, 2
    %s4794 = sshll.u32 %s4793, 4
    %4795 = dma.done %s112, %s4794
    %4796 = vst.msk [vmem:[#allocation4 + $0x8] sm:$0xf] %vm2494, 0
    %4797 = vst.msk [vmem:[#allocation4 + $0x14] sm:$0xf] %vm2494, 0
    %4798 = vst.msk [vmem:[#allocation4 + $0x20] sm:$0x1] %vm2499, 0
    %v4799 = vld [vmem:[#allocation4 + $0xc] sm:$0x11]
    %v4800 = vsel %vm2505, 0, %v4799
    %4801 = vst [vmem:[#allocation4 + $0xc] sm:$0x11] %v4800
    %v4802 = vpack.c.bf16 %v4784, %v4784
    %v4803 = vpack.c.bf16 %v4785, %v4785
    %v4806 = vunpack.c.l.b16 %v4802
    %v4807 = vunpack.c.l.b16 %v4803
    %v4808 = vpack.c.b16 %v4807, %v4806
    %4810 = vst [vmem:[#allocation4] sm:$0xff] %v4808
    %v4811 = vld [vmem:[#allocation4 + $0x18] sm:$0x11]
    %v4812 = vsel %vm2544, 0, %v4811
    %4813 = vst [vmem:[#allocation4 + $0x18] sm:$0x11] %v4812
    %v4814 = vpack.c.bf16 %v4786, %v4786
    %v4815 = vpack.c.bf16 %v4787, %v4787
    %v4818 = vunpack.c.l.b16 %v4814
    %v4819 = vunpack.c.l.b16 %v4815
    %v4820 = vpack.c.b16 %v4819, %v4818
    %v4822 = vshrl.u32 %v4820, 16
    %v4824 = vrot.slane %v4822, 7
    %v4825 = vshll.u32 %v4820, 16
    %v4827 = vor.u32 %v4824, %v4825
    %v4828 = vrot.slane %v4824, 4
    %v4831 = vld [vmem:[#allocation4 + $0xc] sm:$0xff]
    %v4832 = vsel %vm2617, %v4827, %v4831
    %4833 = vst [vmem:[#allocation4 + $0xc] sm:$0xff] %v4832
    %v4834 = vld [vmem:[#allocation4 + $0x18] sm:$0x11]
    %v4835 = vsel %vm2505, %v4828, %v4834
    %4836 = vst [vmem:[#allocation4 + $0x18] sm:$0x11] %v4835
    %v4837 = vld [vmem:[#allocation4] sm:$0xff]
    %v4838 = vld [vmem:[#allocation4 + $0x8] sm:$0xf]
    %v4839 = vld [vmem:[#allocation4 + $0xc] sm:$0xff]
    %v4840 = vld [vmem:[#allocation4 + $0x14] sm:$0xf]
    %v4841 = vld [vmem:[#allocation4 + $0x18] sm:$0x11]
    %v4842 = vld [vmem:[#allocation4 + $0x20] sm:$0x1]
    %v4843 = vld [vmem:[#allocation7] sm:$0xff]
    %v4844 = vld [vmem:[#allocation7 + $0x8] sm:$0xff]
    %v4845 = vld [vmem:[#allocation7 + $0x10] sm:$0xff]
    %v4846 = vld [vmem:[#allocation7 + $0x18] sm:$0xff]
    %v4847 = vld [vmem:[#allocation7 + $0x20] sm:$0xff]
    %v4848 = vld [vmem:[#allocation7 + $0x28] sm:$0xff]
    %v4849 = vld [vmem:[#allocation7 + $0x30] sm:$0xff]
    %v4850 = vld [vmem:[#allocation7 + $0x38] sm:$0xff]
    %v4851 = vld [vmem:[#allocation7 + $0x40] sm:$0xff]
    %v4852 = vld [vmem:[#allocation7 + $0x48] sm:$0xff]
    %v4853 = vld [vmem:[#allocation7 + $0x50] sm:$0xff]
    %v4854 = vld [vmem:[#allocation7 + $0x58] sm:$0xff]
    %v4855 = vld [vmem:[#allocation7 + $0x60] sm:$0xff]
    %v4856 = vld [vmem:[#allocation7 + $0x68] sm:$0xff]
    %v4857 = vld [vmem:[#allocation7 + $0x70] sm:$0xff]
    %v4858 = vld [vmem:[#allocation7 + $0x78] sm:$0xff]
    %v4859 = vld [vmem:[#allocation7 + $0x80] sm:$0xff]
    %v4860 = vld [vmem:[#allocation7 + $0x88] sm:$0xff]
    %v4861 = vld [vmem:[#allocation7 + $0x90] sm:$0xff]
    %v4862 = vld [vmem:[#allocation7 + $0x98] sm:$0xff]
    %v4863 = vld [vmem:[#allocation7 + $0xa0] sm:$0xff]
    %v4864 = vld [vmem:[#allocation7 + $0xa8] sm:$0xff]
    %v4865 = vld [vmem:[#allocation7 + $0xb0] sm:$0xff]
    %v4866 = vld [vmem:[#allocation7 + $0xb8] sm:$0xff]
    %v4867 = vld [vmem:[#allocation7 + $0xc0] sm:$0xff]
    %v4868 = vld [vmem:[#allocation7 + $0xc8] sm:$0xff]
    %v4869 = vld [vmem:[#allocation7 + $0xd0] sm:$0xff]
    %v4870 = vld [vmem:[#allocation7 + $0xd8] sm:$0xff]
    %v4871 = vld [vmem:[#allocation7 + $0xe0] sm:$0xff]
    %v4872 = vld [vmem:[#allocation7 + $0xe8] sm:$0xff]
    %v4873 = vld [vmem:[#allocation7 + $0xf0] sm:$0xff]
    %v4874 = vld [vmem:[#allocation7 + $0xf8] sm:$0xff]
    %v4875 = vld [vmem:[#allocation7 + $0x100] sm:$0xff]
    %v4876 = vld [vmem:[#allocation7 + $0x108] sm:$0xff]
    %v4877 = vld [vmem:[#allocation7 + $0x110] sm:$0xff]
    %v4878 = vld [vmem:[#allocation7 + $0x118] sm:$0xff]
    %v4879 = vld [vmem:[#allocation7 + $0x120] sm:$0xff]
    %v4880 = vld [vmem:[#allocation7 + $0x128] sm:$0xff]
    %v4881 = vld [vmem:[#allocation7 + $0x130] sm:$0xff]
    %v4882 = vld [vmem:[#allocation7 + $0x138] sm:$0xff]
    %v4883 = vld [vmem:[#allocation7 + $0x140] sm:$0xff]
    %v4884 = vld [vmem:[#allocation7 + $0x148] sm:$0xff]
    %v4885 = vld [vmem:[#allocation7 + $0x150] sm:$0xff]
    %v4886 = vld [vmem:[#allocation7 + $0x158] sm:$0xff]
    %v4887 = vld [vmem:[#allocation7 + $0x160] sm:$0xff]
    %v4888 = vld [vmem:[#allocation7 + $0x168] sm:$0xff]
    %v4889 = vld [vmem:[#allocation7 + $0x170] sm:$0xff]
    %v4890 = vld [vmem:[#allocation7 + $0x178] sm:$0xff]
    %v4891 = vld [vmem:[#allocation7 + $0x180] sm:$0xff]
    %v4892 = vld [vmem:[#allocation7 + $0x188] sm:$0xff]
    %v4893 = vld [vmem:[#allocation7 + $0x190] sm:$0xff]
    %v4894 = vld [vmem:[#allocation7 + $0x198] sm:$0xff]
    %v4895 = vld [vmem:[#allocation7 + $0x1a0] sm:$0xff]
    %v4896 = vld [vmem:[#allocation7 + $0x1a8] sm:$0xff]
    %v4903 = vunpack.c.l.b16 %v4837
    %v4904 = vunpack.c.h.b16 %v4837
    %v4905 = vunpack.c.l.b16 %v4838
    %v4906 = vunpack.c.l.b16 %v4839
    %v4907 = vunpack.c.h.b16 %v4839
    %v4908 = vunpack.c.l.b16 %v4840
    %v4909 = vunpack.c.l.b16 %v4841
    %v4910 = vunpack.c.h.b16 %v4841
    %v4911 = vunpack.c.l.b16 %v4842
    %v4912 = vpack.c.b16 %v4906, %v4903
    %v4913 = vpack.c.b16 %v4907, %v4904
    %v4914 = vpack.c.b16 %v4908, %v4905
    %v4915 = vpack.c.b16 %v4909, %v4909
    %v4916 = vpack.c.b16 %v4910, %v4910
    %v4917 = vpack.c.b16 %v4911, %v4911
    %v4923 = vsel %vm3938, %v4914, 0
    %v4926 = vsel %vm3938, %v4917, 0
    %4928 = vmatprep.subr.bf16.mxu0 %v4844
    %4929 = vmatpush1.bf16.msra.mxu0 %v4843
    %4930 = vmatprep.subr.bf16.mxu0 %v4847
    %4931 = vmatpush1.bf16.msra.mxu0 %v4846
    %4932 = vmatprep.subr.bf16.mxu0 %v4850
    %4933 = vmatpush1.bf16.msra.mxu0 %v4849
    %4934 = vmatprep.subr.bf16.mxu0 %v4853
    %4935 = vmatpush1.bf16.msra.mxu0 %v4852
    %4936 = vmatprep.subr.bf16.mxu0 %v4856
    %4937 = vmatpush1.bf16.msra.mxu0 %v4855
    %4938 = vmatprep.subr.bf16.mxu0 %v4859
    %4939 = vmatpush1.bf16.msra.mxu0 %v4858
    %4940 = vmatprep.subr.bf16.mxu0 %v4862
    %4941 = vmatpush1.bf16.msra.mxu0 %v4861
    %4942 = vmatprep.subr.bf16.mxu0 %v4865
    %4943 = vmatpush1.bf16.msra.mxu0 %v4864
    %4944 = vmatprep.subr.bf16.mxu0 %v4868
    %4945 = vmatpush1.bf16.msra.mxu0 %v4867
    %4946 = vmatprep.subr.bf16.mxu0 %v4871
    %4947 = vmatpush1.bf16.msra.mxu0 %v4870
    %4948 = vmatprep.subr.bf16.mxu0 %v4874
    %4949 = vmatpush1.bf16.msra.mxu0 %v4873
    %4950 = vmatprep.subr.bf16.mxu0 %v4877
    %4951 = vmatpush1.bf16.msra.mxu0 %v4876
    %4952 = vmatprep.subr.bf16.mxu0 %v4880
    %4953 = vmatpush1.bf16.msra.mxu0 %v4879
    %4954 = vmatprep.subr.bf16.mxu0 %v4883
    %4955 = vmatpush1.bf16.msra.mxu0 %v4882
    %4956 = vmatprep.subr.bf16.mxu0 %v4886
    %4957 = vmatpush1.bf16.msra.mxu0 %v4885
    %4958 = vmatprep.subr.bf16.mxu0 %v4889
    %4959 = vmatpush1.bf16.msra.mxu0 %v4888
    %4960 = vmatprep.mubr.bf16.mxu0 %v4913
    %4961 = vmatmul.mubr.bf16.gmra.mrb[0].mxu0 %v4912
    %v4962 = vpop.f32.mrb[0].mxu0
    %v4963 = vadd.f32 0.0, %v4962
    %v4964 = vpop.f32.mrb[0].mxu0
    %v4965 = vadd.f32 0.0, %v4964
    %v4966 = vpop.f32.mrb[0].mxu0
    %v4967 = vadd.f32 0.0, %v4966
    %v4968 = vpop.f32.mrb[0].mxu0
    %v4969 = vadd.f32 0.0, %v4968
    %4970 = vmatprep.mubr.bf16.mxu0 %v4916
    %4971 = vmatmul.mubr.bf16.gmra.mrb[0].mxu0 %v4915
    %v4972 = vpop.f32.mrb[0].mxu0
    %v4973 = vadd.f32 0.0, %v4972
    %v4974 = vpop.f32.mrb[0].mxu0
    %v4975 = vadd.f32 0.0, %v4974
    %v4976 = vpop.f32.mrb[0].mxu0
    %v4977 = vpop.f32.mrb[0].mxu0
    %4978 = vdwg.mxu0
    %4979 = vmatprep.subr.bf16.mxu0 %v4892
    %4980 = vmatpush1.bf16.msra.mxu0 %v4891
    %4981 = vmatprep.subr.bf16.mxu0 %v4895
    %4982 = vmatpush1.bf16.msra.mxu0 %v4894
    %4983 = vmatprep.subr.bf16.mxu0 0
    %4984 = vmatpush1.bf16.msra.mxu0 0
    %4985 = vmatprep.subr.bf16.mxu0 0
    %4986 = vmatpush1.bf16.msra.mxu0 0
    %4987 = vmatprep.subr.bf16.mxu0 0
    %4988 = vmatpush1.bf16.msra.mxu0 0
    %4989 = vmatprep.subr.bf16.mxu0 0
    %4990 = vmatpush1.bf16.msra.mxu0 0
    %4991 = vmatprep.subr.bf16.mxu0 0
    %4992 = vmatpush1.bf16.msra.mxu0 0
    %4993 = vmatprep.subr.bf16.mxu0 0
    %4994 = vmatpush1.bf16.msra.mxu0 0
    %4995 = vmatprep.subr.bf16.mxu0 0
    %4996 = vmatpush1.bf16.msra.mxu0 0
    %4997 = vmatprep.subr.bf16.mxu0 0
    %4998 = vmatpush1.bf16.msra.mxu0 0
    %4999 = vmatprep.subr.bf16.mxu0 0
    %5000 = vmatpush1.bf16.msra.mxu0 0
    %5001 = vmatprep.subr.bf16.mxu0 0
    %5002 = vmatpush1.bf16.msra.mxu0 0
    %5003 = vmatprep.subr.bf16.mxu0 0
    %5004 = vmatpush1.bf16.msra.mxu0 0
    %5005 = vmatprep.subr.bf16.mxu0 0
    %5006 = vmatpush1.bf16.msra.mxu0 0
    %5007 = vmatprep.subr.bf16.mxu0 0
    %5008 = vmatpush1.bf16.msra.mxu0 0
    %5009 = vmatprep.subr.bf16.mxu0 0
    %5010 = vmatpush1.bf16.msra.mxu0 0
    %5011 = vmatprep.mubr.bf16.mxu0 0
    %5012 = vmatmul.mubr.bf16.gmra.mrb[0].mxu0 %v4923
    %v5013 = vpop.f32.mrb[0].mxu0
    %v5014 = vadd.f32 %v4963, %v5013
    %v5015 = vpop.f32.mrb[0].mxu0
    %v5016 = vadd.f32 %v4965, %v5015
    %v5017 = vpop.f32.mrb[0].mxu0
    %v5018 = vadd.f32 %v4967, %v5017
    %v5019 = vpop.f32.mrb[0].mxu0
    %v5020 = vadd.f32 %v4969, %v5019
    %5021 = vmatprep.mubr.bf16.mxu0 0
    %5022 = vmatmul.mubr.bf16.gmra.mrb[0].mxu0 %v4926
    %v5023 = vpop.f32.mrb[0].mxu0
    %v5024 = vadd.f32 %v4973, %v5023
    %v5025 = vpop.f32.mrb[0].mxu0
    %v5026 = vadd.f32 %v4975, %v5025
    %v5027 = vpop.f32.mrb[0].mxu0
    %v5028 = vpop.f32.mrb[0].mxu0
    %5029 = vdwg.mxu0
    %5030 = vmatprep.subr.bf16.mxu0 0
    %5031 = vmatpush1.bf16.msra.mxu0 %v4845
    %5032 = vmatprep.subr.bf16.mxu0 0
    %5033 = vmatpush1.bf16.msra.mxu0 %v4848
    %5034 = vmatprep.subr.bf16.mxu0 0
    %5035 = vmatpush1.bf16.msra.mxu0 %v4851
    %5036 = vmatprep.subr.bf16.mxu0 0
    %5037 = vmatpush1.bf16.msra.mxu0 %v4854
    %5038 = vmatprep.subr.bf16.mxu0 0
    %5039 = vmatpush1.bf16.msra.mxu0 %v4857
    %5040 = vmatprep.subr.bf16.mxu0 0
    %5041 = vmatpush1.bf16.msra.mxu0 %v4860
    %5042 = vmatprep.subr.bf16.mxu0 0
    %5043 = vmatpush1.bf16.msra.mxu0 %v4863
    %5044 = vmatprep.subr.bf16.mxu0 0
    %5045 = vmatpush1.bf16.msra.mxu0 %v4866
    %5046 = vmatprep.subr.bf16.mxu0 0
    %5047 = vmatpush1.bf16.msra.mxu0 %v4869
    %5048 = vmatprep.subr.bf16.mxu0 0
    %5049 = vmatpush1.bf16.msra.mxu0 %v4872
    %5050 = vmatprep.subr.bf16.mxu0 0
    %5051 = vmatpush1.bf16.msra.mxu0 %v4875
    %5052 = vmatprep.subr.bf16.mxu0 0
    %5053 = vmatpush1.bf16.msra.mxu0 %v4878
    %5054 = vmatprep.subr.bf16.mxu0 0
    %5055 = vmatpush1.bf16.msra.mxu0 %v4881
    %5056 = vmatprep.subr.bf16.mxu0 0
    %5057 = vmatpush1.bf16.msra.mxu0 %v4884
    %5058 = vmatprep.subr.bf16.mxu0 0
    %5059 = vmatpush1.bf16.msra.mxu0 %v4887
    %5060 = vmatprep.subr.bf16.mxu0 0
    %5061 = vmatpush1.bf16.msra.mxu0 %v4890
    %5062 = vmatprep.mubr.bf16.mxu0 %v4913
    %5063 = vmatmul.mubr.bf16.gmra.mrb[0].mxu0 %v4912
    %v5064 = vpop.f32.mrb[0].mxu0
    %v5065 = vadd.f32 0.0, %v5064
    %v5066 = vpop.f32.mrb[0].mxu0
    %v5067 = vpop.f32.mrb[0].mxu0
    %v5068 = vadd.f32 0.0, %v5067
    %v5069 = vpop.f32.mrb[0].mxu0
    %5070 = vmatprep.mubr.bf16.mxu0 %v4916
    %5071 = vmatmul.mubr.bf16.gmra.mrb[0].mxu0 %v4915
    %v5072 = vpop.f32.mrb[0].mxu0
    %v5073 = vadd.f32 0.0, %v5072
    %v5074 = vpop.f32.mrb[0].mxu0
    %v5075 = vpop.f32.mrb[0].mxu0
    %v5076 = vpop.f32.mrb[0].mxu0
    %5077 = vdwg.mxu0
    %5078 = vmatprep.subr.bf16.mxu0 0
    %5079 = vmatpush1.bf16.msra.mxu0 %v4893
    %5080 = vmatprep.subr.bf16.mxu0 0
    %5081 = vmatpush1.bf16.msra.mxu0 %v4896
    %5082 = vmatprep.subr.bf16.mxu0 0
    %5083 = vmatpush1.bf16.msra.mxu0 0
    %5084 = vmatprep.subr.bf16.mxu0 0
    %5085 = vmatpush1.bf16.msra.mxu0 0
    %5086 = vmatprep.subr.bf16.mxu0 0
    %5087 = vmatpush1.bf16.msra.mxu0 0
    %5088 = vmatprep.subr.bf16.mxu0 0
    %5089 = vmatpush1.bf16.msra.mxu0 0
    %5090 = vmatprep.subr.bf16.mxu0 0
    %5091 = vmatpush1.bf16.msra.mxu0 0
    %5092 = vmatprep.subr.bf16.mxu0 0
    %5093 = vmatpush1.bf16.msra.mxu0 0
    %5094 = vmatprep.subr.bf16.mxu0 0
    %5095 = vmatpush1.bf16.msra.mxu0 0
    %5096 = vmatprep.subr.bf16.mxu0 0
    %5097 = vmatpush1.bf16.msra.mxu0 0
    %5098 = vmatprep.subr.bf16.mxu0 0
    %5099 = vmatpush1.bf16.msra.mxu0 0
    %5100 = vmatprep.subr.bf16.mxu0 0
    %5101 = vmatpush1.bf16.msra.mxu0 0
    %5102 = vmatprep.subr.bf16.mxu0 0
    %5103 = vmatpush1.bf16.msra.mxu0 0
    %5104 = vmatprep.subr.bf16.mxu0 0
    %5105 = vmatpush1.bf16.msra.mxu0 0
    %5106 = vmatprep.subr.bf16.mxu0 0
    %5107 = vmatpush1.bf16.msra.mxu0 0
    %5108 = vmatprep.subr.bf16.mxu0 0
    %5109 = vmatpush1.bf16.msra.mxu0 0
    %5110 = vmatprep.mubr.bf16.mxu0 0
    %5111 = vmatmul.mubr.bf16.gmra.mrb[0].mxu0 %v4923
    %v5112 = vpop.f32.mrb[0].mxu0
    %v5113 = vadd.f32 %v5065, %v5112
    %v5114 = vpop.f32.mrb[0].mxu0
    %v5115 = vpop.f32.mrb[0].mxu0
    %v5116 = vadd.f32 %v5068, %v5115
    %v5117 = vpop.f32.mrb[0].mxu0
    %5118 = vmatprep.mubr.bf16.mxu0 0
    %5119 = vmatmul.mubr.bf16.gmra.mrb[0].mxu0 %v4926
    %v5120 = vpop.f32.mrb[0].mxu0
    %v5121 = vadd.f32 %v5073, %v5120
    %v5122 = vpop.f32.mrb[0].mxu0
    %v5123 = vpop.f32.mrb[0].mxu0
    %v5124 = vpop.f32.mrb[0].mxu0
    %5125 = vdwg.mxu0
    %v5126 = vpack.c.bf16 %v5018, %v5014
    %v5127 = vpack.c.bf16 %v5024, %v5024
    %v5130 = vunpack.c.l.b16 %v5126
    %v5131 = vunpack.c.h.b16 %v5126
    %v5132 = vunpack.c.l.b16 %v5127
    %v5133 = vpack.c.b16 %v5130, %v5130
    %v5134 = vpack.c.b16 %v5131, %v5131
    %v5135 = vpack.c.b16 %v5132, %v5132
    %5139 = vst [vmem:[#allocation2] sm:$0xf] %v5133
    %5140 = vst [vmem:[#allocation2 + $0x10] sm:$0xf] %v5134
    %5141 = vst [vmem:[#allocation2 + $0x20] sm:$0x1] %v5135
    %v5142 = vpack.c.bf16 %v5020, %v5016
    %v5143 = vpack.c.bf16 %v5026, %v5026
    %v5146 = vunpack.c.l.b16 %v5142
    %v5147 = vunpack.c.h.b16 %v5142
    %v5148 = vunpack.c.l.b16 %v5143
    %v5149 = vpack.c.b16 %v5146, %v5146
    %v5150 = vpack.c.b16 %v5147, %v5147
    %v5151 = vpack.c.b16 %v5148, %v5148
    %v5152 = vrot.slane %v5149, 7
    %v5153 = vrot.slane %v5152, 4
    %v5154 = vrot.slane %v5150, 7
    %v5155 = vsel %vm1738, %v5153, %v5154
    %v5156 = vrot.slane %v5154, 4
    %v5157 = vrot.slane %v5151, 7
    %v5158 = vsel %vm1738, %v5156, %v5157
    %5162 = vst [vmem:[#allocation2 + $0x20] sm:$0xe] %v5152
    %5163 = vst [vmem:[#allocation2 + $0x30] sm:$0xf] %v5155
    %5164 = vst [vmem:[#allocation2 + $0x40] sm:$0x3] %v5158
    %v5165 = vpack.c.bf16 %v5116, %v5113
    %v5166 = vpack.c.bf16 %v5121, %v5121
    %v5169 = vunpack.c.l.b16 %v5165
    %v5170 = vunpack.c.h.b16 %v5165
    %v5171 = vunpack.c.l.b16 %v5166
    %v5172 = vpack.c.b16 %v5169, %v5169
    %v5173 = vpack.c.b16 %v5170, %v5170
    %v5174 = vpack.c.b16 %v5171, %v5171
    %v5175 = vrot.slane %v5172, 6
    %v5176 = vrot.slane %v5175, 4
    %v5177 = vrot.slane %v5173, 6
    %v5178 = vsel %vm1921, %v5176, %v5177
    %v5179 = vrot.slane %v5177, 4
    %v5180 = vrot.slane %v5174, 6
    %v5181 = vsel %vm1921, %v5179, %v5180
    %5185 = vst [vmem:[#allocation2 + $0x40] sm:$0xc] %v5175
    %5186 = vst [vmem:[#allocation2 + $0x50] sm:$0xf] %v5178
    %5187 = vst [vmem:[#allocation2 + $0x60] sm:$0x7] %v5181
    %v5188 = vld [vmem:[%s9] sm:$0xf]
    %v5189 = vld [vmem:[#allocation2] sm:$0xf]
    %v5190 = vld [vmem:[#allocation2 + $0x10] sm:$0xf]
    %v5191 = vld [vmem:[#allocation2 + $0x20] sm:$0xf]
    %v5192 = vld [vmem:[#allocation2 + $0x30] sm:$0xf]
    %v5193 = vld [vmem:[#allocation2 + $0x40] sm:$0xf]
    %v5194 = vld [vmem:[#allocation2 + $0x50] sm:$0xf]
    %v5195 = vld [vmem:[#allocation2 + $0x60] sm:$0x7]
    %v5196 = vld [vmem:[%s10] sm:$0x1]
    %v5198 = vlaneseq
    %v5199 = vshrl.u32 %v5198, 7
    %v5200 = vsub.s32 0, %v5199
    %v5201 = vrot.slane %v5196, %v5200
    %v5210 = vunpack.c.l.b16 %v5189
    %v5211 = vunpack.c.l.b16 %v5190
    %v5212 = vunpack.c.l.b16 %v5191
    %v5213 = vunpack.c.l.b16 %v5192
    %v5214 = vunpack.c.l.b16 %v5193
    %v5215 = vunpack.c.l.b16 %v5194
    %v5216 = vunpack.c.l.b16 %v5195
    %v5217 = vpack.c.b16 %v5211, %v5210
    %v5218 = vpack.c.b16 %v5213, %v5212
    %v5219 = vpack.c.b16 %v5215, %v5214
    %v5220 = vpack.c.b16 %v5216, %v5216
    %vm5224 = vcmask 441344
    %v5226 = vsel %vm5224, %v5188, 0
    %v5229 = vsel %vm2359, %v5220, 0
    %5231 = vmatprep.subr.bf16.mxu0 0
    %5232 = vmatpush1.bf16.msra.mxu0 %v5217
    %5233 = vmatprep.subr.bf16.mxu0 0
    %5234 = vmatpush1.bf16.msra.mxu0 %v5218
    %5235 = vmatprep.subr.bf16.mxu0 0
    %5236 = vmatpush1.bf16.msra.mxu0 %v5219
    %5237 = vmatprep.subr.bf16.mxu0 0
    %5238 = vmatpush1.bf16.msra.mxu0 %v5229
    %5239 = vmatprep.subr.bf16.mxu0 0
    %5240 = vmatpush1.bf16.msra.mxu0 0
    %5241 = vmatprep.subr.bf16.mxu0 0
    %5242 = vmatpush1.bf16.msra.mxu0 0
    %5243 = vmatprep.subr.bf16.mxu0 0
    %5244 = vmatpush1.bf16.msra.mxu0 0
    %5245 = vmatprep.subr.bf16.mxu0 0
    %5246 = vmatpush1.bf16.msra.mxu0 0
    %5247 = vmatprep.subr.bf16.mxu0 0
    %5248 = vmatpush1.bf16.msra.mxu0 0
    %5249 = vmatprep.subr.bf16.mxu0 0
    %5250 = vmatpush1.bf16.msra.mxu0 0
    %5251 = vmatprep.subr.bf16.mxu0 0
    %5252 = vmatpush1.bf16.msra.mxu0 0
    %5253 = vmatprep.subr.bf16.mxu0 0
    %5254 = vmatpush1.bf16.msra.mxu0 0
    %5255 = vmatprep.subr.bf16.mxu0 0
    %5256 = vmatpush1.bf16.msra.mxu0 0
    %5257 = vmatprep.subr.bf16.mxu0 0
    %5258 = vmatpush1.bf16.msra.mxu0 0
    %5259 = vmatprep.subr.bf16.mxu0 0
    %5260 = vmatpush1.bf16.msra.mxu0 0
    %5261 = vmatprep.subr.bf16.mxu0 0
    %5262 = vmatpush1.bf16.msra.mxu0 0
    %5263 = vmatprep.mubr.bf16.mxu0 0
    %5264 = vmatmul.mubr.bf16.gmra.mrb[0].mxu0 %v5226
    %v5265 = vpop.f32.mrb[0].mxu0
    %v5266 = vadd.f32 %v5201, %v5265
    %v5267 = vpop.f32.mrb[0].mxu0
    %v5268 = vpop.f32.mrb[0].mxu0
    %v5269 = vpop.f32.mrb[0].mxu0
    %5270 = vdwg.mxu0
    %v5271 = vmax.f32 %v5266, 0.0
    %5272 = vst.msk [vmem:[#allocation5 + $0x4] sm:$0xf] %vm2494, 0
    %5273 = vst.msk [vmem:[#allocation5 + $0xc] sm:$0x1] %vm2499, 0
    %vm5274 = vcmask 1042434
    %vm5275 = vsmask.f32 2304
    %vm5276 = vmand %vm5274, %vm5275
    %v5277 = vld [vmem:[#allocation5] sm:$0x4]
    %v5278 = vsel %vm5276, 0, %v5277
    %5279 = vst [vmem:[#allocation5] sm:$0x4] %v5278
    %v5280 = vpack.c.bf16 %v5271, %v5271
    %5281 = vst [vmem:[#allocation5] sm:$0x3] %v5280
    %v5282 = vld [vmem:[#allocation5 + $0x8] sm:$0x1]
    %v5283 = vsel %vm2541, 0, %v5282
    %5284 = vst [vmem:[#allocation5 + $0x8] sm:$0x1] %v5283
    %v5286 = vunpack.c.l.b16 %v5280
    %v5287 = vpack.c.b16 %v5286, %v5286
    %v5289 = vshrl.u32 %v5287, 16
    %v5291 = vrot.slane %v5289, 7
    %v5292 = vshll.u32 %v5287, 16
    %v5294 = vor.u32 %v5291, %v5292
    %v5295 = vrot.slane %v5291, 4
    %vm5298 = vcmask 1043458
    %vm5299 = vsmask.f32 7946
    %vm5300 = vmand %vm5298, %vm5299
    %v5301 = vld [vmem:[#allocation5] sm:$0xc]
    %v5302 = vsel %vm5300, %v5294, %v5301
    %5303 = vst [vmem:[#allocation5] sm:$0xc] %v5302
    %v5304 = vld [vmem:[#allocation5 + $0x8] sm:$0x1]
    %v5305 = vsel %vm2502, %v5295, %v5304
    %5306 = vst [vmem:[#allocation5 + $0x8] sm:$0x1] %v5305
    %v5307 = vld [vmem:[#allocation5] sm:$0xff]
    %v5308 = vld [vmem:[#allocation5 + $0x8] sm:$0x11]
    %v5309 = vld [vmem:[#allocation8] sm:$0xff]
    %v5310 = vld [vmem:[#allocation8 + $0x8] sm:$0xff]
    %v5311 = vld [vmem:[#allocation8 + $0x10] sm:$0xff]
    %v5312 = vld [vmem:[#allocation8 + $0x18] sm:$0xff]
    %v5313 = vld [vmem:[#allocation8 + $0x20] sm:$0xff]
    %v5314 = vld [vmem:[#allocation8 + $0x28] sm:$0xff]
    %v5315 = vld [vmem:[#allocation8 + $0x30] sm:$0xff]
    %v5316 = vld [vmem:[#allocation8 + $0x38] sm:$0xff]
    %v5317 = vld [vmem:[#allocation8 + $0x40] sm:$0xff]
    %v5318 = vld [vmem:[#allocation8 + $0x48] sm:$0xff]
    %v5319 = vld [vmem:[#allocation8 + $0x50] sm:$0xff]
    %v5320 = vld [vmem:[#allocation8 + $0x58] sm:$0xff]
    %v5321 = vld [vmem:[#allocation8 + $0x60] sm:$0xff]
    %v5322 = vld [vmem:[#allocation8 + $0x68] sm:$0xff]
    %v5323 = vld [vmem:[#allocation8 + $0x70] sm:$0xff]
    %v5324 = vld [vmem:[#allocation8 + $0x78] sm:$0xff]
    %v5325 = vld [vmem:[#allocation8 + $0x80] sm:$0xff]
    %v5326 = vld [vmem:[#allocation8 + $0x88] sm:$0xff]
    %v5327 = vld [vmem:[#allocation8 + $0x90] sm:$0xff]
    %v5328 = vld [vmem:[#allocation8 + $0x98] sm:$0xff]
    %v5331 = vunpack.c.l.b16 %v5307
    %v5332 = vunpack.c.h.b16 %v5307
    %v5333 = vunpack.c.l.b16 %v5308
    %v5334 = vunpack.c.h.b16 %v5308
    %v5335 = vpack.c.b16 %v5333, %v5331
    %v5336 = vpack.c.b16 %v5334, %v5332
    %v5339 = vsel %vm3938, %v5336, 0
    %5341 = vmatprep.subr.bf16.mxu0 %v5310
    %5342 = vmatpush1.bf16.msra.mxu0 %v5309
    %5343 = vmatprep.subr.bf16.mxu0 %v5312
    %5344 = vmatpush1.bf16.msra.mxu0 %v5311
    %5345 = vmatprep.subr.bf16.mxu0 %v5314
    %5346 = vmatpush1.bf16.msra.mxu0 %v5313
    %5347 = vmatprep.subr.bf16.mxu0 %v5316
    %5348 = vmatpush1.bf16.msra.mxu0 %v5315
    %5349 = vmatprep.subr.bf16.mxu0 %v5318
    %5350 = vmatpush1.bf16.msra.mxu0 %v5317
    %5351 = vmatprep.subr.bf16.mxu0 %v5320
    %5352 = vmatpush1.bf16.msra.mxu0 %v5319
    %5353 = vmatprep.subr.bf16.mxu0 %v5322
    %5354 = vmatpush1.bf16.msra.mxu0 %v5321
    %5355 = vmatprep.subr.bf16.mxu0 %v5324
    %5356 = vmatpush1.bf16.msra.mxu0 %v5323
    %5357 = vmatprep.subr.bf16.mxu0 %v5326
    %5358 = vmatpush1.bf16.msra.mxu0 %v5325
    %5359 = vmatprep.subr.bf16.mxu0 %v5328
    %5360 = vmatpush1.bf16.msra.mxu0 %v5327
    %5361 = vmatprep.subr.bf16.mxu0 0
    %5362 = vmatpush1.bf16.msra.mxu0 0
    %5363 = vmatprep.subr.bf16.mxu0 0
    %5364 = vmatpush1.bf16.msra.mxu0 0
    %5365 = vmatprep.subr.bf16.mxu0 0
    %5366 = vmatpush1.bf16.msra.mxu0 0
    %5367 = vmatprep.subr.bf16.mxu0 0
    %5368 = vmatpush1.bf16.msra.mxu0 0
    %5369 = vmatprep.subr.bf16.mxu0 0
    %5370 = vmatpush1.bf16.msra.mxu0 0
    %5371 = vmatprep.subr.bf16.mxu0 0
    %5372 = vmatpush1.bf16.msra.mxu0 0
    %5373 = vmatprep.mubr.bf16.mxu0 %v5339
    %5374 = vmatmul.mubr.bf16.gmra.mrb[0].mxu0 %v5335
    %v5375 = vpop.f32.mrb[0].mxu0
    %v5376 = vadd.f32 0.0, %v5375
    %v5377 = vpop.f32.mrb[0].mxu0
    %v5378 = vadd.f32 0.0, %v5377
    %v5379 = vpop.f32.mrb[0].mxu0
    %v5380 = vadd.f32 0.0, %v5379
    %v5381 = vpop.f32.mrb[0].mxu0
    %v5382 = vadd.f32 0.0, %v5381
    %5383 = vdwg.mxu0
    %v5384 = vpack.c.bf16 %v5380, %v5376
    %v5386 = vunpack.c.l.b16 %v5384
    %v5387 = vunpack.c.h.b16 %v5384
    %v5388 = vpack.c.b16 %v5386, %v5386
    %v5389 = vpack.c.b16 %v5387, %v5387
    %vm5392 = vcmask 519168
    %5393 = vst.msk [vmem:[#allocation2] sm:$0xf] %vm5392, %v5388
    %vm5394 = vcmask 516096
    %5395 = vst.msk [vmem:[#allocation2 + $0x10] sm:$0x1] %vm5394, %v5389
    %v5396 = vrot.slane %v5388, 7
    %v5397 = vrot.slane %v5396, 4
    %v5398 = vrot.slane %v5389, 7
    %v5399 = vsel %vm1738, %v5397, %v5398
    %5400 = vrot.lane.b32.xlu0 %v5396, 64
    %v5401 = vpop.permute.xlu0 %5400
    %5402 = vrot.lane.b32.xlu0 %v5399, 64
    %v5403 = vpop.permute.xlu0 %5402
    %vm5406 = vcmask 519169
    %5407 = vst.msk [vmem:[#allocation2 + $0x10] sm:$0xe] %vm5406, %v5401
    %vm5408 = vcmask 517120
    %5409 = vst.msk [vmem:[#allocation2 + $0x20] sm:$0x3] %vm5408, %v5403
    %v5410 = vpack.c.bf16 %v5382, %v5378
    %v5412 = vunpack.c.l.b16 %v5410
    %v5413 = vunpack.c.h.b16 %v5410
    %v5414 = vpack.c.b16 %v5412, %v5412
    %v5415 = vpack.c.b16 %v5413, %v5413
    %v5416 = vrot.slane %v5414, 6
    %v5417 = vrot.slane %v5416, 4
    %v5418 = vrot.slane %v5415, 6
    %v5419 = vsel %vm1921, %v5417, %v5418
    %vm5422 = vcmask 519170
    %5423 = vst.msk [vmem:[#allocation2 + $0x20] sm:$0xc] %vm5422, %v5416
    %vm5424 = vcmask 518144
    %5425 = vst.msk [vmem:[#allocation2 + $0x30] sm:$0x7] %vm5424, %v5419
    %v5426 = vld [vmem:[%s11] sm:$0x3]
    %v5427 = vld [vmem:[#allocation2] sm:$0xf]
    %v5428 = vld [vmem:[#allocation2 + $0x10] sm:$0xf]
    %v5429 = vld [vmem:[#allocation2 + $0x20] sm:$0xf]
    %v5430 = vld [vmem:[#allocation2 + $0x30] sm:$0x7]
    %v5431 = vld [vmem:[%s12] sm:$0x1]
    %v5433 = vlaneseq
    %v5434 = vshrl.u32 %v5433, 7
    %v5435 = vsub.s32 0, %v5434
    %v5436 = vrot.slane %v5431, %v5435
    %v5442 = vunpack.c.l.b16 %v5427
    %v5443 = vunpack.c.l.b16 %v5428
    %v5444 = vunpack.c.l.b16 %v5429
    %v5445 = vunpack.c.l.b16 %v5430
    %v5446 = vpack.c.b16 %v5443, %v5442
    %v5447 = vpack.c.b16 %v5445, %v5444
    %vm5449 = vcmask 244736
    %v5451 = vsel %vm5449, %v5426, 0
    %vm5453 = vcmask 1046528
    %v5455 = vsel %vm5453, %v5447, 0
    %5457 = vmatprep.subr.bf16.mxu0 0
    %5458 = vmatpush1.bf16.msra.mxu0 %v5446
    %5459 = vmatprep.subr.bf16.mxu0 0
    %5460 = vmatpush1.bf16.msra.mxu0 %v5455
    %5461 = vmatprep.subr.bf16.mxu0 0
    %5462 = vmatpush1.bf16.msra.mxu0 0
    %5463 = vmatprep.subr.bf16.mxu0 0
    %5464 = vmatpush1.bf16.msra.mxu0 0
    %5465 = vmatprep.subr.bf16.mxu0 0
    %5466 = vmatpush1.bf16.msra.mxu0 0
    %5467 = vmatprep.subr.bf16.mxu0 0
    %5468 = vmatpush1.bf16.msra.mxu0 0
    %5469 = vmatprep.subr.bf16.mxu0 0
    %5470 = vmatpush1.bf16.msra.mxu0 0
    %5471 = vmatprep.subr.bf16.mxu0 0
    %5472 = vmatpush1.bf16.msra.mxu0 0
    %5473 = vmatprep.subr.bf16.mxu0 0
    %5474 = vmatpush1.bf16.msra.mxu0 0
    %5475 = vmatprep.subr.bf16.mxu0 0
    %5476 = vmatpush1.bf16.msra.mxu0 0
    %5477 = vmatprep.subr.bf16.mxu0 0
    %5478 = vmatpush1.bf16.msra.mxu0 0
    %5479 = vmatprep.subr.bf16.mxu0 0
    %5480 = vmatpush1.bf16.msra.mxu0 0
    %5481 = vmatprep.subr.bf16.mxu0 0
    %5482 = vmatpush1.bf16.msra.mxu0 0
    %5483 = vmatprep.subr.bf16.mxu0 0
    %5484 = vmatpush1.bf16.msra.mxu0 0
    %5485 = vmatprep.subr.bf16.mxu0 0
    %5486 = vmatpush1.bf16.msra.mxu0 0
    %5487 = vmatprep.subr.bf16.mxu0 0
    %5488 = vmatpush1.bf16.msra.mxu0 0
    %5489 = vmatprep.mubr.bf16.mxu0 0
    %5490 = vmatmul.mubr.bf16.gmra.mrb[0].mxu0 %v5451
    %v5491 = vpop.f32.mrb[0].mxu0
    %v5492 = vadd.f32 %v5436, %v5491
    %v5493 = vpop.f32.mrb[0].mxu0
    %v5494 = vpop.f32.mrb[0].mxu0
    %v5495 = vpop.f32.mrb[0].mxu0
    %5496 = vdwg.mxu0
    %v5497 = vmax.f32 %v5492, 0.0
    %v5498 = vld [vmem:[%s1] sm:$0x3]
    %v5499 = vpack.c.bf16 %v5498, %v5498
    %5500 = vst [vmem:[#allocation6 + $0x1] sm:$0x1] %v5499
    %v5501 = vpack.c.bf16 %v5497, %v5497
    %vm5502 = vcmask 516096
    %vm5503 = vmand %vm5502, %vm2501
    %v5504 = vld [vmem:[#allocation6] sm:$0x1]
    %v5505 = vsel %vm5503, %v5501, %v5504
    %5506 = vst [vmem:[#allocation6] sm:$0x1] %v5505
    %v5509 = vunpack.c.l.s4 1966171168
    %v5510 = vunpack.c.0.s8 %v5509
    %v5511 = vlaneseq
    %v5512 = vshrl.u32 %v5511, 7
    %v5513 = vsub.s32 %v5510, %v5512
    %v5514 = vrot.slane %v5501, %v5513
    %v5516 = vunpack.c.l.s4 1966171168
    %v5517 = vunpack.c.0.s8 %v5516
    %v5518 = vlaneseq
    %v5519 = vshrl.u32 %v5518, 7
    %v5520 = vsub.s32 %v5517, %v5519
    %v5521 = vrot.slane %v5514, %v5520
    %v5523 = vshrl.u32 %v5521, 16
    %v5525 = vrot.slane %v5523, 7
    %v5526 = vrot.slane %v5525, 1
    %5527 = vrot.lane.b32.xlu0 %v5526, 64
    %v5528 = vpop.permute.xlu0 %5527
    %vm5530 = vcmask 1040896
    %vm5531 = vmand %vm5530, %vm2501
    %v5532 = vld [vmem:[#allocation6] sm:$0x1]
    %v5533 = vsel %vm5531, %v5528, %v5532
    %5534 = vst [vmem:[#allocation6] sm:$0x1] %v5533
    %v5535 = vcombine.high %v5514, %v5514
    %v5537 = vunpack.c.l.s4 1966171168
    %v5538 = vunpack.c.0.s8 %v5537
    %v5539 = vlaneseq
    %v5540 = vshrl.u32 %v5539, 7
    %v5541 = vsub.s32 %v5538, %v5540
    %v5542 = vrot.slane %v5535, %v5541
    %v5544 = vshll.u32 %v5542, 16
    %vm5547 = vmand %vm5502, %vm2540
    %v5548 = vld [vmem:[#allocation6] sm:$0x1]
    %v5549 = vsel %vm5547, %v5544, %v5548
    %5550 = vst [vmem:[#allocation6] sm:$0x1] %v5549
    %5551 = vrot.lane.b32.xlu0 %v5542, 64
    %v5552 = vpop.permute.xlu0 %5551
    %vm5554 = vmand %vm5530, %vm2540
    %v5555 = vld [vmem:[#allocation6] sm:$0x1]
    %v5556 = vsel %vm5554, %v5552, %v5555
    %5557 = vst [vmem:[#allocation6] sm:$0x1] %v5556
    %s5558 = smul.u32 4, 32
    %s5559 = smul.u32 %s5558, 4
    %s5560 = sshll.u32 %s5559, 4
    %5561 = dma.done %s321, %s5560
    %s5562 = smul.u32 4, 16
    %s5563 = smul.u32 %s5562, 1
    %s5564 = sshll.u32 %s5563, 4
    %5565 = dma.done %s356, %s5564
    %s5566 = sshll.u32 %s5563, 4
    %5567 = dma.done %s413, %s5566
    %v5568 = vld [vmem:[#allocation6] sm:$0x3]
    %v5569 = vld [vmem:[#allocation9] sm:$0xff]
    %v5570 = vld [vmem:[#allocation9 + $0x8] sm:$0xff]
    %v5571 = vld [vmem:[#allocation9 + $0x10] sm:$0xff]
    %v5572 = vld [vmem:[#allocation9 + $0x18] sm:$0xff]
    %v5573 = vld [vmem:[#allocation9 + $0x20] sm:$0xff]
    %v5574 = vld [vmem:[#allocation9 + $0x28] sm:$0xff]
    %v5575 = vld [vmem:[#allocation9 + $0x30] sm:$0xff]
    %v5576 = vld [vmem:[#allocation9 + $0x38] sm:$0xff]
    %v5577 = vld [vmem:[#allocation9 + $0x40] sm:$0xff]
    %v5578 = vld [vmem:[#allocation9 + $0x48] sm:$0xff]
    %v5579 = vld [vmem:[#allocation9 + $0x50] sm:$0xff]
    %v5580 = vld [vmem:[#allocation9 + $0x58] sm:$0xff]
    %v5581 = vld [vmem:[#allocation9 + $0x60] sm:$0xff]
    %v5582 = vld [vmem:[#allocation9 + $0x68] sm:$0xff]
    %v5583 = vld [vmem:[#allocation9 + $0x70] sm:$0xff]
    %v5584 = vld [vmem:[#allocation9 + $0x78] sm:$0xff]
    %v5585 = vld [vmem:[#allocation9 + $0x80] sm:$0xff]
    %v5586 = vld [vmem:[#allocation9 + $0x88] sm:$0xff]
    %v5587 = vld [vmem:[#allocation9 + $0x90] sm:$0xff]
    %v5588 = vld [vmem:[#allocation9 + $0x98] sm:$0xff]
    %v5589 = vld [vmem:[#allocation9 + $0xa0] sm:$0xff]
    %v5590 = vld [vmem:[#allocation9 + $0xa8] sm:$0xff]
    %v5591 = vld [vmem:[#allocation9 + $0xb0] sm:$0xff]
    %v5592 = vld [vmem:[#allocation9 + $0xb8] sm:$0xff]
    %v5593 = vld [vmem:[#allocation9 + $0xc0] sm:$0xff]
    %v5594 = vld [vmem:[#allocation9 + $0xc8] sm:$0xff]
    %v5595 = vld [vmem:[#allocation9 + $0xd0] sm:$0xff]
    %v5596 = vld [vmem:[#allocation9 + $0xd8] sm:$0xff]
    %v5597 = vld [vmem:[#allocation9 + $0xe0] sm:$0xff]
    %v5598 = vld [vmem:[#allocation9 + $0xe8] sm:$0xff]
    %v5599 = vld [vmem:[#allocation9 + $0xf0] sm:$0xff]
    %v5600 = vld [vmem:[#allocation9 + $0xf8] sm:$0xff]
    %v5601 = vld [vmem:[#allocation9 + $0x100] sm:$0xff]
    %v5602 = vld [vmem:[#allocation9 + $0x108] sm:$0xff]
    %v5603 = vld [vmem:[#allocation9 + $0x110] sm:$0xff]
    %v5604 = vld [vmem:[#allocation9 + $0x118] sm:$0xff]
    %v5605 = vld [vmem:[#allocation9 + $0x120] sm:$0xff]
    %v5606 = vld [vmem:[#allocation9 + $0x128] sm:$0xff]
    %v5607 = vld [vmem:[#allocation9 + $0x130] sm:$0xff]
    %v5608 = vld [vmem:[#allocation9 + $0x138] sm:$0xff]
    %v5609 = vld [vmem:[#allocation9 + $0x140] sm:$0xff]
    %v5610 = vld [vmem:[#allocation9 + $0x148] sm:$0xff]
    %v5611 = vld [vmem:[#allocation9 + $0x150] sm:$0xff]
    %v5612 = vld [vmem:[#allocation9 + $0x158] sm:$0xff]
    %v5613 = vld [vmem:[#allocation9 + $0x160] sm:$0xff]
    %v5614 = vld [vmem:[#allocation9 + $0x168] sm:$0xff]
    %v5615 = vld [vmem:[#allocation9 + $0x170] sm:$0xff]
    %v5616 = vld [vmem:[#allocation9 + $0x178] sm:$0xff]
    %v5617 = vld [vmem:[#allocation9 + $0x180] sm:$0xff]
    %v5618 = vld [vmem:[#allocation9 + $0x188] sm:$0xff]
    %v5619 = vld [vmem:[#allocation9 + $0x190] sm:$0xff]
    %v5620 = vld [vmem:[#allocation9 + $0x198] sm:$0xff]
    %v5621 = vld [vmem:[#allocation9 + $0x1a0] sm:$0xff]
    %v5622 = vld [vmem:[#allocation9 + $0x1a8] sm:$0xff]
    %v5623 = vld [vmem:[#allocation9 + $0x1b0] sm:$0xff]
    %v5624 = vld [vmem:[#allocation9 + $0x1b8] sm:$0xff]
    %v5625 = vld [vmem:[#allocation9 + $0x1c0] sm:$0xff]
    %v5626 = vld [vmem:[#allocation9 + $0x1c8] sm:$0xff]
    %v5627 = vld [vmem:[#allocation9 + $0x1d0] sm:$0xff]
    %v5628 = vld [vmem:[#allocation9 + $0x1d8] sm:$0xff]
    %v5629 = vld [vmem:[#allocation9 + $0x1e0] sm:$0xff]
    %v5630 = vld [vmem:[#allocation9 + $0x1e8] sm:$0xff]
    %v5631 = vld [vmem:[#allocation9 + $0x1f0] sm:$0xff]
    %v5632 = vld [vmem:[#allocation9 + $0x1f8] sm:$0xff]
    %v5633 = vld [vmem:[%s13] sm:$0xf]
    %v5635 = vlaneseq
    %v5636 = vshrl.u32 %v5635, 7
    %v5637 = vsub.s32 0, %v5636
    %v5638 = vrot.slane %v5633, %v5637
    %v5639 = vlaneseq
    %v5640 = vshrl.u32 %v5639, 7
    %v5641 = vsub.s32 1, %v5640
    %v5642 = vrot.slane %v5633, %v5641
    %v5643 = vlaneseq
    %v5644 = vshrl.u32 %v5643, 7
    %v5645 = vsub.s32 2, %v5644
    %v5646 = vrot.slane %v5633, %v5645
    %v5647 = vlaneseq
    %v5648 = vshrl.u32 %v5647, 7
    %v5649 = vsub.s32 3, %v5648
    %v5650 = vrot.slane %v5633, %v5649
    %v5657 = vunpack.c.l.s4 1966171168
    %v5658 = vunpack.c.0.s8 %v5657
    %v5659 = vlaneseq
    %v5660 = vshrl.u32 %v5659, 7
    %v5661 = vsub.s32 %v5658, %v5660
    %v5662 = vrot.slane %v5568, %v5661
    %v5663 = vcombine.high %v5662, %v5662
    %v5665 = vunpack.c.l.s4 1966171168
    %v5666 = vunpack.c.0.s8 %v5665
    %v5667 = vlaneseq
    %v5668 = vshrl.u32 %v5667, 7
    %v5669 = vsub.s32 %v5666, %v5668
    %v5670 = vrot.slane %v5662, %v5669
    %v5672 = vunpack.c.l.s4 1966171168
    %v5673 = vunpack.c.0.s8 %v5672
    %v5674 = vlaneseq
    %v5675 = vshrl.u32 %v5674, 7
    %v5676 = vsub.s32 %v5673, %v5675
    %v5677 = vrot.slane %v5663, %v5676
    %5680 = vmatprep.subr.bf16.mxu0 %v5570
    %5681 = vmatpush1.bf16.msra.mxu0 %v5569
    %5682 = vmatprep.subr.bf16.mxu0 %v5574
    %5683 = vmatpush1.bf16.msra.mxu0 %v5573
    %5684 = vmatprep.subr.bf16.mxu0 %v5578
    %5685 = vmatpush1.bf16.msra.mxu0 %v5577
    %5686 = vmatprep.subr.bf16.mxu0 %v5582
    %5687 = vmatpush1.bf16.msra.mxu0 %v5581
    %5688 = vmatprep.subr.bf16.mxu0 %v5586
    %5689 = vmatpush1.bf16.msra.mxu0 %v5585
    %5690 = vmatprep.subr.bf16.mxu0 %v5590
    %5691 = vmatpush1.bf16.msra.mxu0 %v5589
    %5692 = vmatprep.subr.bf16.mxu0 %v5594
    %5693 = vmatpush1.bf16.msra.mxu0 %v5593
    %5694 = vmatprep.subr.bf16.mxu0 %v5598
    %5695 = vmatpush1.bf16.msra.mxu0 %v5597
    %5696 = vmatprep.subr.bf16.mxu0 %v5602
    %5697 = vmatpush1.bf16.msra.mxu0 %v5601
    %5698 = vmatprep.subr.bf16.mxu0 %v5606
    %5699 = vmatpush1.bf16.msra.mxu0 %v5605
    %5700 = vmatprep.subr.bf16.mxu0 %v5610
    %5701 = vmatpush1.bf16.msra.mxu0 %v5609
    %5702 = vmatprep.subr.bf16.mxu0 %v5614
    %5703 = vmatpush1.bf16.msra.mxu0 %v5613
    %5704 = vmatprep.subr.bf16.mxu0 %v5618
    %5705 = vmatpush1.bf16.msra.mxu0 %v5617
    %5706 = vmatprep.subr.bf16.mxu0 %v5622
    %5707 = vmatpush1.bf16.msra.mxu0 %v5621
    %5708 = vmatprep.subr.bf16.mxu0 %v5626
    %5709 = vmatpush1.bf16.msra.mxu0 %v5625
    %5710 = vmatprep.subr.bf16.mxu0 %v5630
    %5711 = vmatpush1.bf16.msra.mxu0 %v5629
    %5712 = vmatprep.mubr.bf16.mxu0 %v5677
    %5713 = vmatmul.mubr.bf16.gmra.mrb[0].mxu0 %v5670
    %v5714 = vpop.f32.mrb[0].mxu0
    %v5715 = vadd.f32 %v5638, %v5714
    %v5716 = vpop.f32.mrb[0].mxu0
    %v5717 = vadd.f32 %v5642, %v5716
    %v5718 = vpop.f32.mrb[0].mxu0
    %v5719 = vpop.f32.mrb[0].mxu0
    %5720 = vdwg.mxu0
    %5721 = vmatprep.subr.bf16.mxu0 %v5572
    %5722 = vmatpush1.bf16.msra.mxu0 %v5571
    %5723 = vmatprep.subr.bf16.mxu0 %v5576
    %5724 = vmatpush1.bf16.msra.mxu0 %v5575
    %5725 = vmatprep.subr.bf16.mxu0 %v5580
    %5726 = vmatpush1.bf16.msra.mxu0 %v5579
    %5727 = vmatprep.subr.bf16.mxu0 %v5584
    %5728 = vmatpush1.bf16.msra.mxu0 %v5583
    %5729 = vmatprep.subr.bf16.mxu0 %v5588
    %5730 = vmatpush1.bf16.msra.mxu0 %v5587
    %5731 = vmatprep.subr.bf16.mxu0 %v5592
    %5732 = vmatpush1.bf16.msra.mxu0 %v5591
    %5733 = vmatprep.subr.bf16.mxu0 %v5596
    %5734 = vmatpush1.bf16.msra.mxu0 %v5595
    %5735 = vmatprep.subr.bf16.mxu0 %v5600
    %5736 = vmatpush1.bf16.msra.mxu0 %v5599
    %5737 = vmatprep.subr.bf16.mxu0 %v5604
    %5738 = vmatpush1.bf16.msra.mxu0 %v5603
    %5739 = vmatprep.subr.bf16.mxu0 %v5608
    %5740 = vmatpush1.bf16.msra.mxu0 %v5607
    %5741 = vmatprep.subr.bf16.mxu0 %v5612
    %5742 = vmatpush1.bf16.msra.mxu0 %v5611
    %5743 = vmatprep.subr.bf16.mxu0 %v5616
    %5744 = vmatpush1.bf16.msra.mxu0 %v5615
    %5745 = vmatprep.subr.bf16.mxu0 %v5620
    %5746 = vmatpush1.bf16.msra.mxu0 %v5619
    %5747 = vmatprep.subr.bf16.mxu0 %v5624
    %5748 = vmatpush1.bf16.msra.mxu0 %v5623
    %5749 = vmatprep.subr.bf16.mxu0 %v5628
    %5750 = vmatpush1.bf16.msra.mxu0 %v5627
    %5751 = vmatprep.subr.bf16.mxu0 %v5632
    %5752 = vmatpush1.bf16.msra.mxu0 %v5631
    %5753 = vmatprep.mubr.bf16.mxu0 %v5677
    %5754 = vmatmul.mubr.bf16.gmra.mrb[0].mxu0 %v5670
    %v5755 = vpop.f32.mrb[0].mxu0
    %v5756 = vadd.f32 %v5646, %v5755
    %v5757 = vpop.f32.mrb[0].mxu0
    %v5758 = vadd.f32 %v5650, %v5757
    %v5759 = vpop.f32.mrb[0].mxu0
    %v5760 = vpop.f32.mrb[0].mxu0
    %5761 = vdwg.mxu0
    %v5762 = vxor.u32 %v5715, 2147483648
    %v5763 = vmul.f32 %v5762, 1.442695
    %v5764 = vpow.pop %v5763
    %v5765 = vadd.f32 %v5764, 1.0
    %v5766 = vrcp.pop %v5765
    %v5767 = vmul.f32 1.0, %v5766
    %v5768 = vxor.u32 %v5717, 2147483648
    %v5769 = vmul.f32 %v5768, 1.442695
    %v5770 = vpow.pop %v5769
    %v5771 = vadd.f32 %v5770, 1.0
    %v5772 = vrcp.pop %v5771
    %v5773 = vmul.f32 1.0, %v5772
    %v5774 = vtanh.pop %v5756
    %v5775 = vxor.u32 %v5758, 2147483648
    %v5776 = vmul.f32 %v5775, 1.442695
    %v5777 = vpow.pop %v5776
    %v5778 = vadd.f32 %v5777, 1.0
    %v5779 = vrcp.pop %v5778
    %v5780 = vmul.f32 1.0, %v5779
    %v5781 = vld [vmem:[%s2] sm:$0x3]
    %v5782 = vmul.f32 %v5781, %v5773
    %v5783 = vmul.f32 %v5767, %v5774
    %v5784 = vadd.f32 %v5782, %v5783
    %v5785 = vtanh.pop %v5784
    %v5786 = vmul.f32 %v5780, %v5785
    %v5787 = vpack.c.bf16 %v5786, %v5786
    %v5788 = vld [vmem:[#allocation10] sm:$0xff]
    %v5789 = vld [vmem:[#allocation10 + $0x8] sm:$0xff]
    %v5790 = vld [vmem:[#allocation10 + $0x10] sm:$0xff]
    %v5791 = vld [vmem:[#allocation10 + $0x18] sm:$0xff]
    %v5792 = vld [vmem:[#allocation10 + $0x20] sm:$0xff]
    %v5793 = vld [vmem:[#allocation10 + $0x28] sm:$0xff]
    %v5794 = vld [vmem:[#allocation10 + $0x30] sm:$0xff]
    %v5795 = vld [vmem:[#allocation10 + $0x38] sm:$0xff]
    %v5796 = vld [vmem:[%s14] sm:$0x1]
    %v5798 = vlaneseq
    %v5799 = vshrl.u32 %v5798, 7
    %v5800 = vsub.s32 0, %v5799
    %v5801 = vrot.slane %v5796, %v5800
    %5803 = vmatprep.subr.bf16.mxu0 0
    %5804 = vmatpush1.bf16.msra.mxu0 %v5788
    %5805 = vmatprep.subr.bf16.mxu0 0
    %5806 = vmatpush1.bf16.msra.mxu0 %v5789
    %5807 = vmatprep.subr.bf16.mxu0 0
    %5808 = vmatpush1.bf16.msra.mxu0 %v5790
    %5809 = vmatprep.subr.bf16.mxu0 0
    %5810 = vmatpush1.bf16.msra.mxu0 %v5791
    %5811 = vmatprep.subr.bf16.mxu0 0
    %5812 = vmatpush1.bf16.msra.mxu0 %v5792
    %5813 = vmatprep.subr.bf16.mxu0 0
    %5814 = vmatpush1.bf16.msra.mxu0 %v5793
    %5815 = vmatprep.subr.bf16.mxu0 0
    %5816 = vmatpush1.bf16.msra.mxu0 %v5794
    %5817 = vmatprep.subr.bf16.mxu0 0
    %5818 = vmatpush1.bf16.msra.mxu0 %v5795
    %5819 = vmatprep.subr.bf16.mxu0 0
    %5820 = vmatpush1.bf16.msra.mxu0 0
    %5821 = vmatprep.subr.bf16.mxu0 0
    %5822 = vmatpush1.bf16.msra.mxu0 0
    %5823 = vmatprep.subr.bf16.mxu0 0
    %5824 = vmatpush1.bf16.msra.mxu0 0
    %5825 = vmatprep.subr.bf16.mxu0 0
    %5826 = vmatpush1.bf16.msra.mxu0 0
    %5827 = vmatprep.subr.bf16.mxu0 0
    %5828 = vmatpush1.bf16.msra.mxu0 0
    %5829 = vmatprep.subr.bf16.mxu0 0
    %5830 = vmatpush1.bf16.msra.mxu0 0
    %5831 = vmatprep.subr.bf16.mxu0 0
    %5832 = vmatpush1.bf16.msra.mxu0 0
    %5833 = vmatprep.subr.bf16.mxu0 0
    %5834 = vmatpush1.bf16.msra.mxu0 0
    %5835 = vmatprep.mubr.bf16.mxu0 0
    %5836 = vmatmul.mubr.bf16.gmra.mrb[0].mxu0 %v5787
    %v5837 = vpop.f32.mrb[0].mxu0
    %v5838 = vadd.f32 %v5801, %v5837
    %v5839 = vpop.f32.mrb[0].mxu0
    %v5840 = vpop.f32.mrb[0].mxu0
    %v5841 = vpop.f32.mrb[0].mxu0
    %5842 = vdwg.mxu0
    %v5843 = vmax.f32 %v5838, 0.0
    %v5844 = vpack.c.bf16 %v5843, %v5843
    %v5845 = vld [vmem:[#allocation11] sm:$0xff]
    %v5846 = vld [vmem:[#allocation11 + $0x8] sm:$0xff]
    %v5847 = vld [vmem:[#allocation11 + $0x10] sm:$0xff]
    %v5848 = vld [vmem:[#allocation11 + $0x18] sm:$0xff]
    %v5849 = vld [vmem:[#allocation11 + $0x20] sm:$0xff]
    %v5850 = vld [vmem:[#allocation11 + $0x28] sm:$0xff]
    %v5851 = vld [vmem:[#allocation11 + $0x30] sm:$0xff]
    %v5852 = vld [vmem:[#allocation11 + $0x38] sm:$0xff]
    %v5853 = vld [vmem:[%s15] sm:$0x1]
    %v5855 = vlaneseq
    %v5856 = vshrl.u32 %v5855, 7
    %v5857 = vsub.s32 0, %v5856
    %v5858 = vrot.slane %v5853, %v5857
    %5860 = vmatprep.subr.bf16.mxu0 0
    %5861 = vmatpush1.bf16.msra.mxu0 %v5845
    %5862 = vmatprep.subr.bf16.mxu0 0
    %5863 = vmatpush1.bf16.msra.mxu0 %v5846
    %5864 = vmatprep.subr.bf16.mxu0 0
    %5865 = vmatpush1.bf16.msra.mxu0 %v5847
    %5866 = vmatprep.subr.bf16.mxu0 0
    %5867 = vmatpush1.bf16.msra.mxu0 %v5848
    %5868 = vmatprep.subr.bf16.mxu0 0
    %5869 = vmatpush1.bf16.msra.mxu0 %v5849
    %5870 = vmatprep.subr.bf16.mxu0 0
    %5871 = vmatpush1.bf16.msra.mxu0 %v5850
    %5872 = vmatprep.subr.bf16.mxu0 0
    %5873 = vmatpush1.bf16.msra.mxu0 %v5851
    %5874 = vmatprep.subr.bf16.mxu0 0
    %5875 = vmatpush1.bf16.msra.mxu0 %v5852
    %5876 = vmatprep.subr.bf16.mxu0 0
    %5877 = vmatpush1.bf16.msra.mxu0 0
    %5878 = vmatprep.subr.bf16.mxu0 0
    %5879 = vmatpush1.bf16.msra.mxu0 0
    %5880 = vmatprep.subr.bf16.mxu0 0
    %5881 = vmatpush1.bf16.msra.mxu0 0
    %5882 = vmatprep.subr.bf16.mxu0 0
    %5883 = vmatpush1.bf16.msra.mxu0 0
    %5884 = vmatprep.subr.bf16.mxu0 0
    %5885 = vmatpush1.bf16.msra.mxu0 0
    %5886 = vmatprep.subr.bf16.mxu0 0
    %5887 = vmatpush1.bf16.msra.mxu0 0
    %5888 = vmatprep.subr.bf16.mxu0 0
    %5889 = vmatpush1.bf16.msra.mxu0 0
    %5890 = vmatprep.subr.bf16.mxu0 0
    %5891 = vmatpush1.bf16.msra.mxu0 0
    %5892 = vmatprep.mubr.bf16.mxu0 0
    %5893 = vmatmul.mubr.bf16.gmra.mrb[0].mxu0 %v5844
    %v5894 = vpop.f32.mrb[0].mxu0
    %v5895 = vadd.f32 %v5858, %v5894
    %v5896 = vpop.f32.mrb[0].mxu0
    %v5897 = vpop.f32.mrb[0].mxu0
    %v5898 = vpop.f32.mrb[0].mxu0
    %5899 = vdwg.mxu0
    %5901 = vset.pattern.permute.xlu0 7
    %5902 = vperm.xlu0 %5901, %v5895
    %v5903 = vpop.permute.xlu0 %5902
    %v5905 = vadd.f32 %v5903, %v5895
    %vm5906 = vcmask 50176
    %v5907 = vsel %vm5906, %v5895, 0.0
    %5908 = vadd.xlane.f32.xlu0 %v5907
    %v5909 = vpop.xlane.xlu0 %5908
    %v5910 = vrot.slane %v5909, 4
    %v5911 = vadd.f32 %v5909, %v5910
    %v5912 = vrot.slane %v5911, 2
    %v5913 = vadd.f32 %v5911, %v5912
    %v5914 = vrot.slane %v5913, 1
    %v5915 = vadd.f32 %v5913, %v5914
    %s5916 = vtos %v5915
    %v5917 = vrcp.pop 14.0
    %s5918 = vtos %v5917
    %s5919 = smul.f32 %s5916, %s5918
    %v5920 = vstv %s5919
    %v5921 = vsub.f32 %v5905, %v5920
    %5922 = vst.msk [vmem:[#allocation16] sm:$0x3] %vm5906, %v5921
    %5923 = vst [vmem:[%s22] sm:$0x3] %v5786
    %5924 = vst [vmem:[%s23] sm:$0x3] %v5784
    // Predicated region
    $region175: #{forward.1} parent=1 // pred_check
      _
    $region176: #{forward.1} parent=1 // pred_check_branch
      %5926 = sbr.rel (0) target = $region178
    $region177: #{forward.1} parent=1 // pred_region
      %s5928 = ssub.s32 32, 32
      %5929 = vsyncadd [#allocation15], %s5928
      %s5931 = sshll.u32 [#allocation16], 4
      %s5932 = int_to_ptr.vmem [resolvable:$true] %s5931
      %5934 = dma.vmem_to_hbm [thread:$0]  %s5932, 32, %s21, [#allocation15]
    $region178: #{forward.1} parent=1 // pred_fallthru
      _
    // Predicated region
    $region179: #{forward.1} parent=1 // pred_check
      _
    $region180: #{forward.1} parent=1 // pred_check_branch
      %5936 = sbr.rel (0) target = $region182
    $region181: #{forward.1} parent=1 // pred_region
      _
    $region182: #{forward.1} parent=1 // pred_fallthru
      _
    // Predicated region
    $region183: #{forward.1} parent=1 // pred_check
      _
    $region184: #{forward.1} parent=1 // pred_check_branch
      %5938 = sbr.rel (0) target = $region186
    $region185: #{forward.1} parent=1 // pred_region
      _
    $region186: #{forward.1} parent=1 // pred_fallthru
      _
    // Predicated region
    $region187: #{forward.1} parent=1 // pred_check
      _
    $region188: #{forward.1} parent=1 // pred_check_branch
      %5940 = sbr.rel (0) target = $region190
    $region189: #{forward.1} parent=1 // pred_region
      %5941 = dma.done [#allocation15], 32
    $region190: #{forward.1} parent=1 // pred_fallthru
      _
    // Predicated region
    $region191: #{forward.1} parent=1 // pred_check
      _
    $region192: #{forward.1} parent=1 // pred_check_branch
      %5943 = sbr.rel (0) target = $region194
    $region193: #{forward.1} parent=1 // pred_region
      _
    $region194: #{forward.1} parent=1 // pred_fallthru
      _
    // Predicated region
    $region195: #{forward.1} parent=1 // pred_check
      _
    $region196: #{forward.1} parent=1 // pred_check_branch
      %5945 = sbr.rel (0) target = $region198
    $region197: #{forward.1} parent=1 // pred_region
      _
    $region198: #{forward.1} parent=1 // pred_fallthru
      _
    %5946 = vsyncpa [#allocation14], 1
    %5947 = vsyncpa [#allocation15], 1
  %5948 = vsyncmov [#allocation12]
  %s5949 = vpop.sfrf %5948
  %p5950 = scmp.eq.s32.totalorder %s5949, 0
  %p5951 = pneg %p5950
  %5953 = shalt.err (%p5951)
  %s5954 = scalar_lea.sflag [#allocation12], 1
  %5955 = vsyncmov %s5954
  %s5956 = vpop.sfrf %5955
  %p5957 = scmp.eq.s32.totalorder %s5956, 0
  %p5958 = pneg %p5957
  %5960 = shalt.err (%p5958)
  %s5961 = scalar_lea.sflag [#allocation12], 2
  %5962 = vsyncmov %s5961
  %s5963 = vpop.sfrf %5962
  %p5964 = scmp.eq.s32.totalorder %s5963, 0
  %p5965 = pneg %p5964
  %5967 = shalt.err (%p5965)
  %s5968 = scalar_lea.sflag [#allocation12], 3
  %5969 = vsyncmov %s5968
  %s5970 = vpop.sfrf %5969
  %p5971 = scmp.eq.s32.totalorder %s5970, 0
  %p5972 = pneg %p5971
  %5974 = shalt.err (%p5972)
  %s5975 = scalar_lea.sflag [#allocation12], 4
  %5976 = vsyncmov %s5975
  %s5977 = vpop.sfrf %5976
  %p5978 = scmp.eq.s32.totalorder %s5977, 0
  %p5979 = pneg %p5978
  %5981 = shalt.err (%p5979)

</llo_original>
